<compile_context>
chip_gen: v7x
topology: tpu7x:2x2x1
jax: 0.10.0
libtpu: 0.0.40
codegen_flags: <defaults>
</compile_context>

<pallas_src>
import functools

import jax
import jax.numpy as jnp
from jax import lax
from jax.experimental import pallas as pl
from jax.experimental.pallas import tpu as pltpu


MID = 128      # bottleneck mid channels (fixed by the PyTorch module)
NC_PAD = 128   # fc logits padded to a lane-dense width, sliced outside
LANE = 128
B_TILE = 16    # images per grid step (one bf16 (16,128) tile per pixel)


def _round_up(x, m):
    return (x + m - 1) // m * m


# ------------------------------ Pallas kernel ------------------------------

def _bottleneck_kernel(*refs, H2, W2, with_head):
    """Fused DownSampleBottleneck (+ optional avgpool+fc head), B_TILE images.

    Input rows are (h, w) raster order with batch minor: x_ref[0] has shape
    (H*W, B, Cin_p).  The kernel builds the im2col LHS of the stride-2 3x3
    conv in a bf16 VMEM scratch:
        lhs_scr[ho, wo, b, (ki*3+kj)*128 + ci] = y1[b, 2*ho+ki-1, 2*wo+kj-1, ci]
    (zero where the pad=1 border is read), then runs ONE K=1152 matmul.
    """
    if with_head:
        (x_ref, w1_ref, b1_ref, w2_ref, b2_ref, w3_ref, b3_ref,
         fcw_ref, fcb_ref, logits_ref, feat_ref, lhs_scr) = refs
    else:
        (x_ref, w1_ref, b1_ref, w2_ref, b2_ref, w3_ref, b3_ref,
         out_ref, lhs_scr) = refs

    B = lhs_scr.shape[2]
    hw = H2 * W2
    M = hw * B

    # ---- conv1 (1x1) + folded-BN bias + ReLU.  M = 4*hw*B rows at once. ----
    x = x_ref[0]                                   # (H*W, B, Cin_p) bf16
    S_in, _, Cin_p = x.shape
    x2d = x.reshape(S_in * B, Cin_p)               # free: (B, C) tiles intact
    y1 = jnp.dot(x2d, w1_ref[...], preferred_element_type=jnp.float32)
    y1 = jnp.maximum(y1 + b1_ref[...], 0.0).astype(jnp.bfloat16)
    # rows of y1 are (h, w, b); split the spatial dims into (hb, pr, wb, pc).
    y1_r = y1.reshape(H2, 2, W2, 2, B, MID)

    # ---- scatter the 9 polyphase taps into the im2col scratch. ----
    # All stores below move whole (B=16, 128) bf16 tiles (outer-dim slices and
    # 128-lane-aligned column blocks) -> unmasked, aligned vst.  The padding
    # sub-blocks are re-zeroed every step (cheap) instead of a pid==0-gated
    # full-scratch zero, so this stays correct under megacore grid splitting.
    for ki in range(3):
        dh = 1 if ki == 0 else 0          # destination row offset (top pad)
        pr = 0 if ki == 1 else 1          # source row parity
        for kj in range(3):
            dw = 1 if kj == 0 else 0
            pc = 0 if kj == 1 else 1
            col = slice((ki * 3 + kj) * MID, (ki * 3 + kj + 1) * MID)
            src = y1_r[0:H2 - dh, pr, 0:W2 - dw, pc, :, :]
            lhs_scr[dh:H2, dw:W2, :, col] = src
            if dh:
                lhs_scr[0:dh, :, :, col] = jnp.zeros((dh, W2, B, MID),
                                                     jnp.bfloat16)
            if dw:
                lhs_scr[dh:H2, 0:dw, :, col] = jnp.zeros((H2 - dh, dw, B, MID),
                                                         jnp.bfloat16)

    # ---- conv2 (3x3, s2, p1) as ONE deep-K matmul + bias + ReLU. ----
    lhs = lhs_scr[...].reshape(M, 9 * MID)
    y2 = jnp.dot(lhs, w2_ref[...], preferred_element_type=jnp.float32)
    y2 = jnp.maximum(y2 + b2_ref[...], 0.0).astype(jnp.bfloat16)

    # ---- conv3 (1x1) + bias + ReLU. ----
    y3 = jnp.dot(y2, w3_ref[...], preferred_element_type=jnp.float32)
    y3 = jnp.maximum(y3 + b3_ref[...], 0.0)        # (M, Cout_p) f32

    if with_head:
        # Fused AvgPool2d(4,4) (global mean of the 4x4 map) + Linear head.
        feat = jnp.mean(y3.reshape(hw, B, y3.shape[-1]), axis=0)   # (B, Cout_p)
        feat_ref[0] = feat
        logits = jnp.dot(feat.astype(jnp.bfloat16), fcw_ref[...],
                         preferred_element_type=jnp.float32) + fcb_ref[...]
        logits_ref[0] = logits                                     # (B, NC_PAD)
    else:
        # Rows (ho, wo, b) == next layer's raster/batch-minor input layout.
        out_ref[0] = y3.astype(out_ref.dtype).reshape(hw, B, y3.shape[-1])


# ------------------------------ kernel wrapper ------------------------------

def _run_bottleneck(x, p, H, W, head_params=None):
    """x: (G, H*W, B_TILE, Cin_p) bf16, rows in (h, w) raster order, batch minor."""
    G, S_in, B, Cin_p = x.shape
    assert H % 2 == 0 and W % 2 == 0, "stride-2 bottleneck needs even spatial dims"
    assert S_in == H * W
    H2, W2 = H // 2, W // 2
    hw = H2 * W2
    Cout_p = p["w3"].shape[1]

    def _full(arr):
        nd = arr.ndim
        return pl.BlockSpec(arr.shape, lambda g, _nd=nd: (0,) * _nd)

    in_arrays = [x, p["w1"], p["b1"], p["w2"], p["b2"], p["w3"], p["b3"]]
    in_specs = [pl.BlockSpec((1, S_in, B, Cin_p), lambda g: (g, 0, 0, 0)),
                _full(p["w1"]), _full(p["b1"]),
                _full(p["w2"]), _full(p["b2"]),
                _full(p["w3"]), _full(p["b3"])]

    if head_params is None:
        out_shape = jax.ShapeDtypeStruct((G, hw, B, Cout_p), jnp.bfloat16)
        out_specs = pl.BlockSpec((1, hw, B, Cout_p), lambda g: (g, 0, 0, 0))
        out_bytes = G * hw * B * Cout_p * 2
        kern = functools.partial(_bottleneck_kernel, H2=H2, W2=W2,
                                 with_head=False)
        head_flops = 0
    else:
        fcw, fcb = head_params
        in_arrays += [fcw, fcb]
        in_specs += [_full(fcw), _full(fcb)]
        out_shape = (jax.ShapeDtypeStruct((G, B, NC_PAD), jnp.float32),
                     jax.ShapeDtypeStruct((G, B, Cout_p), jnp.float32))
        out_specs = (pl.BlockSpec((1, B, NC_PAD), lambda g: (g, 0, 0)),
                     pl.BlockSpec((1, B, Cout_p), lambda g: (g, 0, 0)))
        out_bytes = G * B * (NC_PAD + Cout_p) * 4
        kern = functools.partial(_bottleneck_kernel, H2=H2, W2=W2,
                                 with_head=True)
        head_flops = 2 * G * B * Cout_p * NC_PAD

    weight_bytes = sum(int(a.size) * a.dtype.itemsize for a in in_arrays[1:])
    in_bytes = int(x.size) * x.dtype.itemsize + weight_bytes
    flops = 2 * G * B * (H * W * Cin_p * MID
                         + hw * (9 * MID) * MID
                         + hw * MID * Cout_p) + head_flops

    scratch_bytes = H2 * W2 * B * 9 * MID * 2       # bf16 im2col scratch
    # Explicit VMEM budget (v7x: 64 MiB physical): double-buffered x/out blocks
    # + resident weights + im2col scratch, with 2x headroom for temporaries.
    vmem_est = (2 * (S_in * B * Cin_p * 2 + hw * B * Cout_p * 4)
                + weight_bytes + scratch_bytes)
    vmem_limit = int(min(96 * 1024 * 1024, max(2 * vmem_est, 16 * 1024 * 1024)))

    return pl.pallas_call(
        kern,
        out_shape=out_shape,
        grid_spec=pltpu.PrefetchScalarGridSpec(
            num_scalar_prefetch=0,
            grid=(G,),
            in_specs=in_specs,
            out_specs=out_specs,
            scratch_shapes=[pltpu.VMEM((H2, W2, B, 9 * MID), jnp.bfloat16)]),
        compiler_params=pltpu.CompilerParams(
            dimension_semantics=("parallel",),
            vmem_limit_bytes=vmem_limit),
        cost_estimate=pl.CostEstimate(flops=flops, transcendentals=0,
                                      bytes_accessed=in_bytes + out_bytes),
    )(*in_arrays)


# -------------------------------- JAX glue ----------------------------------

def shallownet_forward(x_nchw, params, *, num_classes, feature_dim,
                       get_outputs=True):
    """Matches ShallowNet.forward (eval-mode BatchNorm)."""
    N, Cin, H, W = x_nchw.shape
    blocks = params["bottlenecks"]
    Cin_p = blocks[0]["w1"].shape[0]

    G = pl.cdiv(N, B_TILE)
    NB = G * B_TILE

    # One-time host-side layout: NCHW -> (G, H*W, B_TILE, Cin_p), batch-minor,
    # channels zero-padded to a lane multiple, bf16.  Activations keep exactly
    # this layout between bottlenecks -> no inter-layer transposes.
    x = jnp.transpose(x_nchw, (0, 2, 3, 1))                         # N,H,W,C
    x = jnp.pad(x, ((0, NB - N), (0, 0), (0, 0), (0, Cin_p - Cin)))
    x = x.reshape(G, B_TILE, H, W, Cin_p).transpose(0, 2, 3, 1, 4)
    x = x.reshape(G, H * W, B_TILE, Cin_p).astype(jnp.bfloat16)

    # All but the last bottleneck: fused kernel, output already in the next
    # bottleneck's input layout.
    for p in blocks[:-1]:
        x = _run_bottleneck(x, p, H, W)
        H, W = H // 2, W // 2

    # Last bottleneck fuses AvgPool2d(4,4) + fc into its epilogue.
    assert H // 2 == 4 and W // 2 == 4, "ShallowNet expects a 4x4 map at the avgpool"
    logits_pad, feat_pad = _run_bottleneck(
        x, blocks[-1], H, W, head_params=(params["fc_w"], params["fc_b"]))

    feature = feat_pad.reshape(NB, -1)[:N, :feature_dim]
    if get_outputs:
        out = logits_pad.reshape(NB, NC_PAD)[:N, :num_classes]
        return out, feature
    return feature


# ------------------- one-time parameter preparation (cold path) -------------

def _fold_bn(w, b, gamma, beta, rmean, rvar, eps=1e-5):
    """Fold eval-mode BatchNorm into the preceding conv (torch OIHW layout)."""
    scale = gamma / jnp.sqrt(rvar + eps)
    w_f = w * scale[:, None, None, None]
    b_f = b * scale + beta - rmean * scale
    return w_f, b_f


def prepare_params(raw, num_classes):
    """Fold BN, transpose/pad/reshape weights, cast matmul operands to bf16."""
    blocks = []
    prev_cout_p = None
    for p in raw["bottlenecks"]:
        w1, b1 = _fold_bn(p["w1"], p["b1"], *p["bn1"])
        w2, b2 = _fold_bn(p["w2"], p["b2"], *p["bn2"])
        w3, b3 = _fold_bn(p["w3"], p["b3"], *p["bn3"])
        cin = w1.shape[1]
        cout = w3.shape[0]
        cin_p = _round_up(cin, LANE) if prev_cout_p is None else prev_cout_p
        cout_p = _round_up(cout, LANE)

        w1m = jnp.zeros((cin_p, MID), jnp.float32).at[:cin, :].set(
            w1.reshape(MID, cin).T)
        # (Cout, Cin, 3, 3) -> (ki, kj, ci, co) -> (9*128, 128): row t*128 + ci.
        w2m = jnp.transpose(w2, (2, 3, 1, 0)).reshape(9 * MID, MID)
        w3m = jnp.zeros((MID, cout_p), jnp.float32).at[:, :cout].set(
            w3.reshape(cout, MID).T)
        b3m = jnp.zeros((1, cout_p), jnp.float32).at[0, :cout].set(b3)

        blocks.append({
            "w1": w1m.astype(jnp.bfloat16),                  # (Cin_p, 128)
            "b1": b1.reshape(1, MID).astype(jnp.float32),
            "w2": w2m.astype(jnp.bfloat16),                  # (1152, 128)
            "b2": b2.reshape(1, MID).astype(jnp.float32),
            "w3": w3m.astype(jnp.bfloat16),                  # (128, Cout_p)
            "b3": b3m,
        })
        prev_cout_p = cout_p

    nc = raw["fc_w"].shape[0]
    feat_dim = raw["fc_w"].shape[1]
    fcw = jnp.zeros((prev_cout_p, NC_PAD), jnp.float32)
    fcw = fcw.at[:feat_dim, :nc].set(raw["fc_w"].T)
    fcb = jnp.zeros((1, NC_PAD), jnp.float32).at[0, :nc].set(raw["fc_b"])
    return {"bottlenecks": blocks,
            "fc_w": fcw.astype(jnp.bfloat16),
            "fc_b": fcb}


# --------------------------- deterministic params ---------------------------

def _conv_params(key, cin, cout, k):
    kw, kb = jax.random.split(key)
    w = 0.05 * jax.random.normal(kw, (cout, cin, k, k), jnp.float32)
    b = 0.05 * jax.random.normal(kb, (cout,), jnp.float32)
    return w, b


def _bn_params(key, c):
    k1, k2, k3, k4 = jax.random.split(key, 4)
    gamma = 1.0 + 0.1 * jax.random.normal(k1, (c,), jnp.float32)
    beta = 0.1 * jax.random.normal(k2, (c,), jnp.float32)
    rmean = 0.1 * jax.random.normal(k3, (c,), jnp.float32)
    rvar = jax.random.uniform(k4, (c,), jnp.float32, minval=0.5, maxval=1.5)
    return gamma, beta, rmean, rvar


def init_shallownet_params(key, channels, expansion, num_classes):
    chans = [c * expansion for c in channels]
    bottlenecks = []
    for idx in range(1, len(chans)):
        cin, cout = chans[idx - 1], chans[idx]
        key, k1, k2, k3, k4, k5, k6 = jax.random.split(key, 7)
        w1, b1 = _conv_params(k1, cin, MID, 1)
        w2, b2 = _conv_params(k2, MID, MID, 3)
        w3, b3 = _conv_params(k3, MID, cout, 1)
        bottlenecks.append({
            "w1": w1, "b1": b1, "bn1": _bn_params(k4, MID),
            "w2": w2, "b2": b2, "bn2": _bn_params(k5, MID),
            "w3": w3, "b3": b3, "bn3": _bn_params(k6, cout),
        })
    key, kf1, kf2 = jax.random.split(key, 3)
    fc_w = 0.05 * jax.random.normal(kf1, (num_classes, 512 * expansion), jnp.float32)
    fc_b = 0.05 * jax.random.normal(kf2, (num_classes,), jnp.float32)
    return {"bottlenecks": bottlenecks, "fc_w": fc_w, "fc_b": fc_b}


# --------------------------- pure-JAX reference ------------------------------

def _reference_forward(x_nchw, raw, eps=1e-5):
    def conv(x, w, b, stride, pad):
        y = lax.conv_general_dilated(
            x, w, window_strides=(stride, stride),
            padding=((pad, pad), (pad, pad)),
            dimension_numbers=("NCHW", "OIHW", "NCHW"),
            precision=lax.Precision.HIGHEST)
        return y + b[None, :, None, None]

    def bn(x, gamma, beta, rmean, rvar):
        inv = gamma / jnp.sqrt(rvar + eps)
        return ((x - rmean[None, :, None, None]) * inv[None, :, None, None]
                + beta[None, :, None, None])

    x = x_nchw
    for p in raw["bottlenecks"]:
        x = jnp.maximum(bn(conv(x, p["w1"], p["b1"], 1, 0), *p["bn1"]), 0.0)
        x = jnp.maximum(bn(conv(x, p["w2"], p["b2"], 2, 1), *p["bn2"]), 0.0)
        x = jnp.maximum(bn(conv(x, p["w3"], p["b3"], 1, 0), *p["bn3"]), 0.0)
    feat = jnp.mean(x, axis=(2, 3))          # AvgPool2d(4,4) on the 4x4 map
    out = feat @ raw["fc_w"].T + raw["fc_b"]
    return out, feat


# ----------------------------------- main ------------------------------------

if __name__ == "__main__":
    # One DownSampleBottleneck: 16 ch @ 8x8 -> 512 ch @ 4x4, AvgPool2d(4,4),
    # fc(512 -> 3).  Batch of 2.
    channels = [16, 512]
    expansion = 1
    num_classes = 3
    feature_dim = 512 * expansion

    key = jax.random.PRNGKey(0)
    kp, kx = jax.random.split(key)
    raw = init_shallownet_params(kp, channels, expansion, num_classes)
    params = prepare_params(raw, num_classes)

    x = jax.random.normal(kx, (2, channels[0] * expansion, 8, 8), jnp.float32)  # NCHW

    fwd = jax.jit(functools.partial(shallownet_forward,
                                    num_classes=num_classes,
                                    feature_dim=feature_dim,
                                    get_outputs=True))
    out, feature = fwd(x, params)
    jax.block_until_ready((out, feature))
    assert out.shape == (2, num_classes)
    assert feature.shape == (2, feature_dim)

    # Numerical check vs a pure-JAX (f32) reference of the PyTorch module.
    ref_out, ref_feat = _reference_forward(x, raw)
    assert float(jnp.max(jnp.abs(out - ref_out))) < 3e-2
    assert float(jnp.max(jnp.abs(feature - ref_feat))) < 3e-2
    print("KERNEL_OK")
</pallas_src>

<mosaic_0001>
module attributes {stable_mosaic.version = 11 : i64} {
  func.func @_bottleneck_kernel(%arg0: i32, %arg1: memref<1x64x16x128xbf16, #tpu.memory_space<vmem>>, %arg2: memref<128x128xbf16, #tpu.memory_space<vmem>>, %arg3: memref<1x128xf32, #tpu.memory_space<vmem>>, %arg4: memref<1152x128xbf16, #tpu.memory_space<vmem>>, %arg5: memref<1x128xf32, #tpu.memory_space<vmem>>, %arg6: memref<128x512xbf16, #tpu.memory_space<vmem>>, %arg7: memref<1x512xf32, #tpu.memory_space<vmem>>, %arg8: memref<512x128xbf16, #tpu.memory_space<vmem>>, %arg9: memref<1x128xf32, #tpu.memory_space<vmem>>, %arg10: memref<1x16x128xf32, #tpu.memory_space<vmem>>, %arg11: memref<1x16x512xf32, #tpu.memory_space<vmem>>, %arg12: memref<4x4x16x1152xbf16, #tpu.memory_space<vmem>>) attributes {dimension_semantics = [#tpu.dimension_semantics<parallel>], iteration_bounds = array<i64: 1>, scalar_prefetch = 0 : i64, scratch_operands = 1 : i64, tpu.core_type = #tpu.core_type<tc>, window_params = [{transform_indices = @transform_0, window_bounds = array<i64: 1, 64, 16, 128>}, {pipeline_mode = #tpu.pipeline_mode<synchronous>, transform_indices = @transform_1, window_bounds = array<i64: 128, 128>}, {pipeline_mode = #tpu.pipeline_mode<synchronous>, transform_indices = @transform_2, window_bounds = array<i64: 1, 128>}, {pipeline_mode = #tpu.pipeline_mode<synchronous>, transform_indices = @transform_3, window_bounds = array<i64: 1152, 128>}, {pipeline_mode = #tpu.pipeline_mode<synchronous>, transform_indices = @transform_4, window_bounds = array<i64: 1, 128>}, {pipeline_mode = #tpu.pipeline_mode<synchronous>, transform_indices = @transform_5, window_bounds = array<i64: 128, 512>}, {pipeline_mode = #tpu.pipeline_mode<synchronous>, transform_indices = @transform_6, window_bounds = array<i64: 1, 512>}, {pipeline_mode = #tpu.pipeline_mode<synchronous>, transform_indices = @transform_7, window_bounds = array<i64: 512, 128>}, {pipeline_mode = #tpu.pipeline_mode<synchronous>, transform_indices = @transform_8, window_bounds = array<i64: 1, 128>}, {transform_indices = @transform_9, window_bounds = array<i64: 1, 16, 128>}, {transform_indices = @transform_10, window_bounds = array<i64: 1, 16, 512>}]} {
    %c0 = arith.constant 0 : index
    %c0_0 = arith.constant 0 : index
    %c0_1 = arith.constant 0 : index
    %c0_2 = arith.constant 0 : index
    %0 = vector.load %arg1[%c0, %c0_0, %c0_1, %c0_2] : memref<1x64x16x128xbf16, #tpu.memory_space<vmem>>, vector<1x64x16x128xbf16>
    %1 = vector.shape_cast %0 : vector<1x64x16x128xbf16> to vector<64x16x128xbf16>
    %2 = vector.shape_cast %1 : vector<64x16x128xbf16> to vector<1024x128xbf16>
    %c0_3 = arith.constant 0 : index
    %c0_4 = arith.constant 0 : index
    %3 = vector.load %arg2[%c0_3, %c0_4] : memref<128x128xbf16, #tpu.memory_space<vmem>>, vector<128x128xbf16>
    %cst = arith.constant dense<0.000000e+00> : vector<1024x128xf32>
    %4 = tpu.matmul %2, %3, %cst {dimension_numbers = #tpu.dot_dimension_numbers<[1], [0], [0], [1], [0, 0, 1, 1], [], []>} : vector<1024x128xbf16>, vector<128x128xbf16>, vector<1024x128xf32> -> vector<1024x128xf32>
    %c0_5 = arith.constant 0 : index
    %c0_6 = arith.constant 0 : index
    %5 = vector.load %arg3[%c0_5, %c0_6] : memref<1x128xf32, #tpu.memory_space<vmem>>, vector<1x128xf32>
    %6 = vector.broadcast %5 : vector<1x128xf32> to vector<1024x128xf32>
    %7 = arith.addf %4, %6 : vector<1024x128xf32>
    %cst_7 = arith.constant 0.000000e+00 : f32
    %8 = vector.broadcast %cst_7 : f32 to vector<1024x128xf32>
    %9 = arith.maximumf %7, %8 : vector<1024x128xf32>
    %10 = arith.truncf %9 : vector<1024x128xf32> to vector<1024x128xbf16>
    %11 = vector.shape_cast %10 : vector<1024x128xbf16> to vector<4x2x4x2x16x128xbf16>
    %12 = vector.extract_strided_slice %11 {offsets = [0, 1, 0, 1, 0, 0], sizes = [3, 1, 3, 1, 16, 128], strides = [1, 1, 1, 1, 1, 1]} : vector<4x2x4x2x16x128xbf16> to vector<3x1x3x1x16x128xbf16>
    %13 = vector.shape_cast %12 : vector<3x1x3x1x16x128xbf16> to vector<3x3x16x128xbf16>
    %c1 = arith.constant 1 : index
    %c1_8 = arith.constant 1 : index
    %c0_9 = arith.constant 0 : index
    %c0_10 = arith.constant 0 : index
    %14 = vector.load %arg12[%c1, %c1_8, %c0_9, %c0_10] : memref<4x4x16x1152xbf16, #tpu.memory_space<vmem>>, vector<3x3x16x128xbf16>
    tpu.vector_store %arg12[%c1, %c1_8, %c0_9, %c0_10], %13 {strides = array<i32>} : memref<4x4x16x1152xbf16, #tpu.memory_space<vmem>>, vector<3x3x16x128xbf16>,
    %cst_11 = arith.constant 0.000000e+00 : bf16
    %15 = vector.broadcast %cst_11 : bf16 to vector<1x4x16x128xbf16>
    %c0_12 = arith.constant 0 : index
    %c0_13 = arith.constant 0 : index
    %c0_14 = arith.constant 0 : index
    %c0_15 = arith.constant 0 : index
    %16 = vector.load %arg12[%c0_12, %c0_13, %c0_14, %c0_15] : memref<4x4x16x1152xbf16, #tpu.memory_space<vmem>>, vector<1x4x16x128xbf16>
    tpu.vector_store %arg12[%c0_12, %c0_13, %c0_14, %c0_15], %15 {strides = array<i32>} : memref<4x4x16x1152xbf16, #tpu.memory_space<vmem>>, vector<1x4x16x128xbf16>,
    %cst_16 = arith.constant 0.000000e+00 : bf16
    %17 = vector.broadcast %cst_16 : bf16 to vector<3x1x16x128xbf16>
    %c1_17 = arith.constant 1 : index
    %c0_18 = arith.constant 0 : index
    %c0_19 = arith.constant 0 : index
    %c0_20 = arith.constant 0 : index
    %18 = vector.load %arg12[%c1_17, %c0_18, %c0_19, %c0_20] : memref<4x4x16x1152xbf16, #tpu.memory_space<vmem>>, vector<3x1x16x128xbf16>
    tpu.vector_store %arg12[%c1_17, %c0_18, %c0_19, %c0_20], %17 {strides = array<i32>} : memref<4x4x16x1152xbf16, #tpu.memory_space<vmem>>, vector<3x1x16x128xbf16>,
    %19 = vector.extract_strided_slice %11 {offsets = [0, 1, 0, 0, 0, 0], sizes = [3, 1, 4, 1, 16, 128], strides = [1, 1, 1, 1, 1, 1]} : vector<4x2x4x2x16x128xbf16> to vector<3x1x4x1x16x128xbf16>
    %20 = vector.shape_cast %19 : vector<3x1x4x1x16x128xbf16> to vector<3x4x16x128xbf16>
    %c1_21 = arith.constant 1 : index
    %c0_22 = arith.constant 0 : index
    %c0_23 = arith.constant 0 : index
    %c128 = arith.constant 128 : index
    %21 = vector.load %arg12[%c1_21, %c0_22, %c0_23, %c128] : memref<4x4x16x1152xbf16, #tpu.memory_space<vmem>>, vector<3x4x16x128xbf16>
    tpu.vector_store %arg12[%c1_21, %c0_22, %c0_23, %c128], %20 {strides = array<i32>} : memref<4x4x16x1152xbf16, #tpu.memory_space<vmem>>, vector<3x4x16x128xbf16>,
    %cst_24 = arith.constant 0.000000e+00 : bf16
    %22 = vector.broadcast %cst_24 : bf16 to vector<1x4x16x128xbf16>
    %c0_25 = arith.constant 0 : index
    %c0_26 = arith.constant 0 : index
    %c0_27 = arith.constant 0 : index
    %c128_28 = arith.constant 128 : index
    %23 = vector.load %arg12[%c0_25, %c0_26, %c0_27, %c128_28] : memref<4x4x16x1152xbf16, #tpu.memory_space<vmem>>, vector<1x4x16x128xbf16>
    tpu.vector_store %arg12[%c0_25, %c0_26, %c0_27, %c128_28], %22 {strides = array<i32>} : memref<4x4x16x1152xbf16, #tpu.memory_space<vmem>>, vector<1x4x16x128xbf16>,
    %24 = vector.extract_strided_slice %11 {offsets = [0, 1, 0, 1, 0, 0], sizes = [3, 1, 4, 1, 16, 128], strides = [1, 1, 1, 1, 1, 1]} : vector<4x2x4x2x16x128xbf16> to vector<3x1x4x1x16x128xbf16>
    %25 = vector.shape_cast %24 : vector<3x1x4x1x16x128xbf16> to vector<3x4x16x128xbf16>
    %c1_29 = arith.constant 1 : index
    %c0_30 = arith.constant 0 : index
    %c0_31 = arith.constant 0 : index
    %c256 = arith.constant 256 : index
    %26 = vector.load %arg12[%c1_29, %c0_30, %c0_31, %c256] : memref<4x4x16x1152xbf16, #tpu.memory_space<vmem>>, vector<3x4x16x128xbf16>
    tpu.vector_store %arg12[%c1_29, %c0_30, %c0_31, %c256], %25 {strides = array<i32>} : memref<4x4x16x1152xbf16, #tpu.memory_space<vmem>>, vector<3x4x16x128xbf16>,
    %cst_32 = arith.constant 0.000000e+00 : bf16
    %27 = vector.broadcast %cst_32 : bf16 to vector<1x4x16x128xbf16>
    %c0_33 = arith.constant 0 : index
    %c0_34 = arith.constant 0 : index
    %c0_35 = arith.constant 0 : index
    %c256_36 = arith.constant 256 : index
    %28 = vector.load %arg12[%c0_33, %c0_34, %c0_35, %c256_36] : memref<4x4x16x1152xbf16, #tpu.memory_space<vmem>>, vector<1x4x16x128xbf16>
    tpu.vector_store %arg12[%c0_33, %c0_34, %c0_35, %c256_36], %27 {strides = array<i32>} : memref<4x4x16x1152xbf16, #tpu.memory_space<vmem>>, vector<1x4x16x128xbf16>,
    %29 = vector.extract_strided_slice %11 {offsets = [0, 0, 0, 1, 0, 0], sizes = [4, 1, 3, 1, 16, 128], strides = [1, 1, 1, 1, 1, 1]} : vector<4x2x4x2x16x128xbf16> to vector<4x1x3x1x16x128xbf16>
    %30 = vector.shape_cast %29 : vector<4x1x3x1x16x128xbf16> to vector<4x3x16x128xbf16>
    %c0_37 = arith.constant 0 : index
    %c1_38 = arith.constant 1 : index
    %c0_39 = arith.constant 0 : index
    %c384 = arith.constant 384 : index
    %31 = vector.load %arg12[%c0_37, %c1_38, %c0_39, %c384] : memref<4x4x16x1152xbf16, #tpu.memory_space<vmem>>, vector<4x3x16x128xbf16>
    tpu.vector_store %arg12[%c0_37, %c1_38, %c0_39, %c384], %30 {strides = array<i32>} : memref<4x4x16x1152xbf16, #tpu.memory_space<vmem>>, vector<4x3x16x128xbf16>,
    %cst_40 = arith.constant 0.000000e+00 : bf16
    %32 = vector.broadcast %cst_40 : bf16 to vector<4x1x16x128xbf16>
    %c0_41 = arith.constant 0 : index
    %c0_42 = arith.constant 0 : index
    %c0_43 = arith.constant 0 : index
    %c384_44 = arith.constant 384 : index
    %33 = vector.load %arg12[%c0_41, %c0_42, %c0_43, %c384_44] : memref<4x4x16x1152xbf16, #tpu.memory_space<vmem>>, vector<4x1x16x128xbf16>
    tpu.vector_store %arg12[%c0_41, %c0_42, %c0_43, %c384_44], %32 {strides = array<i32>} : memref<4x4x16x1152xbf16, #tpu.memory_space<vmem>>, vector<4x1x16x128xbf16>,
    %34 = vector.extract_strided_slice %11 {offsets = [0, 0, 0, 0, 0, 0], sizes = [4, 1, 4, 1, 16, 128], strides = [1, 1, 1, 1, 1, 1]} : vector<4x2x4x2x16x128xbf16> to vector<4x1x4x1x16x128xbf16>
    %35 = vector.shape_cast %34 : vector<4x1x4x1x16x128xbf16> to vector<4x4x16x128xbf16>
    %c0_45 = arith.constant 0 : index
    %c0_46 = arith.constant 0 : index
    %c0_47 = arith.constant 0 : index
    %c512 = arith.constant 512 : index
    %36 = vector.load %arg12[%c0_45, %c0_46, %c0_47, %c512] : memref<4x4x16x1152xbf16, #tpu.memory_space<vmem>>, vector<4x4x16x128xbf16>
    tpu.vector_store %arg12[%c0_45, %c0_46, %c0_47, %c512], %35 {strides = array<i32>} : memref<4x4x16x1152xbf16, #tpu.memory_space<vmem>>, vector<4x4x16x128xbf16>,
    %37 = vector.extract_strided_slice %11 {offsets = [0, 0, 0, 1, 0, 0], sizes = [4, 1, 4, 1, 16, 128], strides = [1, 1, 1, 1, 1, 1]} : vector<4x2x4x2x16x128xbf16> to vector<4x1x4x1x16x128xbf16>
    %38 = vector.shape_cast %37 : vector<4x1x4x1x16x128xbf16> to vector<4x4x16x128xbf16>
    %c0_48 = arith.constant 0 : index
    %c0_49 = arith.constant 0 : index
    %c0_50 = arith.constant 0 : index
    %c640 = arith.constant 640 : index
    %39 = vector.load %arg12[%c0_48, %c0_49, %c0_50, %c640] : memref<4x4x16x1152xbf16, #tpu.memory_space<vmem>>, vector<4x4x16x128xbf16>
    tpu.vector_store %arg12[%c0_48, %c0_49, %c0_50, %c640], %38 {strides = array<i32>} : memref<4x4x16x1152xbf16, #tpu.memory_space<vmem>>, vector<4x4x16x128xbf16>,
    %40 = vector.extract_strided_slice %11 {offsets = [0, 1, 0, 1, 0, 0], sizes = [4, 1, 3, 1, 16, 128], strides = [1, 1, 1, 1, 1, 1]} : vector<4x2x4x2x16x128xbf16> to vector<4x1x3x1x16x128xbf16>
    %41 = vector.shape_cast %40 : vector<4x1x3x1x16x128xbf16> to vector<4x3x16x128xbf16>
    %c0_51 = arith.constant 0 : index
    %c1_52 = arith.constant 1 : index
    %c0_53 = arith.constant 0 : index
    %c768 = arith.constant 768 : index
    %42 = vector.load %arg12[%c0_51, %c1_52, %c0_53, %c768] : memref<4x4x16x1152xbf16, #tpu.memory_space<vmem>>, vector<4x3x16x128xbf16>
    tpu.vector_store %arg12[%c0_51, %c1_52, %c0_53, %c768], %41 {strides = array<i32>} : memref<4x4x16x1152xbf16, #tpu.memory_space<vmem>>, vector<4x3x16x128xbf16>,
    %cst_54 = arith.constant 0.000000e+00 : bf16
    %43 = vector.broadcast %cst_54 : bf16 to vector<4x1x16x128xbf16>
    %c0_55 = arith.constant 0 : index
    %c0_56 = arith.constant 0 : index
    %c0_57 = arith.constant 0 : index
    %c768_58 = arith.constant 768 : index
    %44 = vector.load %arg12[%c0_55, %c0_56, %c0_57, %c768_58] : memref<4x4x16x1152xbf16, #tpu.memory_space<vmem>>, vector<4x1x16x128xbf16>
    tpu.vector_store %arg12[%c0_55, %c0_56, %c0_57, %c768_58], %43 {strides = array<i32>} : memref<4x4x16x1152xbf16, #tpu.memory_space<vmem>>, vector<4x1x16x128xbf16>,
    %45 = vector.extract_strided_slice %11 {offsets = [0, 1, 0, 0, 0, 0], sizes = [4, 1, 4, 1, 16, 128], strides = [1, 1, 1, 1, 1, 1]} : vector<4x2x4x2x16x128xbf16> to vector<4x1x4x1x16x128xbf16>
    %46 = vector.shape_cast %45 : vector<4x1x4x1x16x128xbf16> to vector<4x4x16x128xbf16>
    %c0_59 = arith.constant 0 : index
    %c0_60 = arith.constant 0 : index
    %c0_61 = arith.constant 0 : index
    %c896 = arith.constant 896 : index
    %47 = vector.load %arg12[%c0_59, %c0_60, %c0_61, %c896] : memref<4x4x16x1152xbf16, #tpu.memory_space<vmem>>, vector<4x4x16x128xbf16>
    tpu.vector_store %arg12[%c0_59, %c0_60, %c0_61, %c896], %46 {strides = array<i32>} : memref<4x4x16x1152xbf16, #tpu.memory_space<vmem>>, vector<4x4x16x128xbf16>,
    %48 = vector.extract_strided_slice %11 {offsets = [0, 1, 0, 1, 0, 0], sizes = [4, 1, 4, 1, 16, 128], strides = [1, 1, 1, 1, 1, 1]} : vector<4x2x4x2x16x128xbf16> to vector<4x1x4x1x16x128xbf16>
    %49 = vector.shape_cast %48 : vector<4x1x4x1x16x128xbf16> to vector<4x4x16x128xbf16>
    %c0_62 = arith.constant 0 : index
    %c0_63 = arith.constant 0 : index
    %c0_64 = arith.constant 0 : index
    %c1024 = arith.constant 1024 : index
    %50 = vector.load %arg12[%c0_62, %c0_63, %c0_64, %c1024] : memref<4x4x16x1152xbf16, #tpu.memory_space<vmem>>, vector<4x4x16x128xbf16>
    tpu.vector_store %arg12[%c0_62, %c0_63, %c0_64, %c1024], %49 {strides = array<i32>} : memref<4x4x16x1152xbf16, #tpu.memory_space<vmem>>, vector<4x4x16x128xbf16>,
    %c0_65 = arith.constant 0 : index
    %c0_66 = arith.constant 0 : index
    %c0_67 = arith.constant 0 : index
    %c0_68 = arith.constant 0 : index
    %51 = vector.load %arg12[%c0_65, %c0_66, %c0_67, %c0_68] : memref<4x4x16x1152xbf16, #tpu.memory_space<vmem>>, vector<4x4x16x1152xbf16>
    %52 = vector.shape_cast %51 : vector<4x4x16x1152xbf16> to vector<256x1152xbf16>
    %c0_69 = arith.constant 0 : index
    %c0_70 = arith.constant 0 : index
    %53 = vector.load %arg4[%c0_69, %c0_70] : memref<1152x128xbf16, #tpu.memory_space<vmem>>, vector<1152x128xbf16>
    %cst_71 = arith.constant dense<0.000000e+00> : vector<256x128xf32>
    %54 = tpu.matmul %52, %53, %cst_71 {dimension_numbers = #tpu.dot_dimension_numbers<[1], [0], [0], [1], [0, 0, 1, 1], [], []>} : vector<256x1152xbf16>, vector<1152x128xbf16>, vector<256x128xf32> -> vector<256x128xf32>
    %c0_72 = arith.constant 0 : index
    %c0_73 = arith.constant 0 : index
    %55 = vector.load %arg5[%c0_72, %c0_73] : memref<1x128xf32, #tpu.memory_space<vmem>>, vector<1x128xf32>
    %56 = vector.broadcast %55 : vector<1x128xf32> to vector<256x128xf32>
    %57 = arith.addf %54, %56 : vector<256x128xf32>
    %cst_74 = arith.constant 0.000000e+00 : f32
    %58 = vector.broadcast %cst_74 : f32 to vector<256x128xf32>
    %59 = arith.maximumf %57, %58 : vector<256x128xf32>
    %60 = arith.truncf %59 : vector<256x128xf32> to vector<256x128xbf16>
    %c0_75 = arith.constant 0 : index
    %c0_76 = arith.constant 0 : index
    %61 = vector.load %arg6[%c0_75, %c0_76] : memref<128x512xbf16, #tpu.memory_space<vmem>>, vector<128x512xbf16>
    %cst_77 = arith.constant dense<0.000000e+00> : vector<256x512xf32>
    %62 = tpu.matmul %60, %61, %cst_77 {dimension_numbers = #tpu.dot_dimension_numbers<[1], [0], [0], [1], [0, 0, 1, 1], [], []>} : vector<256x128xbf16>, vector<128x512xbf16>, vector<256x512xf32> -> vector<256x512xf32>
    %c0_78 = arith.constant 0 : index
    %c0_79 = arith.constant 0 : index
    %63 = vector.load %arg7[%c0_78, %c0_79] : memref<1x512xf32, #tpu.memory_space<vmem>>, vector<1x512xf32>
    %64 = vector.broadcast %63 : vector<1x512xf32> to vector<256x512xf32>
    %65 = arith.addf %62, %64 : vector<256x512xf32>
    %cst_80 = arith.constant 0.000000e+00 : f32
    %66 = vector.broadcast %cst_80 : f32 to vector<256x512xf32>
    %67 = arith.maximumf %65, %66 : vector<256x512xf32>
    %68 = vector.shape_cast %67 : vector<256x512xf32> to vector<16x16x512xf32>
    %cst_81 = arith.constant dense<0.000000e+00> : vector<16x512xf32>
    %69 = vector.multi_reduction <add>, %68, %cst_81 [0] : vector<16x16x512xf32> to vector<16x512xf32>
    %cst_82 = arith.constant 1.600000e+01 : f32
    %70 = vector.broadcast %cst_82 : f32 to vector<16x512xf32>
    %71 = arith.divf %69, %70 : vector<16x512xf32>
    %c0_83 = arith.constant 0 : index
    %c0_84 = arith.constant 0 : index
    %c0_85 = arith.constant 0 : index
    %72 = vector.load %arg11[%c0_83, %c0_84, %c0_85] : memref<1x16x512xf32, #tpu.memory_space<vmem>>, vector<1x16x512xf32>
    %73 = vector.shape_cast %72 : vector<1x16x512xf32> to vector<16x512xf32>
    %74 = vector.shape_cast %71 : vector<16x512xf32> to vector<1x16x512xf32>
    tpu.vector_store %arg11[%c0_83, %c0_84, %c0_85], %74 {strides = array<i32>} : memref<1x16x512xf32, #tpu.memory_space<vmem>>, vector<1x16x512xf32>,
    %75 = arith.truncf %71 : vector<16x512xf32> to vector<16x512xbf16>
    %c0_86 = arith.constant 0 : index
    %c0_87 = arith.constant 0 : index
    %76 = vector.load %arg8[%c0_86, %c0_87] : memref<512x128xbf16, #tpu.memory_space<vmem>>, vector<512x128xbf16>
    %cst_88 = arith.constant dense<0.000000e+00> : vector<16x128xf32>
    %77 = tpu.matmul %75, %76, %cst_88 {dimension_numbers = #tpu.dot_dimension_numbers<[1], [0], [0], [1], [0, 0, 1, 1], [], []>} : vector<16x512xbf16>, vector<512x128xbf16>, vector<16x128xf32> -> vector<16x128xf32>
    %c0_89 = arith.constant 0 : index
    %c0_90 = arith.constant 0 : index
    %78 = vector.load %arg9[%c0_89, %c0_90] : memref<1x128xf32, #tpu.memory_space<vmem>>, vector<1x128xf32>
    %79 = vector.broadcast %78 : vector<1x128xf32> to vector<16x128xf32>
    %80 = arith.addf %77, %79 : vector<16x128xf32>
    %c0_91 = arith.constant 0 : index
    %c0_92 = arith.constant 0 : index
    %c0_93 = arith.constant 0 : index
    %81 = vector.load %arg10[%c0_91, %c0_92, %c0_93] : memref<1x16x128xf32, #tpu.memory_space<vmem>>, vector<1x16x128xf32>
    %82 = vector.shape_cast %81 : vector<1x16x128xf32> to vector<16x128xf32>
    %83 = vector.shape_cast %80 : vector<16x128xf32> to vector<1x16x128xf32>
    tpu.vector_store %arg10[%c0_91, %c0_92, %c0_93], %83 {strides = array<i32>} : memref<1x16x128xf32, #tpu.memory_space<vmem>>, vector<1x16x128xf32>,
    return
  }
  func.func @transform_0(%arg0: i32) -> (i32, i32, i32, i32) {
    %c0_i32 = arith.constant 0 : i32
    %c0_i32_0 = arith.constant 0 : i32
    %c0_i32_1 = arith.constant 0 : i32
    %c0_i32_2 = arith.constant 0 : i32
    return %arg0, %c0_i32, %c0_i32_0, %c0_i32_1 : i32, i32, i32, i32
  }
  func.func @transform_1(%arg0: i32) -> (i32, i32) {
    %c0_i32 = arith.constant 0 : i32
    %c0_i32_0 = arith.constant 0 : i32
    %c0_i32_1 = arith.constant 0 : i32
    return %c0_i32, %c0_i32_0 : i32, i32
  }
  func.func @transform_2(%arg0: i32) -> (i32, i32) {
    %c0_i32 = arith.constant 0 : i32
    %c0_i32_0 = arith.constant 0 : i32
    %c0_i32_1 = arith.constant 0 : i32
    return %c0_i32, %c0_i32_0 : i32, i32
  }
  func.func @transform_3(%arg0: i32) -> (i32, i32) {
    %c0_i32 = arith.constant 0 : i32
    %c0_i32_0 = arith.constant 0 : i32
    %c0_i32_1 = arith.constant 0 : i32
    return %c0_i32, %c0_i32_0 : i32, i32
  }
  func.func @transform_4(%arg0: i32) -> (i32, i32) {
    %c0_i32 = arith.constant 0 : i32
    %c0_i32_0 = arith.constant 0 : i32
    %c0_i32_1 = arith.constant 0 : i32
    return %c0_i32, %c0_i32_0 : i32, i32
  }
  func.func @transform_5(%arg0: i32) -> (i32, i32) {
    %c0_i32 = arith.constant 0 : i32
    %c0_i32_0 = arith.constant 0 : i32
    %c0_i32_1 = arith.constant 0 : i32
    return %c0_i32, %c0_i32_0 : i32, i32
  }
  func.func @transform_6(%arg0: i32) -> (i32, i32) {
    %c0_i32 = arith.constant 0 : i32
    %c0_i32_0 = arith.constant 0 : i32
    %c0_i32_1 = arith.constant 0 : i32
    return %c0_i32, %c0_i32_0 : i32, i32
  }
  func.func @transform_7(%arg0: i32) -> (i32, i32) {
    %c0_i32 = arith.constant 0 : i32
    %c0_i32_0 = arith.constant 0 : i32
    %c0_i32_1 = arith.constant 0 : i32
    return %c0_i32, %c0_i32_0 : i32, i32
  }
  func.func @transform_8(%arg0: i32) -> (i32, i32) {
    %c0_i32 = arith.constant 0 : i32
    %c0_i32_0 = arith.constant 0 : i32
    %c0_i32_1 = arith.constant 0 : i32
    return %c0_i32, %c0_i32_0 : i32, i32
  }
  func.func @transform_9(%arg0: i32) -> (i32, i32, i32) {
    %c0_i32 = arith.constant 0 : i32
    %c0_i32_0 = arith.constant 0 : i32
    %c0_i32_1 = arith.constant 0 : i32
    return %arg0, %c0_i32, %c0_i32_0 : i32, i32, i32
  }
  func.func @transform_10(%arg0: i32) -> (i32, i32, i32) {
    %c0_i32 = arith.constant 0 : i32
    %c0_i32_0 = arith.constant 0 : i32
    %c0_i32_1 = arith.constant 0 : i32
    return %arg0, %c0_i32, %c0_i32_0 : i32, i32, i32
  }
}

</mosaic_0001>

<llo_original>
// kernel: shallownet_forward.1
$region0: #{shallownet_forward.1}
  #allocation0 [shape = 'u32[]', space=smem, size = 0x4, offset = 0x4, fixed_abs, tag = 'smem constant byte address 0x4 - core index']
  #allocation1 [shape = 'u32[144,128]{1,0:T(1,128)}', space=vmem, size = 0x12000, scoped, tag = 'internal scratch']
  #allocation2 [shape = 'bf16[4,4,16,1152]{3,2,1,0:T(16,128)(2,1)}', space=vmem, size = 0x90000, scoped, tag = 'scratch operand']
  %s0 = inlined_call_operand.vmem [shape: bf16[1,64,16,128], index: 0, kind: input, shape index: {}]
  %s1 = inlined_call_operand.vmem [shape: bf16[128,128], index: 1, kind: input, shape index: {}]
  %s2 = inlined_call_operand.vmem [shape: f32[1,128], index: 2, kind: input, shape index: {}]
  %s3 = inlined_call_operand.vmem [shape: bf16[1152,128], index: 3, kind: input, shape index: {}]
  %s4 = inlined_call_operand.vmem [shape: f32[1,128], index: 4, kind: input, shape index: {}]
  %s5 = inlined_call_operand.vmem [shape: bf16[128,512], index: 5, kind: input, shape index: {}]
  %s6 = inlined_call_operand.vmem [shape: f32[1,512], index: 6, kind: input, shape index: {}]
  %s7 = inlined_call_operand.vmem [shape: bf16[512,128], index: 7, kind: input, shape index: {}]
  %s8 = inlined_call_operand.vmem [shape: f32[1,128], index: 8, kind: input, shape index: {}]
  %s9 = inlined_call_operand.vmem [shape: f32[1,16,128], index: 9, kind: output, shape index: {0}]
  %s10 = inlined_call_operand.vmem [shape: f32[1,16,512], index: 10, kind: output, shape index: {1}]
  %11 = xla_tuple %s9, %s10
  %s12 = sld [smem:[#allocation0]]
  $region54: #{shallownet_forward.1} parent=0
    _
  %s14 = ssub.s32 1, %s12
  %s15 = scalar_select 0, %s14, %s12
  // Predicated region
  $region2: #{shallownet_forward.1} parent=0 // pred_check
    _
  $region3: #{shallownet_forward.1} parent=0 // pred_check_branch
    %17 = sbr.rel (0) target = $region5
  $region4: #{shallownet_forward.1} parent=0 // pred_region
    _
  $region5: #{shallownet_forward.1} parent=0 // pred_fallthru
    _
  // Predicated region
  $region6: #{shallownet_forward.1} parent=0 // pred_check
    _
  $region7: #{shallownet_forward.1} parent=0 // pred_check_branch
    %19 = sbr.rel (0) target = $region9
  $region8: #{shallownet_forward.1} parent=0 // pred_region
    _
  $region9: #{shallownet_forward.1} parent=0 // pred_fallthru
    _
  // Predicated region
  $region10: #{shallownet_forward.1} parent=0 // pred_check
    _
  $region11: #{shallownet_forward.1} parent=0 // pred_check_branch
    %21 = sbr.rel (0) target = $region13
  $region12: #{shallownet_forward.1} parent=0 // pred_region
    _
  $region13: #{shallownet_forward.1} parent=0 // pred_fallthru
    _
  // Predicated region
  $region14: #{shallownet_forward.1} parent=0 // pred_check
    _
  $region15: #{shallownet_forward.1} parent=0 // pred_check_branch
    %23 = sbr.rel (0) target = $region17
  $region16: #{shallownet_forward.1} parent=0 // pred_region
    _
  $region17: #{shallownet_forward.1} parent=0 // pred_fallthru
    _
  // Predicated region
  $region18: #{shallownet_forward.1} parent=0 // pred_check
    _
  $region19: #{shallownet_forward.1} parent=0 // pred_check_branch
    %25 = sbr.rel (0) target = $region21
  $region20: #{shallownet_forward.1} parent=0 // pred_region
    _
  $region21: #{shallownet_forward.1} parent=0 // pred_fallthru
    _
  // Predicated region
  $region22: #{shallownet_forward.1} parent=0 // pred_check
    _
  $region23: #{shallownet_forward.1} parent=0 // pred_check_branch
    %27 = sbr.rel (0) target = $region25
  $region24: #{shallownet_forward.1} parent=0 // pred_region
    _
  $region25: #{shallownet_forward.1} parent=0 // pred_fallthru
    _
  // Predicated region
  $region26: #{shallownet_forward.1} parent=0 // pred_check
    _
  $region27: #{shallownet_forward.1} parent=0 // pred_check_branch
    %29 = sbr.rel (0) target = $region29
  $region28: #{shallownet_forward.1} parent=0 // pred_region
    _
  $region29: #{shallownet_forward.1} parent=0 // pred_fallthru
    _
  // Predicated region
  $region30: #{shallownet_forward.1} parent=0 // pred_check
    _
  $region31: #{shallownet_forward.1} parent=0 // pred_check_branch
    %31 = sbr.rel (0) target = $region33
  $region32: #{shallownet_forward.1} parent=0 // pred_region
    _
  $region33: #{shallownet_forward.1} parent=0 // pred_fallthru
    _
  // Predicated region
  $region34: #{shallownet_forward.1} parent=0 // pred_check
    _
  $region35: #{shallownet_forward.1} parent=0 // pred_check_branch
    %33 = sbr.rel (0) target = $region37
  $region36: #{shallownet_forward.1} parent=0 // pred_region
    _
  $region37: #{shallownet_forward.1} parent=0 // pred_fallthru
    _
  %v35 = vld [vmem:[%s0] sm:$0xf]
  %v36 = vld [vmem:[%s0 + $0x4] sm:$0xf]
  %v37 = vld [vmem:[%s0 + $0x8] sm:$0xf]
  %v38 = vld [vmem:[%s0 + $0xc] sm:$0xf]
  %v39 = vld [vmem:[%s0 + $0x10] sm:$0xf]
  %v40 = vld [vmem:[%s0 + $0x14] sm:$0xf]
  %v41 = vld [vmem:[%s0 + $0x18] sm:$0xf]
  %v42 = vld [vmem:[%s0 + $0x1c] sm:$0xf]
  %v43 = vld [vmem:[%s0 + $0x20] sm:$0xf]
  %v44 = vld [vmem:[%s0 + $0x24] sm:$0xf]
  %v45 = vld [vmem:[%s0 + $0x28] sm:$0xf]
  %v46 = vld [vmem:[%s0 + $0x2c] sm:$0xf]
  %v47 = vld [vmem:[%s0 + $0x30] sm:$0xf]
  %v48 = vld [vmem:[%s0 + $0x34] sm:$0xf]
  %v49 = vld [vmem:[%s0 + $0x38] sm:$0xf]
  %v50 = vld [vmem:[%s0 + $0x3c] sm:$0xf]
  %v51 = vld [vmem:[%s0 + $0x40] sm:$0xf]
  %v52 = vld [vmem:[%s0 + $0x44] sm:$0xf]
  %v53 = vld [vmem:[%s0 + $0x48] sm:$0xf]
  %v54 = vld [vmem:[%s0 + $0x4c] sm:$0xf]
  %v55 = vld [vmem:[%s0 + $0x50] sm:$0xf]
  %v56 = vld [vmem:[%s0 + $0x54] sm:$0xf]
  %v57 = vld [vmem:[%s0 + $0x58] sm:$0xf]
  %v58 = vld [vmem:[%s0 + $0x5c] sm:$0xf]
  %v59 = vld [vmem:[%s0 + $0x60] sm:$0xf]
  %v60 = vld [vmem:[%s0 + $0x64] sm:$0xf]
  %v61 = vld [vmem:[%s0 + $0x68] sm:$0xf]
  %v62 = vld [vmem:[%s0 + $0x6c] sm:$0xf]
  %v63 = vld [vmem:[%s0 + $0x70] sm:$0xf]
  %v64 = vld [vmem:[%s0 + $0x74] sm:$0xf]
  %v65 = vld [vmem:[%s0 + $0x78] sm:$0xf]
  %v66 = vld [vmem:[%s0 + $0x7c] sm:$0xf]
  %v67 = vld [vmem:[%s0 + $0x80] sm:$0xf]
  %v68 = vld [vmem:[%s0 + $0x84] sm:$0xf]
  %v69 = vld [vmem:[%s0 + $0x88] sm:$0xf]
  %v70 = vld [vmem:[%s0 + $0x8c] sm:$0xf]
  %v71 = vld [vmem:[%s0 + $0x90] sm:$0xf]
  %v72 = vld [vmem:[%s0 + $0x94] sm:$0xf]
  %v73 = vld [vmem:[%s0 + $0x98] sm:$0xf]
  %v74 = vld [vmem:[%s0 + $0x9c] sm:$0xf]
  %v75 = vld [vmem:[%s0 + $0xa0] sm:$0xf]
  %v76 = vld [vmem:[%s0 + $0xa4] sm:$0xf]
  %v77 = vld [vmem:[%s0 + $0xa8] sm:$0xf]
  %v78 = vld [vmem:[%s0 + $0xac] sm:$0xf]
  %v79 = vld [vmem:[%s0 + $0xb0] sm:$0xf]
  %v80 = vld [vmem:[%s0 + $0xb4] sm:$0xf]
  %v81 = vld [vmem:[%s0 + $0xb8] sm:$0xf]
  %v82 = vld [vmem:[%s0 + $0xbc] sm:$0xf]
  %v83 = vld [vmem:[%s0 + $0xc0] sm:$0xf]
  %v84 = vld [vmem:[%s0 + $0xc4] sm:$0xf]
  %v85 = vld [vmem:[%s0 + $0xc8] sm:$0xf]
  %v86 = vld [vmem:[%s0 + $0xcc] sm:$0xf]
  %v87 = vld [vmem:[%s0 + $0xd0] sm:$0xf]
  %v88 = vld [vmem:[%s0 + $0xd4] sm:$0xf]
  %v89 = vld [vmem:[%s0 + $0xd8] sm:$0xf]
  %v90 = vld [vmem:[%s0 + $0xdc] sm:$0xf]
  %v91 = vld [vmem:[%s0 + $0xe0] sm:$0xf]
  %v92 = vld [vmem:[%s0 + $0xe4] sm:$0xf]
  %v93 = vld [vmem:[%s0 + $0xe8] sm:$0xf]
  %v94 = vld [vmem:[%s0 + $0xec] sm:$0xf]
  %v95 = vld [vmem:[%s0 + $0xf0] sm:$0xf]
  %v96 = vld [vmem:[%s0 + $0xf4] sm:$0xf]
  %v97 = vld [vmem:[%s0 + $0xf8] sm:$0xf]
  %v98 = vld [vmem:[%s0 + $0xfc] sm:$0xf]
  %v99 = vld [vmem:[%s0 + $0x100] sm:$0xf]
  %v100 = vld [vmem:[%s0 + $0x104] sm:$0xf]
  %v101 = vld [vmem:[%s0 + $0x108] sm:$0xf]
  %v102 = vld [vmem:[%s0 + $0x10c] sm:$0xf]
  %v103 = vld [vmem:[%s0 + $0x110] sm:$0xf]
  %v104 = vld [vmem:[%s0 + $0x114] sm:$0xf]
  %v105 = vld [vmem:[%s0 + $0x118] sm:$0xf]
  %v106 = vld [vmem:[%s0 + $0x11c] sm:$0xf]
  %v107 = vld [vmem:[%s0 + $0x120] sm:$0xf]
  %v108 = vld [vmem:[%s0 + $0x124] sm:$0xf]
  %v109 = vld [vmem:[%s0 + $0x128] sm:$0xf]
  %v110 = vld [vmem:[%s0 + $0x12c] sm:$0xf]
  %v111 = vld [vmem:[%s0 + $0x130] sm:$0xf]
  %v112 = vld [vmem:[%s0 + $0x134] sm:$0xf]
  %v113 = vld [vmem:[%s0 + $0x138] sm:$0xf]
  %v114 = vld [vmem:[%s0 + $0x13c] sm:$0xf]
  %v115 = vld [vmem:[%s0 + $0x140] sm:$0xf]
  %v116 = vld [vmem:[%s0 + $0x144] sm:$0xf]
  %v117 = vld [vmem:[%s0 + $0x148] sm:$0xf]
  %v118 = vld [vmem:[%s0 + $0x14c] sm:$0xf]
  %v119 = vld [vmem:[%s0 + $0x150] sm:$0xf]
  %v120 = vld [vmem:[%s0 + $0x154] sm:$0xf]
  %v121 = vld [vmem:[%s0 + $0x158] sm:$0xf]
  %v122 = vld [vmem:[%s0 + $0x15c] sm:$0xf]
  %v123 = vld [vmem:[%s0 + $0x160] sm:$0xf]
  %v124 = vld [vmem:[%s0 + $0x164] sm:$0xf]
  %v125 = vld [vmem:[%s0 + $0x168] sm:$0xf]
  %v126 = vld [vmem:[%s0 + $0x16c] sm:$0xf]
  %v127 = vld [vmem:[%s0 + $0x170] sm:$0xf]
  %v128 = vld [vmem:[%s0 + $0x174] sm:$0xf]
  %v129 = vld [vmem:[%s0 + $0x178] sm:$0xf]
  %v130 = vld [vmem:[%s0 + $0x17c] sm:$0xf]
  %v131 = vld [vmem:[%s0 + $0x180] sm:$0xf]
  %v132 = vld [vmem:[%s0 + $0x184] sm:$0xf]
  %v133 = vld [vmem:[%s0 + $0x188] sm:$0xf]
  %v134 = vld [vmem:[%s0 + $0x18c] sm:$0xf]
  %v135 = vld [vmem:[%s0 + $0x190] sm:$0xf]
  %v136 = vld [vmem:[%s0 + $0x194] sm:$0xf]
  %v137 = vld [vmem:[%s0 + $0x198] sm:$0xf]
  %v138 = vld [vmem:[%s0 + $0x19c] sm:$0xf]
  %v139 = vld [vmem:[%s0 + $0x1a0] sm:$0xf]
  %v140 = vld [vmem:[%s0 + $0x1a4] sm:$0xf]
  %v141 = vld [vmem:[%s0 + $0x1a8] sm:$0xf]
  %v142 = vld [vmem:[%s0 + $0x1ac] sm:$0xf]
  %v143 = vld [vmem:[%s0 + $0x1b0] sm:$0xf]
  %v144 = vld [vmem:[%s0 + $0x1b4] sm:$0xf]
  %v145 = vld [vmem:[%s0 + $0x1b8] sm:$0xf]
  %v146 = vld [vmem:[%s0 + $0x1bc] sm:$0xf]
  %v147 = vld [vmem:[%s0 + $0x1c0] sm:$0xf]
  %v148 = vld [vmem:[%s0 + $0x1c4] sm:$0xf]
  %v149 = vld [vmem:[%s0 + $0x1c8] sm:$0xf]
  %v150 = vld [vmem:[%s0 + $0x1cc] sm:$0xf]
  %v151 = vld [vmem:[%s0 + $0x1d0] sm:$0xf]
  %v152 = vld [vmem:[%s0 + $0x1d4] sm:$0xf]
  %v153 = vld [vmem:[%s0 + $0x1d8] sm:$0xf]
  %v154 = vld [vmem:[%s0 + $0x1dc] sm:$0xf]
  %v155 = vld [vmem:[%s0 + $0x1e0] sm:$0xf]
  %v156 = vld [vmem:[%s0 + $0x1e4] sm:$0xf]
  %v157 = vld [vmem:[%s0 + $0x1e8] sm:$0xf]
  %v158 = vld [vmem:[%s0 + $0x1ec] sm:$0xf]
  %v159 = vld [vmem:[%s0 + $0x1f0] sm:$0xf]
  %v160 = vld [vmem:[%s0 + $0x1f4] sm:$0xf]
  %v161 = vld [vmem:[%s0 + $0x1f8] sm:$0xf]
  %v162 = vld [vmem:[%s0 + $0x1fc] sm:$0xf]
  %v163 = vld [vmem:[%s1] sm:$0xf]
  %v164 = vld [vmem:[%s1 + $0x4] sm:$0xf]
  %v165 = vld [vmem:[%s1 + $0x8] sm:$0xf]
  %v166 = vld [vmem:[%s1 + $0xc] sm:$0xf]
  %v167 = vld [vmem:[%s1 + $0x10] sm:$0xf]
  %v168 = vld [vmem:[%s1 + $0x14] sm:$0xf]
  %v169 = vld [vmem:[%s1 + $0x18] sm:$0xf]
  %v170 = vld [vmem:[%s1 + $0x1c] sm:$0xf]
  %v171 = vld [vmem:[%s1 + $0x20] sm:$0xf]
  %v172 = vld [vmem:[%s1 + $0x24] sm:$0xf]
  %v173 = vld [vmem:[%s1 + $0x28] sm:$0xf]
  %v174 = vld [vmem:[%s1 + $0x2c] sm:$0xf]
  %v175 = vld [vmem:[%s1 + $0x30] sm:$0xf]
  %v176 = vld [vmem:[%s1 + $0x34] sm:$0xf]
  %v177 = vld [vmem:[%s1 + $0x38] sm:$0xf]
  %v178 = vld [vmem:[%s1 + $0x3c] sm:$0xf]
  %v179 = vld [vmem:[%s2] sm:$0x1]
  %v181 = vlaneseq
  %v182 = vshrl.u32 %v181, 7
  %v183 = vsub.s32 0, %v182
  %v184 = vrot.slane %v179, %v183
  %v314 = vunpack.c.l.b16 %v35
  %v315 = vunpack.c.l.b16 %v36
  %v316 = vunpack.c.l.b16 %v37
  %v317 = vunpack.c.l.b16 %v38
  %v318 = vunpack.c.l.b16 %v39
  %v319 = vunpack.c.l.b16 %v40
  %v320 = vunpack.c.l.b16 %v41
  %v321 = vunpack.c.l.b16 %v42
  %v322 = vunpack.c.l.b16 %v43
  %v323 = vunpack.c.l.b16 %v44
  %v324 = vunpack.c.l.b16 %v45
  %v325 = vunpack.c.l.b16 %v46
  %v326 = vunpack.c.l.b16 %v47
  %v327 = vunpack.c.l.b16 %v48
  %v328 = vunpack.c.l.b16 %v49
  %v329 = vunpack.c.l.b16 %v50
  %v330 = vunpack.c.l.b16 %v51
  %v331 = vunpack.c.l.b16 %v52
  %v332 = vunpack.c.l.b16 %v53
  %v333 = vunpack.c.l.b16 %v54
  %v334 = vunpack.c.l.b16 %v55
  %v335 = vunpack.c.l.b16 %v56
  %v336 = vunpack.c.l.b16 %v57
  %v337 = vunpack.c.l.b16 %v58
  %v338 = vunpack.c.l.b16 %v59
  %v339 = vunpack.c.l.b16 %v60
  %v340 = vunpack.c.l.b16 %v61
  %v341 = vunpack.c.l.b16 %v62
  %v342 = vunpack.c.l.b16 %v63
  %v343 = vunpack.c.l.b16 %v64
  %v344 = vunpack.c.l.b16 %v65
  %v345 = vunpack.c.l.b16 %v66
  %v346 = vunpack.c.l.b16 %v67
  %v347 = vunpack.c.l.b16 %v68
  %v348 = vunpack.c.l.b16 %v69
  %v349 = vunpack.c.l.b16 %v70
  %v350 = vunpack.c.l.b16 %v71
  %v351 = vunpack.c.l.b16 %v72
  %v352 = vunpack.c.l.b16 %v73
  %v353 = vunpack.c.l.b16 %v74
  %v354 = vunpack.c.l.b16 %v75
  %v355 = vunpack.c.l.b16 %v76
  %v356 = vunpack.c.l.b16 %v77
  %v357 = vunpack.c.l.b16 %v78
  %v358 = vunpack.c.l.b16 %v79
  %v359 = vunpack.c.l.b16 %v80
  %v360 = vunpack.c.l.b16 %v81
  %v361 = vunpack.c.l.b16 %v82
  %v362 = vunpack.c.l.b16 %v83
  %v363 = vunpack.c.l.b16 %v84
  %v364 = vunpack.c.l.b16 %v85
  %v365 = vunpack.c.l.b16 %v86
  %v366 = vunpack.c.l.b16 %v87
  %v367 = vunpack.c.l.b16 %v88
  %v368 = vunpack.c.l.b16 %v89
  %v369 = vunpack.c.l.b16 %v90
  %v370 = vunpack.c.l.b16 %v91
  %v371 = vunpack.c.l.b16 %v92
  %v372 = vunpack.c.l.b16 %v93
  %v373 = vunpack.c.l.b16 %v94
  %v374 = vunpack.c.l.b16 %v95
  %v375 = vunpack.c.l.b16 %v96
  %v376 = vunpack.c.l.b16 %v97
  %v377 = vunpack.c.l.b16 %v98
  %v378 = vunpack.c.l.b16 %v99
  %v379 = vunpack.c.l.b16 %v100
  %v380 = vunpack.c.l.b16 %v101
  %v381 = vunpack.c.l.b16 %v102
  %v382 = vunpack.c.l.b16 %v103
  %v383 = vunpack.c.l.b16 %v104
  %v384 = vunpack.c.l.b16 %v105
  %v385 = vunpack.c.l.b16 %v106
  %v386 = vunpack.c.l.b16 %v107
  %v387 = vunpack.c.l.b16 %v108
  %v388 = vunpack.c.l.b16 %v109
  %v389 = vunpack.c.l.b16 %v110
  %v390 = vunpack.c.l.b16 %v111
  %v391 = vunpack.c.l.b16 %v112
  %v392 = vunpack.c.l.b16 %v113
  %v393 = vunpack.c.l.b16 %v114
  %v394 = vunpack.c.l.b16 %v115
  %v395 = vunpack.c.l.b16 %v116
  %v396 = vunpack.c.l.b16 %v117
  %v397 = vunpack.c.l.b16 %v118
  %v398 = vunpack.c.l.b16 %v119
  %v399 = vunpack.c.l.b16 %v120
  %v400 = vunpack.c.l.b16 %v121
  %v401 = vunpack.c.l.b16 %v122
  %v402 = vunpack.c.l.b16 %v123
  %v403 = vunpack.c.l.b16 %v124
  %v404 = vunpack.c.l.b16 %v125
  %v405 = vunpack.c.l.b16 %v126
  %v406 = vunpack.c.l.b16 %v127
  %v407 = vunpack.c.l.b16 %v128
  %v408 = vunpack.c.l.b16 %v129
  %v409 = vunpack.c.l.b16 %v130
  %v410 = vunpack.c.l.b16 %v131
  %v411 = vunpack.c.l.b16 %v132
  %v412 = vunpack.c.l.b16 %v133
  %v413 = vunpack.c.l.b16 %v134
  %v414 = vunpack.c.l.b16 %v135
  %v415 = vunpack.c.l.b16 %v136
  %v416 = vunpack.c.l.b16 %v137
  %v417 = vunpack.c.l.b16 %v138
  %v418 = vunpack.c.l.b16 %v139
  %v419 = vunpack.c.l.b16 %v140
  %v420 = vunpack.c.l.b16 %v141
  %v421 = vunpack.c.l.b16 %v142
  %v422 = vunpack.c.l.b16 %v143
  %v423 = vunpack.c.l.b16 %v144
  %v424 = vunpack.c.l.b16 %v145
  %v425 = vunpack.c.l.b16 %v146
  %v426 = vunpack.c.l.b16 %v147
  %v427 = vunpack.c.l.b16 %v148
  %v428 = vunpack.c.l.b16 %v149
  %v429 = vunpack.c.l.b16 %v150
  %v430 = vunpack.c.l.b16 %v151
  %v431 = vunpack.c.l.b16 %v152
  %v432 = vunpack.c.l.b16 %v153
  %v433 = vunpack.c.l.b16 %v154
  %v434 = vunpack.c.l.b16 %v155
  %v435 = vunpack.c.l.b16 %v156
  %v436 = vunpack.c.l.b16 %v157
  %v437 = vunpack.c.l.b16 %v158
  %v438 = vunpack.c.l.b16 %v159
  %v439 = vunpack.c.l.b16 %v160
  %v440 = vunpack.c.l.b16 %v161
  %v441 = vunpack.c.l.b16 %v162
  %v442 = vpack.c.b16 %v315, %v314
  %v443 = vpack.c.b16 %v317, %v316
  %v444 = vpack.c.b16 %v319, %v318
  %v445 = vpack.c.b16 %v321, %v320
  %v446 = vpack.c.b16 %v323, %v322
  %v447 = vpack.c.b16 %v325, %v324
  %v448 = vpack.c.b16 %v327, %v326
  %v449 = vpack.c.b16 %v329, %v328
  %v450 = vpack.c.b16 %v331, %v330
  %v451 = vpack.c.b16 %v333, %v332
  %v452 = vpack.c.b16 %v335, %v334
  %v453 = vpack.c.b16 %v337, %v336
  %v454 = vpack.c.b16 %v339, %v338
  %v455 = vpack.c.b16 %v341, %v340
  %v456 = vpack.c.b16 %v343, %v342
  %v457 = vpack.c.b16 %v345, %v344
  %v458 = vpack.c.b16 %v347, %v346
  %v459 = vpack.c.b16 %v349, %v348
  %v460 = vpack.c.b16 %v351, %v350
  %v461 = vpack.c.b16 %v353, %v352
  %v462 = vpack.c.b16 %v355, %v354
  %v463 = vpack.c.b16 %v357, %v356
  %v464 = vpack.c.b16 %v359, %v358
  %v465 = vpack.c.b16 %v361, %v360
  %v466 = vpack.c.b16 %v363, %v362
  %v467 = vpack.c.b16 %v365, %v364
  %v468 = vpack.c.b16 %v367, %v366
  %v469 = vpack.c.b16 %v369, %v368
  %v470 = vpack.c.b16 %v371, %v370
  %v471 = vpack.c.b16 %v373, %v372
  %v472 = vpack.c.b16 %v375, %v374
  %v473 = vpack.c.b16 %v377, %v376
  %v474 = vpack.c.b16 %v379, %v378
  %v475 = vpack.c.b16 %v381, %v380
  %v476 = vpack.c.b16 %v383, %v382
  %v477 = vpack.c.b16 %v385, %v384
  %v478 = vpack.c.b16 %v387, %v386
  %v479 = vpack.c.b16 %v389, %v388
  %v480 = vpack.c.b16 %v391, %v390
  %v481 = vpack.c.b16 %v393, %v392
  %v482 = vpack.c.b16 %v395, %v394
  %v483 = vpack.c.b16 %v397, %v396
  %v484 = vpack.c.b16 %v399, %v398
  %v485 = vpack.c.b16 %v401, %v400
  %v486 = vpack.c.b16 %v403, %v402
  %v487 = vpack.c.b16 %v405, %v404
  %v488 = vpack.c.b16 %v407, %v406
  %v489 = vpack.c.b16 %v409, %v408
  %v490 = vpack.c.b16 %v411, %v410
  %v491 = vpack.c.b16 %v413, %v412
  %v492 = vpack.c.b16 %v415, %v414
  %v493 = vpack.c.b16 %v417, %v416
  %v494 = vpack.c.b16 %v419, %v418
  %v495 = vpack.c.b16 %v421, %v420
  %v496 = vpack.c.b16 %v423, %v422
  %v497 = vpack.c.b16 %v425, %v424
  %v498 = vpack.c.b16 %v427, %v426
  %v499 = vpack.c.b16 %v429, %v428
  %v500 = vpack.c.b16 %v431, %v430
  %v501 = vpack.c.b16 %v433, %v432
  %v502 = vpack.c.b16 %v435, %v434
  %v503 = vpack.c.b16 %v437, %v436
  %v504 = vpack.c.b16 %v439, %v438
  %v505 = vpack.c.b16 %v441, %v440
  %v586 = vunpack.c.l.b16 %v163
  %v587 = vunpack.c.l.b16 %v164
  %v588 = vunpack.c.l.b16 %v165
  %v589 = vunpack.c.l.b16 %v166
  %v590 = vunpack.c.l.b16 %v167
  %v591 = vunpack.c.l.b16 %v168
  %v592 = vunpack.c.l.b16 %v169
  %v593 = vunpack.c.l.b16 %v170
  %v594 = vunpack.c.l.b16 %v171
  %v595 = vunpack.c.l.b16 %v172
  %v596 = vunpack.c.l.b16 %v173
  %v597 = vunpack.c.l.b16 %v174
  %v598 = vunpack.c.l.b16 %v175
  %v599 = vunpack.c.l.b16 %v176
  %v600 = vunpack.c.l.b16 %v177
  %v601 = vunpack.c.l.b16 %v178
  %v602 = vpack.c.b16 %v587, %v586
  %v603 = vpack.c.b16 %v589, %v588
  %v604 = vpack.c.b16 %v591, %v590
  %v605 = vpack.c.b16 %v593, %v592
  %v606 = vpack.c.b16 %v595, %v594
  %v607 = vpack.c.b16 %v597, %v596
  %v608 = vpack.c.b16 %v599, %v598
  %v609 = vpack.c.b16 %v601, %v600
  %618 = vmatprep.subr.bf16.mxu0 0
  %619 = vmatpush1.bf16.msra.mxu0 %v602
  %620 = vmatprep.subr.bf16.mxu0 0
  %621 = vmatpush1.bf16.msra.mxu0 %v603
  %622 = vmatprep.subr.bf16.mxu0 0
  %623 = vmatpush1.bf16.msra.mxu0 %v604
  %624 = vmatprep.subr.bf16.mxu0 0
  %625 = vmatpush1.bf16.msra.mxu0 %v605
  %626 = vmatprep.subr.bf16.mxu0 0
  %627 = vmatpush1.bf16.msra.mxu0 %v606
  %628 = vmatprep.subr.bf16.mxu0 0
  %629 = vmatpush1.bf16.msra.mxu0 %v607
  %630 = vmatprep.subr.bf16.mxu0 0
  %631 = vmatpush1.bf16.msra.mxu0 %v608
  %632 = vmatprep.subr.bf16.mxu0 0
  %633 = vmatpush1.bf16.msra.mxu0 %v609
  %634 = vmatprep.subr.bf16.mxu0 0
  %635 = vmatpush1.bf16.msra.mxu0 0
  %636 = vmatprep.subr.bf16.mxu0 0
  %637 = vmatpush1.bf16.msra.mxu0 0
  %638 = vmatprep.subr.bf16.mxu0 0
  %639 = vmatpush1.bf16.msra.mxu0 0
  %640 = vmatprep.subr.bf16.mxu0 0
  %641 = vmatpush1.bf16.msra.mxu0 0
  %642 = vmatprep.subr.bf16.mxu0 0
  %643 = vmatpush1.bf16.msra.mxu0 0
  %644 = vmatprep.subr.bf16.mxu0 0
  %645 = vmatpush1.bf16.msra.mxu0 0
  %646 = vmatprep.subr.bf16.mxu0 0
  %647 = vmatpush1.bf16.msra.mxu0 0
  %648 = vmatprep.subr.bf16.mxu0 0
  %649 = vmatpush1.bf16.msra.mxu0 0
  %650 = vmatprep.mubr.bf16.mxu0 0
  %651 = vmatmul.mubr.bf16.gmra.mrb[0].mxu0 %v442
  %v652 = vpop.f32.mrb[0].mxu0
  %v653 = vadd.f32 %v184, %v652
  %v654 = vpop.f32.mrb[0].mxu0
  %v655 = vpop.f32.mrb[0].mxu0
  %v656 = vadd.f32 %v184, %v655
  %v657 = vpop.f32.mrb[0].mxu0
  %658 = vmatprep.mubr.bf16.mxu0 0
  %659 = vmatmul.mubr.bf16.gmra.mrb[0].mxu0 %v443
  %v660 = vpop.f32.mrb[0].mxu0
  %v661 = vadd.f32 %v184, %v660
  %v662 = vpop.f32.mrb[0].mxu0
  %v663 = vpop.f32.mrb[0].mxu0
  %v664 = vadd.f32 %v184, %v663
  %v665 = vpop.f32.mrb[0].mxu0
  %666 = vmatprep.mubr.bf16.mxu0 0
  %667 = vmatmul.mubr.bf16.gmra.mrb[0].mxu0 %v444
  %v668 = vpop.f32.mrb[0].mxu0
  %v669 = vadd.f32 %v184, %v668
  %v670 = vpop.f32.mrb[0].mxu0
  %v671 = vpop.f32.mrb[0].mxu0
  %v672 = vadd.f32 %v184, %v671
  %v673 = vpop.f32.mrb[0].mxu0
  %674 = vmatprep.mubr.bf16.mxu0 0
  %675 = vmatmul.mubr.bf16.gmra.mrb[0].mxu0 %v445
  %v676 = vpop.f32.mrb[0].mxu0
  %v677 = vadd.f32 %v184, %v676
  %v678 = vpop.f32.mrb[0].mxu0
  %v679 = vpop.f32.mrb[0].mxu0
  %v680 = vadd.f32 %v184, %v679
  %v681 = vpop.f32.mrb[0].mxu0
  %682 = vmatprep.mubr.bf16.mxu0 0
  %683 = vmatmul.mubr.bf16.gmra.mrb[0].mxu0 %v446
  %v684 = vpop.f32.mrb[0].mxu0
  %v685 = vadd.f32 %v184, %v684
  %v686 = vpop.f32.mrb[0].mxu0
  %v687 = vpop.f32.mrb[0].mxu0
  %v688 = vadd.f32 %v184, %v687
  %v689 = vpop.f32.mrb[0].mxu0
  %690 = vmatprep.mubr.bf16.mxu0 0
  %691 = vmatmul.mubr.bf16.gmra.mrb[0].mxu0 %v447
  %v692 = vpop.f32.mrb[0].mxu0
  %v693 = vadd.f32 %v184, %v692
  %v694 = vpop.f32.mrb[0].mxu0
  %v695 = vpop.f32.mrb[0].mxu0
  %v696 = vadd.f32 %v184, %v695
  %v697 = vpop.f32.mrb[0].mxu0
  %698 = vmatprep.mubr.bf16.mxu0 0
  %699 = vmatmul.mubr.bf16.gmra.mrb[0].mxu0 %v448
  %v700 = vpop.f32.mrb[0].mxu0
  %v701 = vadd.f32 %v184, %v700
  %v702 = vpop.f32.mrb[0].mxu0
  %v703 = vpop.f32.mrb[0].mxu0
  %v704 = vadd.f32 %v184, %v703
  %v705 = vpop.f32.mrb[0].mxu0
  %706 = vmatprep.mubr.bf16.mxu0 0
  %707 = vmatmul.mubr.bf16.gmra.mrb[0].mxu0 %v449
  %v708 = vpop.f32.mrb[0].mxu0
  %v709 = vadd.f32 %v184, %v708
  %v710 = vpop.f32.mrb[0].mxu0
  %v711 = vpop.f32.mrb[0].mxu0
  %v712 = vadd.f32 %v184, %v711
  %v713 = vpop.f32.mrb[0].mxu0
  %714 = vmatprep.mubr.bf16.mxu0 0
  %715 = vmatmul.mubr.bf16.gmra.mrb[0].mxu0 %v450
  %v716 = vpop.f32.mrb[0].mxu0
  %v717 = vadd.f32 %v184, %v716
  %v718 = vpop.f32.mrb[0].mxu0
  %v719 = vpop.f32.mrb[0].mxu0
  %v720 = vadd.f32 %v184, %v719
  %v721 = vpop.f32.mrb[0].mxu0
  %722 = vmatprep.mubr.bf16.mxu0 0
  %723 = vmatmul.mubr.bf16.gmra.mrb[0].mxu0 %v451
  %v724 = vpop.f32.mrb[0].mxu0
  %v725 = vadd.f32 %v184, %v724
  %v726 = vpop.f32.mrb[0].mxu0
  %v727 = vpop.f32.mrb[0].mxu0
  %v728 = vadd.f32 %v184, %v727
  %v729 = vpop.f32.mrb[0].mxu0
  %730 = vmatprep.mubr.bf16.mxu0 0
  %731 = vmatmul.mubr.bf16.gmra.mrb[0].mxu0 %v452
  %v732 = vpop.f32.mrb[0].mxu0
  %v733 = vadd.f32 %v184, %v732
  %v734 = vpop.f32.mrb[0].mxu0
  %v735 = vpop.f32.mrb[0].mxu0
  %v736 = vadd.f32 %v184, %v735
  %v737 = vpop.f32.mrb[0].mxu0
  %738 = vmatprep.mubr.bf16.mxu0 0
  %739 = vmatmul.mubr.bf16.gmra.mrb[0].mxu0 %v453
  %v740 = vpop.f32.mrb[0].mxu0
  %v741 = vadd.f32 %v184, %v740
  %v742 = vpop.f32.mrb[0].mxu0
  %v743 = vpop.f32.mrb[0].mxu0
  %v744 = vadd.f32 %v184, %v743
  %v745 = vpop.f32.mrb[0].mxu0
  %746 = vmatprep.mubr.bf16.mxu0 0
  %747 = vmatmul.mubr.bf16.gmra.mrb[0].mxu0 %v454
  %v748 = vpop.f32.mrb[0].mxu0
  %v749 = vadd.f32 %v184, %v748
  %v750 = vpop.f32.mrb[0].mxu0
  %v751 = vpop.f32.mrb[0].mxu0
  %v752 = vadd.f32 %v184, %v751
  %v753 = vpop.f32.mrb[0].mxu0
  %754 = vmatprep.mubr.bf16.mxu0 0
  %755 = vmatmul.mubr.bf16.gmra.mrb[0].mxu0 %v455
  %v756 = vpop.f32.mrb[0].mxu0
  %v757 = vadd.f32 %v184, %v756
  %v758 = vpop.f32.mrb[0].mxu0
  %v759 = vpop.f32.mrb[0].mxu0
  %v760 = vadd.f32 %v184, %v759
  %v761 = vpop.f32.mrb[0].mxu0
  %762 = vmatprep.mubr.bf16.mxu0 0
  %763 = vmatmul.mubr.bf16.gmra.mrb[0].mxu0 %v456
  %v764 = vpop.f32.mrb[0].mxu0
  %v765 = vadd.f32 %v184, %v764
  %v766 = vpop.f32.mrb[0].mxu0
  %v767 = vpop.f32.mrb[0].mxu0
  %v768 = vadd.f32 %v184, %v767
  %v769 = vpop.f32.mrb[0].mxu0
  %770 = vmatprep.mubr.bf16.mxu0 0
  %771 = vmatmul.mubr.bf16.gmra.mrb[0].mxu0 %v457
  %v772 = vpop.f32.mrb[0].mxu0
  %v773 = vadd.f32 %v184, %v772
  %v774 = vpop.f32.mrb[0].mxu0
  %v775 = vpop.f32.mrb[0].mxu0
  %v776 = vadd.f32 %v184, %v775
  %v777 = vpop.f32.mrb[0].mxu0
  %778 = vmatprep.mubr.bf16.mxu0 0
  %779 = vmatmul.mubr.bf16.gmra.mrb[0].mxu0 %v458
  %v780 = vpop.f32.mrb[0].mxu0
  %v781 = vadd.f32 %v184, %v780
  %v782 = vpop.f32.mrb[0].mxu0
  %v783 = vpop.f32.mrb[0].mxu0
  %v784 = vadd.f32 %v184, %v783
  %v785 = vpop.f32.mrb[0].mxu0
  %786 = vmatprep.mubr.bf16.mxu0 0
  %787 = vmatmul.mubr.bf16.gmra.mrb[0].mxu0 %v459
  %v788 = vpop.f32.mrb[0].mxu0
  %v789 = vadd.f32 %v184, %v788
  %v790 = vpop.f32.mrb[0].mxu0
  %v791 = vpop.f32.mrb[0].mxu0
  %v792 = vadd.f32 %v184, %v791
  %v793 = vpop.f32.mrb[0].mxu0
  %794 = vmatprep.mubr.bf16.mxu0 0
  %795 = vmatmul.mubr.bf16.gmra.mrb[0].mxu0 %v460
  %v796 = vpop.f32.mrb[0].mxu0
  %v797 = vadd.f32 %v184, %v796
  %v798 = vpop.f32.mrb[0].mxu0
  %v799 = vpop.f32.mrb[0].mxu0
  %v800 = vadd.f32 %v184, %v799
  %v801 = vpop.f32.mrb[0].mxu0
  %802 = vmatprep.mubr.bf16.mxu0 0
  %803 = vmatmul.mubr.bf16.gmra.mrb[0].mxu0 %v461
  %v804 = vpop.f32.mrb[0].mxu0
  %v805 = vadd.f32 %v184, %v804
  %v806 = vpop.f32.mrb[0].mxu0
  %v807 = vpop.f32.mrb[0].mxu0
  %v808 = vadd.f32 %v184, %v807
  %v809 = vpop.f32.mrb[0].mxu0
  %810 = vmatprep.mubr.bf16.mxu0 0
  %811 = vmatmul.mubr.bf16.gmra.mrb[0].mxu0 %v462
  %v812 = vpop.f32.mrb[0].mxu0
  %v813 = vadd.f32 %v184, %v812
  %v814 = vpop.f32.mrb[0].mxu0
  %v815 = vpop.f32.mrb[0].mxu0
  %v816 = vadd.f32 %v184, %v815
  %v817 = vpop.f32.mrb[0].mxu0
  %818 = vmatprep.mubr.bf16.mxu0 0
  %819 = vmatmul.mubr.bf16.gmra.mrb[0].mxu0 %v463
  %v820 = vpop.f32.mrb[0].mxu0
  %v821 = vadd.f32 %v184, %v820
  %v822 = vpop.f32.mrb[0].mxu0
  %v823 = vpop.f32.mrb[0].mxu0
  %v824 = vadd.f32 %v184, %v823
  %v825 = vpop.f32.mrb[0].mxu0
  %826 = vmatprep.mubr.bf16.mxu0 0
  %827 = vmatmul.mubr.bf16.gmra.mrb[0].mxu0 %v464
  %v828 = vpop.f32.mrb[0].mxu0
  %v829 = vadd.f32 %v184, %v828
  %v830 = vpop.f32.mrb[0].mxu0
  %v831 = vpop.f32.mrb[0].mxu0
  %v832 = vadd.f32 %v184, %v831
  %v833 = vpop.f32.mrb[0].mxu0
  %834 = vmatprep.mubr.bf16.mxu0 0
  %835 = vmatmul.mubr.bf16.gmra.mrb[0].mxu0 %v465
  %v836 = vpop.f32.mrb[0].mxu0
  %v837 = vadd.f32 %v184, %v836
  %v838 = vpop.f32.mrb[0].mxu0
  %v839 = vpop.f32.mrb[0].mxu0
  %v840 = vadd.f32 %v184, %v839
  %v841 = vpop.f32.mrb[0].mxu0
  %842 = vmatprep.mubr.bf16.mxu0 0
  %843 = vmatmul.mubr.bf16.gmra.mrb[0].mxu0 %v466
  %v844 = vpop.f32.mrb[0].mxu0
  %v845 = vadd.f32 %v184, %v844
  %v846 = vpop.f32.mrb[0].mxu0
  %v847 = vpop.f32.mrb[0].mxu0
  %v848 = vadd.f32 %v184, %v847
  %v849 = vpop.f32.mrb[0].mxu0
  %850 = vmatprep.mubr.bf16.mxu0 0
  %851 = vmatmul.mubr.bf16.gmra.mrb[0].mxu0 %v467
  %v852 = vpop.f32.mrb[0].mxu0
  %v853 = vadd.f32 %v184, %v852
  %v854 = vpop.f32.mrb[0].mxu0
  %v855 = vpop.f32.mrb[0].mxu0
  %v856 = vadd.f32 %v184, %v855
  %v857 = vpop.f32.mrb[0].mxu0
  %858 = vmatprep.mubr.bf16.mxu0 0
  %859 = vmatmul.mubr.bf16.gmra.mrb[0].mxu0 %v468
  %v860 = vpop.f32.mrb[0].mxu0
  %v861 = vadd.f32 %v184, %v860
  %v862 = vpop.f32.mrb[0].mxu0
  %v863 = vpop.f32.mrb[0].mxu0
  %v864 = vadd.f32 %v184, %v863
  %v865 = vpop.f32.mrb[0].mxu0
  %866 = vmatprep.mubr.bf16.mxu0 0
  %867 = vmatmul.mubr.bf16.gmra.mrb[0].mxu0 %v469
  %v868 = vpop.f32.mrb[0].mxu0
  %v869 = vadd.f32 %v184, %v868
  %v870 = vpop.f32.mrb[0].mxu0
  %v871 = vpop.f32.mrb[0].mxu0
  %v872 = vadd.f32 %v184, %v871
  %v873 = vpop.f32.mrb[0].mxu0
  %874 = vmatprep.mubr.bf16.mxu0 0
  %875 = vmatmul.mubr.bf16.gmra.mrb[0].mxu0 %v470
  %v876 = vpop.f32.mrb[0].mxu0
  %v877 = vadd.f32 %v184, %v876
  %v878 = vpop.f32.mrb[0].mxu0
  %v879 = vpop.f32.mrb[0].mxu0
  %v880 = vadd.f32 %v184, %v879
  %v881 = vpop.f32.mrb[0].mxu0
  %882 = vmatprep.mubr.bf16.mxu0 0
  %883 = vmatmul.mubr.bf16.gmra.mrb[0].mxu0 %v471
  %v884 = vpop.f32.mrb[0].mxu0
  %v885 = vadd.f32 %v184, %v884
  %v886 = vpop.f32.mrb[0].mxu0
  %v887 = vpop.f32.mrb[0].mxu0
  %v888 = vadd.f32 %v184, %v887
  %v889 = vpop.f32.mrb[0].mxu0
  %890 = vmatprep.mubr.bf16.mxu0 0
  %891 = vmatmul.mubr.bf16.gmra.mrb[0].mxu0 %v472
  %v892 = vpop.f32.mrb[0].mxu0
  %v893 = vadd.f32 %v184, %v892
  %v894 = vpop.f32.mrb[0].mxu0
  %v895 = vpop.f32.mrb[0].mxu0
  %v896 = vadd.f32 %v184, %v895
  %v897 = vpop.f32.mrb[0].mxu0
  %898 = vmatprep.mubr.bf16.mxu0 0
  %899 = vmatmul.mubr.bf16.gmra.mrb[0].mxu0 %v473
  %v900 = vpop.f32.mrb[0].mxu0
  %v901 = vadd.f32 %v184, %v900
  %v902 = vpop.f32.mrb[0].mxu0
  %v903 = vpop.f32.mrb[0].mxu0
  %v904 = vadd.f32 %v184, %v903
  %v905 = vpop.f32.mrb[0].mxu0
  %906 = vmatprep.mubr.bf16.mxu0 0
  %907 = vmatmul.mubr.bf16.gmra.mrb[0].mxu0 %v474
  %v908 = vpop.f32.mrb[0].mxu0
  %v909 = vadd.f32 %v184, %v908
  %v910 = vpop.f32.mrb[0].mxu0
  %v911 = vpop.f32.mrb[0].mxu0
  %v912 = vadd.f32 %v184, %v911
  %v913 = vpop.f32.mrb[0].mxu0
  %914 = vmatprep.mubr.bf16.mxu0 0
  %915 = vmatmul.mubr.bf16.gmra.mrb[0].mxu0 %v475
  %v916 = vpop.f32.mrb[0].mxu0
  %v917 = vadd.f32 %v184, %v916
  %v918 = vpop.f32.mrb[0].mxu0
  %v919 = vpop.f32.mrb[0].mxu0
  %v920 = vadd.f32 %v184, %v919
  %v921 = vpop.f32.mrb[0].mxu0
  %922 = vmatprep.mubr.bf16.mxu0 0
  %923 = vmatmul.mubr.bf16.gmra.mrb[0].mxu0 %v476
  %v924 = vpop.f32.mrb[0].mxu0
  %v925 = vadd.f32 %v184, %v924
  %v926 = vpop.f32.mrb[0].mxu0
  %v927 = vpop.f32.mrb[0].mxu0
  %v928 = vadd.f32 %v184, %v927
  %v929 = vpop.f32.mrb[0].mxu0
  %930 = vmatprep.mubr.bf16.mxu0 0
  %931 = vmatmul.mubr.bf16.gmra.mrb[0].mxu0 %v477
  %v932 = vpop.f32.mrb[0].mxu0
  %v933 = vadd.f32 %v184, %v932
  %v934 = vpop.f32.mrb[0].mxu0
  %v935 = vpop.f32.mrb[0].mxu0
  %v936 = vadd.f32 %v184, %v935
  %v937 = vpop.f32.mrb[0].mxu0
  %938 = vmatprep.mubr.bf16.mxu0 0
  %939 = vmatmul.mubr.bf16.gmra.mrb[0].mxu0 %v478
  %v940 = vpop.f32.mrb[0].mxu0
  %v941 = vadd.f32 %v184, %v940
  %v942 = vpop.f32.mrb[0].mxu0
  %v943 = vpop.f32.mrb[0].mxu0
  %v944 = vadd.f32 %v184, %v943
  %v945 = vpop.f32.mrb[0].mxu0
  %946 = vmatprep.mubr.bf16.mxu0 0
  %947 = vmatmul.mubr.bf16.gmra.mrb[0].mxu0 %v479
  %v948 = vpop.f32.mrb[0].mxu0
  %v949 = vadd.f32 %v184, %v948
  %v950 = vpop.f32.mrb[0].mxu0
  %v951 = vpop.f32.mrb[0].mxu0
  %v952 = vadd.f32 %v184, %v951
  %v953 = vpop.f32.mrb[0].mxu0
  %954 = vmatprep.mubr.bf16.mxu0 0
  %955 = vmatmul.mubr.bf16.gmra.mrb[0].mxu0 %v480
  %v956 = vpop.f32.mrb[0].mxu0
  %v957 = vadd.f32 %v184, %v956
  %v958 = vpop.f32.mrb[0].mxu0
  %v959 = vpop.f32.mrb[0].mxu0
  %v960 = vadd.f32 %v184, %v959
  %v961 = vpop.f32.mrb[0].mxu0
  %962 = vmatprep.mubr.bf16.mxu0 0
  %963 = vmatmul.mubr.bf16.gmra.mrb[0].mxu0 %v481
  %v964 = vpop.f32.mrb[0].mxu0
  %v965 = vadd.f32 %v184, %v964
  %v966 = vpop.f32.mrb[0].mxu0
  %v967 = vpop.f32.mrb[0].mxu0
  %v968 = vadd.f32 %v184, %v967
  %v969 = vpop.f32.mrb[0].mxu0
  %970 = vmatprep.mubr.bf16.mxu0 0
  %971 = vmatmul.mubr.bf16.gmra.mrb[0].mxu0 %v482
  %v972 = vpop.f32.mrb[0].mxu0
  %v973 = vadd.f32 %v184, %v972
  %v974 = vpop.f32.mrb[0].mxu0
  %v975 = vpop.f32.mrb[0].mxu0
  %v976 = vadd.f32 %v184, %v975
  %v977 = vpop.f32.mrb[0].mxu0
  %978 = vmatprep.mubr.bf16.mxu0 0
  %979 = vmatmul.mubr.bf16.gmra.mrb[0].mxu0 %v483
  %v980 = vpop.f32.mrb[0].mxu0
  %v981 = vadd.f32 %v184, %v980
  %v982 = vpop.f32.mrb[0].mxu0
  %v983 = vpop.f32.mrb[0].mxu0
  %v984 = vadd.f32 %v184, %v983
  %v985 = vpop.f32.mrb[0].mxu0
  %986 = vmatprep.mubr.bf16.mxu0 0
  %987 = vmatmul.mubr.bf16.gmra.mrb[0].mxu0 %v484
  %v988 = vpop.f32.mrb[0].mxu0
  %v989 = vadd.f32 %v184, %v988
  %v990 = vpop.f32.mrb[0].mxu0
  %v991 = vpop.f32.mrb[0].mxu0
  %v992 = vadd.f32 %v184, %v991
  %v993 = vpop.f32.mrb[0].mxu0
  %994 = vmatprep.mubr.bf16.mxu0 0
  %995 = vmatmul.mubr.bf16.gmra.mrb[0].mxu0 %v485
  %v996 = vpop.f32.mrb[0].mxu0
  %v997 = vadd.f32 %v184, %v996
  %v998 = vpop.f32.mrb[0].mxu0
  %v999 = vpop.f32.mrb[0].mxu0
  %v1000 = vadd.f32 %v184, %v999
  %v1001 = vpop.f32.mrb[0].mxu0
  %1002 = vmatprep.mubr.bf16.mxu0 0
  %1003 = vmatmul.mubr.bf16.gmra.mrb[0].mxu0 %v486
  %v1004 = vpop.f32.mrb[0].mxu0
  %v1005 = vadd.f32 %v184, %v1004
  %v1006 = vpop.f32.mrb[0].mxu0
  %v1007 = vpop.f32.mrb[0].mxu0
  %v1008 = vadd.f32 %v184, %v1007
  %v1009 = vpop.f32.mrb[0].mxu0
  %1010 = vmatprep.mubr.bf16.mxu0 0
  %1011 = vmatmul.mubr.bf16.gmra.mrb[0].mxu0 %v487
  %v1012 = vpop.f32.mrb[0].mxu0
  %v1013 = vadd.f32 %v184, %v1012
  %v1014 = vpop.f32.mrb[0].mxu0
  %v1015 = vpop.f32.mrb[0].mxu0
  %v1016 = vadd.f32 %v184, %v1015
  %v1017 = vpop.f32.mrb[0].mxu0
  %1018 = vmatprep.mubr.bf16.mxu0 0
  %1019 = vmatmul.mubr.bf16.gmra.mrb[0].mxu0 %v488
  %v1020 = vpop.f32.mrb[0].mxu0
  %v1021 = vadd.f32 %v184, %v1020
  %v1022 = vpop.f32.mrb[0].mxu0
  %v1023 = vpop.f32.mrb[0].mxu0
  %v1024 = vadd.f32 %v184, %v1023
  %v1025 = vpop.f32.mrb[0].mxu0
  %1026 = vmatprep.mubr.bf16.mxu0 0
  %1027 = vmatmul.mubr.bf16.gmra.mrb[0].mxu0 %v489
  %v1028 = vpop.f32.mrb[0].mxu0
  %v1029 = vadd.f32 %v184, %v1028
  %v1030 = vpop.f32.mrb[0].mxu0
  %v1031 = vpop.f32.mrb[0].mxu0
  %v1032 = vadd.f32 %v184, %v1031
  %v1033 = vpop.f32.mrb[0].mxu0
  %1034 = vmatprep.mubr.bf16.mxu0 0
  %1035 = vmatmul.mubr.bf16.gmra.mrb[0].mxu0 %v490
  %v1036 = vpop.f32.mrb[0].mxu0
  %v1037 = vadd.f32 %v184, %v1036
  %v1038 = vpop.f32.mrb[0].mxu0
  %v1039 = vpop.f32.mrb[0].mxu0
  %v1040 = vadd.f32 %v184, %v1039
  %v1041 = vpop.f32.mrb[0].mxu0
  %1042 = vmatprep.mubr.bf16.mxu0 0
  %1043 = vmatmul.mubr.bf16.gmra.mrb[0].mxu0 %v491
  %v1044 = vpop.f32.mrb[0].mxu0
  %v1045 = vadd.f32 %v184, %v1044
  %v1046 = vpop.f32.mrb[0].mxu0
  %v1047 = vpop.f32.mrb[0].mxu0
  %v1048 = vadd.f32 %v184, %v1047
  %v1049 = vpop.f32.mrb[0].mxu0
  %1050 = vmatprep.mubr.bf16.mxu0 0
  %1051 = vmatmul.mubr.bf16.gmra.mrb[0].mxu0 %v492
  %v1052 = vpop.f32.mrb[0].mxu0
  %v1053 = vadd.f32 %v184, %v1052
  %v1054 = vpop.f32.mrb[0].mxu0
  %v1055 = vpop.f32.mrb[0].mxu0
  %v1056 = vadd.f32 %v184, %v1055
  %v1057 = vpop.f32.mrb[0].mxu0
  %1058 = vmatprep.mubr.bf16.mxu0 0
  %1059 = vmatmul.mubr.bf16.gmra.mrb[0].mxu0 %v493
  %v1060 = vpop.f32.mrb[0].mxu0
  %v1061 = vadd.f32 %v184, %v1060
  %v1062 = vpop.f32.mrb[0].mxu0
  %v1063 = vpop.f32.mrb[0].mxu0
  %v1064 = vadd.f32 %v184, %v1063
  %v1065 = vpop.f32.mrb[0].mxu0
  %1066 = vmatprep.mubr.bf16.mxu0 0
  %1067 = vmatmul.mubr.bf16.gmra.mrb[0].mxu0 %v494
  %v1068 = vpop.f32.mrb[0].mxu0
  %v1069 = vadd.f32 %v184, %v1068
  %v1070 = vpop.f32.mrb[0].mxu0
  %v1071 = vpop.f32.mrb[0].mxu0
  %v1072 = vadd.f32 %v184, %v1071
  %v1073 = vpop.f32.mrb[0].mxu0
  %1074 = vmatprep.mubr.bf16.mxu0 0
  %1075 = vmatmul.mubr.bf16.gmra.mrb[0].mxu0 %v495
  %v1076 = vpop.f32.mrb[0].mxu0
  %v1077 = vadd.f32 %v184, %v1076
  %v1078 = vpop.f32.mrb[0].mxu0
  %v1079 = vpop.f32.mrb[0].mxu0
  %v1080 = vadd.f32 %v184, %v1079
  %v1081 = vpop.f32.mrb[0].mxu0
  %1082 = vmatprep.mubr.bf16.mxu0 0
  %1083 = vmatmul.mubr.bf16.gmra.mrb[0].mxu0 %v496
  %v1084 = vpop.f32.mrb[0].mxu0
  %v1085 = vadd.f32 %v184, %v1084
  %v1086 = vpop.f32.mrb[0].mxu0
  %v1087 = vpop.f32.mrb[0].mxu0
  %v1088 = vadd.f32 %v184, %v1087
  %v1089 = vpop.f32.mrb[0].mxu0
  %1090 = vmatprep.mubr.bf16.mxu0 0
  %1091 = vmatmul.mubr.bf16.gmra.mrb[0].mxu0 %v497
  %v1092 = vpop.f32.mrb[0].mxu0
  %v1093 = vadd.f32 %v184, %v1092
  %v1094 = vpop.f32.mrb[0].mxu0
  %v1095 = vpop.f32.mrb[0].mxu0
  %v1096 = vadd.f32 %v184, %v1095
  %v1097 = vpop.f32.mrb[0].mxu0
  %1098 = vmatprep.mubr.bf16.mxu0 0
  %1099 = vmatmul.mubr.bf16.gmra.mrb[0].mxu0 %v498
  %v1100 = vpop.f32.mrb[0].mxu0
  %v1101 = vadd.f32 %v184, %v1100
  %v1102 = vpop.f32.mrb[0].mxu0
  %v1103 = vpop.f32.mrb[0].mxu0
  %v1104 = vadd.f32 %v184, %v1103
  %v1105 = vpop.f32.mrb[0].mxu0
  %1106 = vmatprep.mubr.bf16.mxu0 0
  %1107 = vmatmul.mubr.bf16.gmra.mrb[0].mxu0 %v499
  %v1108 = vpop.f32.mrb[0].mxu0
  %v1109 = vadd.f32 %v184, %v1108
  %v1110 = vpop.f32.mrb[0].mxu0
  %v1111 = vpop.f32.mrb[0].mxu0
  %v1112 = vadd.f32 %v184, %v1111
  %v1113 = vpop.f32.mrb[0].mxu0
  %1114 = vmatprep.mubr.bf16.mxu0 0
  %1115 = vmatmul.mubr.bf16.gmra.mrb[0].mxu0 %v500
  %v1116 = vpop.f32.mrb[0].mxu0
  %v1117 = vadd.f32 %v184, %v1116
  %v1118 = vpop.f32.mrb[0].mxu0
  %v1119 = vpop.f32.mrb[0].mxu0
  %v1120 = vadd.f32 %v184, %v1119
  %v1121 = vpop.f32.mrb[0].mxu0
  %1122 = vmatprep.mubr.bf16.mxu0 0
  %1123 = vmatmul.mubr.bf16.gmra.mrb[0].mxu0 %v501
  %v1124 = vpop.f32.mrb[0].mxu0
  %v1125 = vadd.f32 %v184, %v1124
  %v1126 = vpop.f32.mrb[0].mxu0
  %v1127 = vpop.f32.mrb[0].mxu0
  %v1128 = vadd.f32 %v184, %v1127
  %v1129 = vpop.f32.mrb[0].mxu0
  %1130 = vmatprep.mubr.bf16.mxu0 0
  %1131 = vmatmul.mubr.bf16.gmra.mrb[0].mxu0 %v502
  %v1132 = vpop.f32.mrb[0].mxu0
  %v1133 = vadd.f32 %v184, %v1132
  %v1134 = vpop.f32.mrb[0].mxu0
  %v1135 = vpop.f32.mrb[0].mxu0
  %v1136 = vadd.f32 %v184, %v1135
  %v1137 = vpop.f32.mrb[0].mxu0
  %1138 = vmatprep.mubr.bf16.mxu0 0
  %1139 = vmatmul.mubr.bf16.gmra.mrb[0].mxu0 %v503
  %v1140 = vpop.f32.mrb[0].mxu0
  %v1141 = vadd.f32 %v184, %v1140
  %v1142 = vpop.f32.mrb[0].mxu0
  %v1143 = vpop.f32.mrb[0].mxu0
  %v1144 = vadd.f32 %v184, %v1143
  %v1145 = vpop.f32.mrb[0].mxu0
  %1146 = vmatprep.mubr.bf16.mxu0 0
  %1147 = vmatmul.mubr.bf16.gmra.mrb[0].mxu0 %v504
  %v1148 = vpop.f32.mrb[0].mxu0
  %v1149 = vadd.f32 %v184, %v1148
  %v1150 = vpop.f32.mrb[0].mxu0
  %v1151 = vpop.f32.mrb[0].mxu0
  %v1152 = vadd.f32 %v184, %v1151
  %v1153 = vpop.f32.mrb[0].mxu0
  %1154 = vmatprep.mubr.bf16.mxu0 0
  %1155 = vmatmul.mubr.bf16.gmra.mrb[0].mxu0 %v505
  %v1156 = vpop.f32.mrb[0].mxu0
  %v1157 = vadd.f32 %v184, %v1156
  %v1158 = vpop.f32.mrb[0].mxu0
  %v1159 = vpop.f32.mrb[0].mxu0
  %v1160 = vadd.f32 %v184, %v1159
  %v1161 = vpop.f32.mrb[0].mxu0
  %1162 = vdwg.mxu0
  %v1163 = vmax.f32 %v653, 0.0
  %v1164 = vmax.f32 %v656, 0.0
  %v1165 = vmax.f32 %v661, 0.0
  %v1166 = vmax.f32 %v664, 0.0
  %v1167 = vmax.f32 %v669, 0.0
  %v1168 = vmax.f32 %v672, 0.0
  %v1169 = vmax.f32 %v677, 0.0
  %v1170 = vmax.f32 %v680, 0.0
  %v1171 = vmax.f32 %v685, 0.0
  %v1172 = vmax.f32 %v688, 0.0
  %v1173 = vmax.f32 %v693, 0.0
  %v1174 = vmax.f32 %v696, 0.0
  %v1175 = vmax.f32 %v701, 0.0
  %v1176 = vmax.f32 %v704, 0.0
  %v1177 = vmax.f32 %v709, 0.0
  %v1178 = vmax.f32 %v712, 0.0
  %v1179 = vmax.f32 %v717, 0.0
  %v1180 = vmax.f32 %v720, 0.0
  %v1181 = vmax.f32 %v725, 0.0
  %v1182 = vmax.f32 %v728, 0.0
  %v1183 = vmax.f32 %v733, 0.0
  %v1184 = vmax.f32 %v736, 0.0
  %v1185 = vmax.f32 %v741, 0.0
  %v1186 = vmax.f32 %v744, 0.0
  %v1187 = vmax.f32 %v749, 0.0
  %v1188 = vmax.f32 %v752, 0.0
  %v1189 = vmax.f32 %v757, 0.0
  %v1190 = vmax.f32 %v760, 0.0
  %v1191 = vmax.f32 %v765, 0.0
  %v1192 = vmax.f32 %v768, 0.0
  %v1193 = vmax.f32 %v773, 0.0
  %v1194 = vmax.f32 %v776, 0.0
  %v1195 = vmax.f32 %v781, 0.0
  %v1196 = vmax.f32 %v784, 0.0
  %v1197 = vmax.f32 %v789, 0.0
  %v1198 = vmax.f32 %v792, 0.0
  %v1199 = vmax.f32 %v797, 0.0
  %v1200 = vmax.f32 %v800, 0.0
  %v1201 = vmax.f32 %v805, 0.0
  %v1202 = vmax.f32 %v808, 0.0
  %v1203 = vmax.f32 %v813, 0.0
  %v1204 = vmax.f32 %v816, 0.0
  %v1205 = vmax.f32 %v821, 0.0
  %v1206 = vmax.f32 %v824, 0.0
  %v1207 = vmax.f32 %v829, 0.0
  %v1208 = vmax.f32 %v832, 0.0
  %v1209 = vmax.f32 %v837, 0.0
  %v1210 = vmax.f32 %v840, 0.0
  %v1211 = vmax.f32 %v845, 0.0
  %v1212 = vmax.f32 %v848, 0.0
  %v1213 = vmax.f32 %v853, 0.0
  %v1214 = vmax.f32 %v856, 0.0
  %v1215 = vmax.f32 %v861, 0.0
  %v1216 = vmax.f32 %v864, 0.0
  %v1217 = vmax.f32 %v869, 0.0
  %v1218 = vmax.f32 %v872, 0.0
  %v1219 = vmax.f32 %v877, 0.0
  %v1220 = vmax.f32 %v880, 0.0
  %v1221 = vmax.f32 %v885, 0.0
  %v1222 = vmax.f32 %v888, 0.0
  %v1223 = vmax.f32 %v893, 0.0
  %v1224 = vmax.f32 %v896, 0.0
  %v1225 = vmax.f32 %v901, 0.0
  %v1226 = vmax.f32 %v904, 0.0
  %v1227 = vmax.f32 %v909, 0.0
  %v1228 = vmax.f32 %v912, 0.0
  %v1229 = vmax.f32 %v917, 0.0
  %v1230 = vmax.f32 %v920, 0.0
  %v1231 = vmax.f32 %v925, 0.0
  %v1232 = vmax.f32 %v928, 0.0
  %v1233 = vmax.f32 %v933, 0.0
  %v1234 = vmax.f32 %v936, 0.0
  %v1235 = vmax.f32 %v941, 0.0
  %v1236 = vmax.f32 %v944, 0.0
  %v1237 = vmax.f32 %v949, 0.0
  %v1238 = vmax.f32 %v952, 0.0
  %v1239 = vmax.f32 %v957, 0.0
  %v1240 = vmax.f32 %v960, 0.0
  %v1241 = vmax.f32 %v965, 0.0
  %v1242 = vmax.f32 %v968, 0.0
  %v1243 = vmax.f32 %v973, 0.0
  %v1244 = vmax.f32 %v976, 0.0
  %v1245 = vmax.f32 %v981, 0.0
  %v1246 = vmax.f32 %v984, 0.0
  %v1247 = vmax.f32 %v989, 0.0
  %v1248 = vmax.f32 %v992, 0.0
  %v1249 = vmax.f32 %v997, 0.0
  %v1250 = vmax.f32 %v1000, 0.0
  %v1251 = vmax.f32 %v1005, 0.0
  %v1252 = vmax.f32 %v1008, 0.0
  %v1253 = vmax.f32 %v1013, 0.0
  %v1254 = vmax.f32 %v1016, 0.0
  %v1255 = vmax.f32 %v1021, 0.0
  %v1256 = vmax.f32 %v1024, 0.0
  %v1257 = vmax.f32 %v1029, 0.0
  %v1258 = vmax.f32 %v1032, 0.0
  %v1259 = vmax.f32 %v1037, 0.0
  %v1260 = vmax.f32 %v1040, 0.0
  %v1261 = vmax.f32 %v1045, 0.0
  %v1262 = vmax.f32 %v1048, 0.0
  %v1263 = vmax.f32 %v1053, 0.0
  %v1264 = vmax.f32 %v1056, 0.0
  %v1265 = vmax.f32 %v1061, 0.0
  %v1266 = vmax.f32 %v1064, 0.0
  %v1267 = vmax.f32 %v1069, 0.0
  %v1268 = vmax.f32 %v1072, 0.0
  %v1269 = vmax.f32 %v1077, 0.0
  %v1270 = vmax.f32 %v1080, 0.0
  %v1271 = vmax.f32 %v1085, 0.0
  %v1272 = vmax.f32 %v1088, 0.0
  %v1273 = vmax.f32 %v1093, 0.0
  %v1274 = vmax.f32 %v1096, 0.0
  %v1275 = vmax.f32 %v1101, 0.0
  %v1276 = vmax.f32 %v1104, 0.0
  %v1277 = vmax.f32 %v1109, 0.0
  %v1278 = vmax.f32 %v1112, 0.0
  %v1279 = vmax.f32 %v1117, 0.0
  %v1280 = vmax.f32 %v1120, 0.0
  %v1281 = vmax.f32 %v1125, 0.0
  %v1282 = vmax.f32 %v1128, 0.0
  %v1283 = vmax.f32 %v1133, 0.0
  %v1284 = vmax.f32 %v1136, 0.0
  %v1285 = vmax.f32 %v1141, 0.0
  %v1286 = vmax.f32 %v1144, 0.0
  %v1287 = vmax.f32 %v1149, 0.0
  %v1288 = vmax.f32 %v1152, 0.0
  %v1289 = vmax.f32 %v1157, 0.0
  %v1290 = vmax.f32 %v1160, 0.0
  %v1291 = vpack.c.bf16 %v1164, %v1163
  %v1292 = vpack.c.bf16 %v1166, %v1165
  %v1293 = vpack.c.bf16 %v1168, %v1167
  %v1294 = vpack.c.bf16 %v1170, %v1169
  %v1295 = vpack.c.bf16 %v1172, %v1171
  %v1296 = vpack.c.bf16 %v1174, %v1173
  %v1297 = vpack.c.bf16 %v1176, %v1175
  %v1298 = vpack.c.bf16 %v1178, %v1177
  %v1299 = vpack.c.bf16 %v1180, %v1179
  %v1300 = vpack.c.bf16 %v1182, %v1181
  %v1301 = vpack.c.bf16 %v1184, %v1183
  %v1302 = vpack.c.bf16 %v1186, %v1185
  %v1303 = vpack.c.bf16 %v1188, %v1187
  %v1304 = vpack.c.bf16 %v1190, %v1189
  %v1305 = vpack.c.bf16 %v1192, %v1191
  %v1306 = vpack.c.bf16 %v1194, %v1193
  %v1307 = vpack.c.bf16 %v1196, %v1195
  %v1308 = vpack.c.bf16 %v1198, %v1197
  %v1309 = vpack.c.bf16 %v1200, %v1199
  %v1310 = vpack.c.bf16 %v1202, %v1201
  %v1311 = vpack.c.bf16 %v1204, %v1203
  %v1312 = vpack.c.bf16 %v1206, %v1205
  %v1313 = vpack.c.bf16 %v1208, %v1207
  %v1314 = vpack.c.bf16 %v1210, %v1209
  %v1315 = vpack.c.bf16 %v1212, %v1211
  %v1316 = vpack.c.bf16 %v1214, %v1213
  %v1317 = vpack.c.bf16 %v1216, %v1215
  %v1318 = vpack.c.bf16 %v1218, %v1217
  %v1319 = vpack.c.bf16 %v1220, %v1219
  %v1320 = vpack.c.bf16 %v1222, %v1221
  %v1321 = vpack.c.bf16 %v1224, %v1223
  %v1322 = vpack.c.bf16 %v1226, %v1225
  %v1323 = vpack.c.bf16 %v1228, %v1227
  %v1324 = vpack.c.bf16 %v1230, %v1229
  %v1325 = vpack.c.bf16 %v1232, %v1231
  %v1326 = vpack.c.bf16 %v1234, %v1233
  %v1327 = vpack.c.bf16 %v1236, %v1235
  %v1328 = vpack.c.bf16 %v1238, %v1237
  %v1329 = vpack.c.bf16 %v1240, %v1239
  %v1330 = vpack.c.bf16 %v1242, %v1241
  %v1331 = vpack.c.bf16 %v1244, %v1243
  %v1332 = vpack.c.bf16 %v1246, %v1245
  %v1333 = vpack.c.bf16 %v1248, %v1247
  %v1334 = vpack.c.bf16 %v1250, %v1249
  %v1335 = vpack.c.bf16 %v1252, %v1251
  %v1336 = vpack.c.bf16 %v1254, %v1253
  %v1337 = vpack.c.bf16 %v1256, %v1255
  %v1338 = vpack.c.bf16 %v1258, %v1257
  %v1339 = vpack.c.bf16 %v1260, %v1259
  %v1340 = vpack.c.bf16 %v1262, %v1261
  %v1341 = vpack.c.bf16 %v1264, %v1263
  %v1342 = vpack.c.bf16 %v1266, %v1265
  %v1343 = vpack.c.bf16 %v1268, %v1267
  %v1344 = vpack.c.bf16 %v1270, %v1269
  %v1345 = vpack.c.bf16 %v1272, %v1271
  %v1346 = vpack.c.bf16 %v1274, %v1273
  %v1347 = vpack.c.bf16 %v1276, %v1275
  %v1348 = vpack.c.bf16 %v1278, %v1277
  %v1349 = vpack.c.bf16 %v1280, %v1279
  %v1350 = vpack.c.bf16 %v1282, %v1281
  %v1351 = vpack.c.bf16 %v1284, %v1283
  %v1352 = vpack.c.bf16 %v1286, %v1285
  %v1353 = vpack.c.bf16 %v1288, %v1287
  %v1354 = vpack.c.bf16 %v1290, %v1289
  %s1355 = scalar_lea.vmem [#allocation2], 360
  %1356 = vst [vmem:[%s1355] sm:$0xff] %v1300
  %1357 = vst [vmem:[%s1355 + $0x48] sm:$0xff] %v1302
  %1358 = vst [vmem:[%s1355 + $0x90] sm:$0xff] %v1304
  %1359 = vst [vmem:[%s1355 + $0x120] sm:$0xff] %v1316
  %1360 = vst [vmem:[%s1355 + $0x168] sm:$0xff] %v1318
  %1361 = vst [vmem:[%s1355 + $0x1b0] sm:$0xff] %v1320
  %1362 = vst [vmem:[%s1355 + $0x240] sm:$0xff] %v1332
  %1363 = vst [vmem:[%s1355 + $0x288] sm:$0xff] %v1334
  %1364 = vst [vmem:[%s1355 + $0x2d0] sm:$0xff] %v1336
  %1365 = vst [vmem:[#allocation2] sm:$0xff] 0
  %1366 = vst [vmem:[#allocation2 + $0x48] sm:$0xff] 0
  %1367 = vst [vmem:[#allocation2 + $0x90] sm:$0xff] 0
  %1368 = vst [vmem:[#allocation2 + $0xd8] sm:$0xff] 0
  %s1369 = scalar_lea.vmem [#allocation2], 288
  %1370 = vst [vmem:[%s1369] sm:$0xff] 0
  %1371 = vst [vmem:[%s1369 + $0x120] sm:$0xff] 0
  %1372 = vst [vmem:[%s1369 + $0x240] sm:$0xff] 0
  %1373 = vst [vmem:[%s1369 + $0x8] sm:$0xff] %v1299
  %1374 = vst [vmem:[%s1369 + $0x50] sm:$0xff] %v1301
  %1375 = vst [vmem:[%s1369 + $0x98] sm:$0xff] %v1303
  %1376 = vst [vmem:[%s1369 + $0xe0] sm:$0xff] %v1305
  %1377 = vst [vmem:[%s1369 + $0x128] sm:$0xff] %v1315
  %1378 = vst [vmem:[%s1369 + $0x170] sm:$0xff] %v1317
  %1379 = vst [vmem:[%s1369 + $0x1b8] sm:$0xff] %v1319
  %1380 = vst [vmem:[%s1369 + $0x200] sm:$0xff] %v1321
  %1381 = vst [vmem:[%s1369 + $0x248] sm:$0xff] %v1331
  %1382 = vst [vmem:[%s1369 + $0x290] sm:$0xff] %v1333
  %1383 = vst [vmem:[%s1369 + $0x2d8] sm:$0xff] %v1335
  %1384 = vst [vmem:[%s1369 + $0x320] sm:$0xff] %v1337
  %1385 = vst [vmem:[#allocation2 + $0x8] sm:$0xff] 0
  %1386 = vst [vmem:[#allocation2 + $0x50] sm:$0xff] 0
  %1387 = vst [vmem:[#allocation2 + $0x98] sm:$0xff] 0
  %1388 = vst [vmem:[#allocation2 + $0xe0] sm:$0xff] 0
  %1389 = vst [vmem:[%s1369 + $0x10] sm:$0xff] %v1300
  %1390 = vst [vmem:[%s1369 + $0x58] sm:$0xff] %v1302
  %1391 = vst [vmem:[%s1369 + $0xa0] sm:$0xff] %v1304
  %1392 = vst [vmem:[%s1369 + $0xe8] sm:$0xff] %v1306
  %1393 = vst [vmem:[%s1369 + $0x130] sm:$0xff] %v1316
  %1394 = vst [vmem:[%s1369 + $0x178] sm:$0xff] %v1318
  %1395 = vst [vmem:[%s1369 + $0x1c0] sm:$0xff] %v1320
  %1396 = vst [vmem:[%s1369 + $0x208] sm:$0xff] %v1322
  %1397 = vst [vmem:[%s1369 + $0x250] sm:$0xff] %v1332
  %1398 = vst [vmem:[%s1369 + $0x298] sm:$0xff] %v1334
  %1399 = vst [vmem:[%s1369 + $0x2e0] sm:$0xff] %v1336
  %1400 = vst [vmem:[%s1369 + $0x328] sm:$0xff] %v1338
  %1401 = vst [vmem:[#allocation2 + $0x10] sm:$0xff] 0
  %1402 = vst [vmem:[#allocation2 + $0x58] sm:$0xff] 0
  %1403 = vst [vmem:[#allocation2 + $0xa0] sm:$0xff] 0
  %1404 = vst [vmem:[#allocation2 + $0xe8] sm:$0xff] 0
  %s1405 = scalar_lea.vmem [#allocation2], 72
  %1406 = vst [vmem:[%s1405 + $0x18] sm:$0xff] %v1292
  %1407 = vst [vmem:[%s1405 + $0x60] sm:$0xff] %v1294
  %1408 = vst [vmem:[%s1405 + $0xa8] sm:$0xff] %v1296
  %1409 = vst [vmem:[%s1405 + $0x138] sm:$0xff] %v1308
  %1410 = vst [vmem:[%s1405 + $0x180] sm:$0xff] %v1310
  %1411 = vst [vmem:[%s1405 + $0x1c8] sm:$0xff] %v1312
  %1412 = vst [vmem:[%s1405 + $0x258] sm:$0xff] %v1324
  %1413 = vst [vmem:[%s1405 + $0x2a0] sm:$0xff] %v1326
  %1414 = vst [vmem:[%s1405 + $0x2e8] sm:$0xff] %v1328
  %1415 = vst [vmem:[%s1405 + $0x378] sm:$0xff] %v1340
  %1416 = vst [vmem:[%s1405 + $0x3c0] sm:$0xff] %v1342
  %1417 = vst [vmem:[%s1405 + $0x408] sm:$0xff] %v1344
  %1418 = vst [vmem:[#allocation2 + $0x18] sm:$0xff] 0
  %1419 = vst [vmem:[#allocation2 + $0x138] sm:$0xff] 0
  %1420 = vst [vmem:[#allocation2 + $0x258] sm:$0xff] 0
  %1421 = vst [vmem:[#allocation2 + $0x378] sm:$0xff] 0
  %1422 = vst [vmem:[#allocation2 + $0x20] sm:$0xff] %v1291
  %1423 = vst [vmem:[#allocation2 + $0x68] sm:$0xff] %v1293
  %1424 = vst [vmem:[#allocation2 + $0xb0] sm:$0xff] %v1295
  %1425 = vst [vmem:[#allocation2 + $0xf8] sm:$0xff] %v1297
  %1426 = vst [vmem:[#allocation2 + $0x140] sm:$0xff] %v1307
  %1427 = vst [vmem:[#allocation2 + $0x188] sm:$0xff] %v1309
  %1428 = vst [vmem:[#allocation2 + $0x1d0] sm:$0xff] %v1311
  %1429 = vst [vmem:[#allocation2 + $0x218] sm:$0xff] %v1313
  %1430 = vst [vmem:[#allocation2 + $0x260] sm:$0xff] %v1323
  %1431 = vst [vmem:[#allocation2 + $0x2a8] sm:$0xff] %v1325
  %1432 = vst [vmem:[#allocation2 + $0x2f0] sm:$0xff] %v1327
  %1433 = vst [vmem:[#allocation2 + $0x338] sm:$0xff] %v1329
  %1434 = vst [vmem:[#allocation2 + $0x380] sm:$0xff] %v1339
  %1435 = vst [vmem:[#allocation2 + $0x3c8] sm:$0xff] %v1341
  %1436 = vst [vmem:[#allocation2 + $0x410] sm:$0xff] %v1343
  %1437 = vst [vmem:[#allocation2 + $0x458] sm:$0xff] %v1345
  %1438 = vst [vmem:[#allocation2 + $0x28] sm:$0xff] %v1292
  %1439 = vst [vmem:[#allocation2 + $0x70] sm:$0xff] %v1294
  %1440 = vst [vmem:[#allocation2 + $0xb8] sm:$0xff] %v1296
  %1441 = vst [vmem:[#allocation2 + $0x100] sm:$0xff] %v1298
  %1442 = vst [vmem:[#allocation2 + $0x148] sm:$0xff] %v1308
  %1443 = vst [vmem:[#allocation2 + $0x190] sm:$0xff] %v1310
  %1444 = vst [vmem:[#allocation2 + $0x1d8] sm:$0xff] %v1312
  %1445 = vst [vmem:[#allocation2 + $0x220] sm:$0xff] %v1314
  %1446 = vst [vmem:[#allocation2 + $0x268] sm:$0xff] %v1324
  %1447 = vst [vmem:[#allocation2 + $0x2b0] sm:$0xff] %v1326
  %1448 = vst [vmem:[#allocation2 + $0x2f8] sm:$0xff] %v1328
  %1449 = vst [vmem:[#allocation2 + $0x340] sm:$0xff] %v1330
  %1450 = vst [vmem:[#allocation2 + $0x388] sm:$0xff] %v1340
  %1451 = vst [vmem:[#allocation2 + $0x3d0] sm:$0xff] %v1342
  %1452 = vst [vmem:[#allocation2 + $0x418] sm:$0xff] %v1344
  %1453 = vst [vmem:[#allocation2 + $0x460] sm:$0xff] %v1346
  %1454 = vst [vmem:[%s1405 + $0x30] sm:$0xff] %v1300
  %1455 = vst [vmem:[%s1405 + $0x78] sm:$0xff] %v1302
  %1456 = vst [vmem:[%s1405 + $0xc0] sm:$0xff] %v1304
  %1457 = vst [vmem:[%s1405 + $0x150] sm:$0xff] %v1316
  %1458 = vst [vmem:[%s1405 + $0x198] sm:$0xff] %v1318
  %1459 = vst [vmem:[%s1405 + $0x1e0] sm:$0xff] %v1320
  %1460 = vst [vmem:[%s1405 + $0x270] sm:$0xff] %v1332
  %1461 = vst [vmem:[%s1405 + $0x2b8] sm:$0xff] %v1334
  %1462 = vst [vmem:[%s1405 + $0x300] sm:$0xff] %v1336
  %1463 = vst [vmem:[%s1405 + $0x390] sm:$0xff] %v1348
  %1464 = vst [vmem:[%s1405 + $0x3d8] sm:$0xff] %v1350
  %1465 = vst [vmem:[%s1405 + $0x420] sm:$0xff] %v1352
  %1466 = vst [vmem:[#allocation2 + $0x30] sm:$0xff] 0
  %1467 = vst [vmem:[#allocation2 + $0x150] sm:$0xff] 0
  %1468 = vst [vmem:[#allocation2 + $0x270] sm:$0xff] 0
  %1469 = vst [vmem:[#allocation2 + $0x390] sm:$0xff] 0
  %1470 = vst [vmem:[#allocation2 + $0x38] sm:$0xff] %v1299
  %1471 = vst [vmem:[#allocation2 + $0x80] sm:$0xff] %v1301
  %1472 = vst [vmem:[#allocation2 + $0xc8] sm:$0xff] %v1303
  %1473 = vst [vmem:[#allocation2 + $0x110] sm:$0xff] %v1305
  %1474 = vst [vmem:[#allocation2 + $0x158] sm:$0xff] %v1315
  %1475 = vst [vmem:[#allocation2 + $0x1a0] sm:$0xff] %v1317
  %1476 = vst [vmem:[#allocation2 + $0x1e8] sm:$0xff] %v1319
  %1477 = vst [vmem:[#allocation2 + $0x230] sm:$0xff] %v1321
  %1478 = vst [vmem:[#allocation2 + $0x278] sm:$0xff] %v1331
  %1479 = vst [vmem:[#allocation2 + $0x2c0] sm:$0xff] %v1333
  %1480 = vst [vmem:[#allocation2 + $0x308] sm:$0xff] %v1335
  %1481 = vst [vmem:[#allocation2 + $0x350] sm:$0xff] %v1337
  %1482 = vst [vmem:[#allocation2 + $0x398] sm:$0xff] %v1347
  %1483 = vst [vmem:[#allocation2 + $0x3e0] sm:$0xff] %v1349
  %1484 = vst [vmem:[#allocation2 + $0x428] sm:$0xff] %v1351
  %1485 = vst [vmem:[#allocation2 + $0x470] sm:$0xff] %v1353
  %1486 = vst [vmem:[#allocation2 + $0x40] sm:$0xff] %v1300
  %1487 = vst [vmem:[#allocation2 + $0x88] sm:$0xff] %v1302
  %1488 = vst [vmem:[#allocation2 + $0xd0] sm:$0xff] %v1304
  %1489 = vst [vmem:[#allocation2 + $0x118] sm:$0xff] %v1306
  %1490 = vst [vmem:[#allocation2 + $0x160] sm:$0xff] %v1316
  %1491 = vst [vmem:[#allocation2 + $0x1a8] sm:$0xff] %v1318
  %1492 = vst [vmem:[#allocation2 + $0x1f0] sm:$0xff] %v1320
  %1493 = vst [vmem:[#allocation2 + $0x238] sm:$0xff] %v1322
  %1494 = vst [vmem:[#allocation2 + $0x280] sm:$0xff] %v1332
  %1495 = vst [vmem:[#allocation2 + $0x2c8] sm:$0xff] %v1334
  %1496 = vst [vmem:[#allocation2 + $0x310] sm:$0xff] %v1336
  %1497 = vst [vmem:[#allocation2 + $0x358] sm:$0xff] %v1338
  %1498 = vst [vmem:[#allocation2 + $0x3a0] sm:$0xff] %v1348
  %1499 = vst [vmem:[#allocation2 + $0x3e8] sm:$0xff] %v1350
  %1500 = vst [vmem:[#allocation2 + $0x430] sm:$0xff] %v1352
  %1501 = vst [vmem:[#allocation2 + $0x478] sm:$0xff] %v1354
  %v1502 = vld [vmem:[#allocation2] sm:$0xff]
  %v1503 = vld [vmem:[#allocation2 + $0x8] sm:$0xff]
  %v1504 = vld [vmem:[#allocation2 + $0x10] sm:$0xff]
  %v1505 = vld [vmem:[#allocation2 + $0x18] sm:$0xff]
  %v1506 = vld [vmem:[#allocation2 + $0x20] sm:$0xff]
  %v1507 = vld [vmem:[#allocation2 + $0x28] sm:$0xff]
  %v1508 = vld [vmem:[#allocation2 + $0x30] sm:$0xff]
  %v1509 = vld [vmem:[#allocation2 + $0x38] sm:$0xff]
  %v1510 = vld [vmem:[#allocation2 + $0x40] sm:$0xff]
  %v1511 = vld [vmem:[#allocation2 + $0x48] sm:$0xff]
  %v1512 = vld [vmem:[#allocation2 + $0x50] sm:$0xff]
  %v1513 = vld [vmem:[#allocation2 + $0x58] sm:$0xff]
  %v1514 = vld [vmem:[#allocation2 + $0x60] sm:$0xff]
  %v1515 = vld [vmem:[#allocation2 + $0x68] sm:$0xff]
  %v1516 = vld [vmem:[#allocation2 + $0x70] sm:$0xff]
  %v1517 = vld [vmem:[#allocation2 + $0x78] sm:$0xff]
  %v1518 = vld [vmem:[#allocation2 + $0x80] sm:$0xff]
  %v1519 = vld [vmem:[#allocation2 + $0x88] sm:$0xff]
  %v1520 = vld [vmem:[#allocation2 + $0x90] sm:$0xff]
  %v1521 = vld [vmem:[#allocation2 + $0x98] sm:$0xff]
  %v1522 = vld [vmem:[#allocation2 + $0xa0] sm:$0xff]
  %v1523 = vld [vmem:[#allocation2 + $0xa8] sm:$0xff]
  %v1524 = vld [vmem:[#allocation2 + $0xb0] sm:$0xff]
  %v1525 = vld [vmem:[#allocation2 + $0xb8] sm:$0xff]
  %v1526 = vld [vmem:[#allocation2 + $0xc0] sm:$0xff]
  %v1527 = vld [vmem:[#allocation2 + $0xc8] sm:$0xff]
  %v1528 = vld [vmem:[#allocation2 + $0xd0] sm:$0xff]
  %v1529 = vld [vmem:[#allocation2 + $0xd8] sm:$0xff]
  %v1530 = vld [vmem:[#allocation2 + $0xe0] sm:$0xff]
  %v1531 = vld [vmem:[#allocation2 + $0xe8] sm:$0xff]
  %v1532 = vld [vmem:[#allocation2 + $0xf0] sm:$0xff]
  %v1533 = vld [vmem:[#allocation2 + $0xf8] sm:$0xff]
  %v1534 = vld [vmem:[#allocation2 + $0x100] sm:$0xff]
  %v1535 = vld [vmem:[#allocation2 + $0x108] sm:$0xff]
  %v1536 = vld [vmem:[#allocation2 + $0x110] sm:$0xff]
  %v1537 = vld [vmem:[#allocation2 + $0x118] sm:$0xff]
  %v1538 = vld [vmem:[#allocation2 + $0x120] sm:$0xff]
  %v1539 = vld [vmem:[#allocation2 + $0x128] sm:$0xff]
  %v1540 = vld [vmem:[#allocation2 + $0x130] sm:$0xff]
  %v1541 = vld [vmem:[#allocation2 + $0x138] sm:$0xff]
  %v1542 = vld [vmem:[#allocation2 + $0x140] sm:$0xff]
  %v1543 = vld [vmem:[#allocation2 + $0x148] sm:$0xff]
  %v1544 = vld [vmem:[#allocation2 + $0x150] sm:$0xff]
  %v1545 = vld [vmem:[#allocation2 + $0x158] sm:$0xff]
  %v1546 = vld [vmem:[#allocation2 + $0x160] sm:$0xff]
  %v1547 = vld [vmem:[#allocation2 + $0x168] sm:$0xff]
  %v1548 = vld [vmem:[#allocation2 + $0x170] sm:$0xff]
  %v1549 = vld [vmem:[#allocation2 + $0x178] sm:$0xff]
  %v1550 = vld [vmem:[#allocation2 + $0x180] sm:$0xff]
  %v1551 = vld [vmem:[#allocation2 + $0x188] sm:$0xff]
  %v1552 = vld [vmem:[#allocation2 + $0x190] sm:$0xff]
  %v1553 = vld [vmem:[#allocation2 + $0x198] sm:$0xff]
  %v1554 = vld [vmem:[#allocation2 + $0x1a0] sm:$0xff]
  %v1555 = vld [vmem:[#allocation2 + $0x1a8] sm:$0xff]
  %v1556 = vld [vmem:[#allocation2 + $0x1b0] sm:$0xff]
  %v1557 = vld [vmem:[#allocation2 + $0x1b8] sm:$0xff]
  %v1558 = vld [vmem:[#allocation2 + $0x1c0] sm:$0xff]
  %v1559 = vld [vmem:[#allocation2 + $0x1c8] sm:$0xff]
  %v1560 = vld [vmem:[#allocation2 + $0x1d0] sm:$0xff]
  %v1561 = vld [vmem:[#allocation2 + $0x1d8] sm:$0xff]
  %v1562 = vld [vmem:[#allocation2 + $0x1e0] sm:$0xff]
  %v1563 = vld [vmem:[#allocation2 + $0x1e8] sm:$0xff]
  %v1564 = vld [vmem:[#allocation2 + $0x1f0] sm:$0xff]
  %v1565 = vld [vmem:[#allocation2 + $0x1f8] sm:$0xff]
  %v1566 = vld [vmem:[#allocation2 + $0x200] sm:$0xff]
  %v1567 = vld [vmem:[#allocation2 + $0x208] sm:$0xff]
  %v1568 = vld [vmem:[#allocation2 + $0x210] sm:$0xff]
  %v1569 = vld [vmem:[#allocation2 + $0x218] sm:$0xff]
  %v1570 = vld [vmem:[#allocation2 + $0x220] sm:$0xff]
  %v1571 = vld [vmem:[#allocation2 + $0x228] sm:$0xff]
  %v1572 = vld [vmem:[#allocation2 + $0x230] sm:$0xff]
  %v1573 = vld [vmem:[#allocation2 + $0x238] sm:$0xff]
  %v1574 = vld [vmem:[#allocation2 + $0x240] sm:$0xff]
  %v1575 = vld [vmem:[#allocation2 + $0x248] sm:$0xff]
  %v1576 = vld [vmem:[#allocation2 + $0x250] sm:$0xff]
  %v1577 = vld [vmem:[#allocation2 + $0x258] sm:$0xff]
  %v1578 = vld [vmem:[#allocation2 + $0x260] sm:$0xff]
  %v1579 = vld [vmem:[#allocation2 + $0x268] sm:$0xff]
  %v1580 = vld [vmem:[#allocation2 + $0x270] sm:$0xff]
  %v1581 = vld [vmem:[#allocation2 + $0x278] sm:$0xff]
  %v1582 = vld [vmem:[#allocation2 + $0x280] sm:$0xff]
  %v1583 = vld [vmem:[#allocation2 + $0x288] sm:$0xff]
  %v1584 = vld [vmem:[#allocation2 + $0x290] sm:$0xff]
  %v1585 = vld [vmem:[#allocation2 + $0x298] sm:$0xff]
  %v1586 = vld [vmem:[#allocation2 + $0x2a0] sm:$0xff]
  %v1587 = vld [vmem:[#allocation2 + $0x2a8] sm:$0xff]
  %v1588 = vld [vmem:[#allocation2 + $0x2b0] sm:$0xff]
  %v1589 = vld [vmem:[#allocation2 + $0x2b8] sm:$0xff]
  %v1590 = vld [vmem:[#allocation2 + $0x2c0] sm:$0xff]
  %v1591 = vld [vmem:[#allocation2 + $0x2c8] sm:$0xff]
  %v1592 = vld [vmem:[#allocation2 + $0x2d0] sm:$0xff]
  %v1593 = vld [vmem:[#allocation2 + $0x2d8] sm:$0xff]
  %v1594 = vld [vmem:[#allocation2 + $0x2e0] sm:$0xff]
  %v1595 = vld [vmem:[#allocation2 + $0x2e8] sm:$0xff]
  %v1596 = vld [vmem:[#allocation2 + $0x2f0] sm:$0xff]
  %v1597 = vld [vmem:[#allocation2 + $0x2f8] sm:$0xff]
  %v1598 = vld [vmem:[#allocation2 + $0x300] sm:$0xff]
  %v1599 = vld [vmem:[#allocation2 + $0x308] sm:$0xff]
  %v1600 = vld [vmem:[#allocation2 + $0x310] sm:$0xff]
  %v1601 = vld [vmem:[#allocation2 + $0x318] sm:$0xff]
  %v1602 = vld [vmem:[#allocation2 + $0x320] sm:$0xff]
  %v1603 = vld [vmem:[#allocation2 + $0x328] sm:$0xff]
  %v1604 = vld [vmem:[#allocation2 + $0x330] sm:$0xff]
  %v1605 = vld [vmem:[#allocation2 + $0x338] sm:$0xff]
  %v1606 = vld [vmem:[#allocation2 + $0x340] sm:$0xff]
  %v1607 = vld [vmem:[#allocation2 + $0x348] sm:$0xff]
  %v1608 = vld [vmem:[#allocation2 + $0x350] sm:$0xff]
  %v1609 = vld [vmem:[#allocation2 + $0x358] sm:$0xff]
  %v1610 = vld [vmem:[#allocation2 + $0x360] sm:$0xff]
  %v1611 = vld [vmem:[#allocation2 + $0x368] sm:$0xff]
  %v1612 = vld [vmem:[#allocation2 + $0x370] sm:$0xff]
  %v1613 = vld [vmem:[#allocation2 + $0x378] sm:$0xff]
  %v1614 = vld [vmem:[#allocation2 + $0x380] sm:$0xff]
  %v1615 = vld [vmem:[#allocation2 + $0x388] sm:$0xff]
  %v1616 = vld [vmem:[#allocation2 + $0x390] sm:$0xff]
  %v1617 = vld [vmem:[#allocation2 + $0x398] sm:$0xff]
  %v1618 = vld [vmem:[#allocation2 + $0x3a0] sm:$0xff]
  %v1619 = vld [vmem:[#allocation2 + $0x3a8] sm:$0xff]
  %v1620 = vld [vmem:[#allocation2 + $0x3b0] sm:$0xff]
  %v1621 = vld [vmem:[#allocation2 + $0x3b8] sm:$0xff]
  %v1622 = vld [vmem:[#allocation2 + $0x3c0] sm:$0xff]
  %v1623 = vld [vmem:[#allocation2 + $0x3c8] sm:$0xff]
  %v1624 = vld [vmem:[#allocation2 + $0x3d0] sm:$0xff]
  %v1625 = vld [vmem:[#allocation2 + $0x3d8] sm:$0xff]
  %v1626 = vld [vmem:[#allocation2 + $0x3e0] sm:$0xff]
  %v1627 = vld [vmem:[#allocation2 + $0x3e8] sm:$0xff]
  %v1628 = vld [vmem:[#allocation2 + $0x3f0] sm:$0xff]
  %v1629 = vld [vmem:[#allocation2 + $0x3f8] sm:$0xff]
  %v1630 = vld [vmem:[#allocation2 + $0x400] sm:$0xff]
  %v1631 = vld [vmem:[#allocation2 + $0x408] sm:$0xff]
  %v1632 = vld [vmem:[#allocation2 + $0x410] sm:$0xff]
  %v1633 = vld [vmem:[#allocation2 + $0x418] sm:$0xff]
  %v1634 = vld [vmem:[#allocation2 + $0x420] sm:$0xff]
  %v1635 = vld [vmem:[#allocation2 + $0x428] sm:$0xff]
  %v1636 = vld [vmem:[#allocation2 + $0x430] sm:$0xff]
  %v1637 = vld [vmem:[#allocation2 + $0x438] sm:$0xff]
  %v1638 = vld [vmem:[#allocation2 + $0x440] sm:$0xff]
  %v1639 = vld [vmem:[#allocation2 + $0x448] sm:$0xff]
  %v1640 = vld [vmem:[#allocation2 + $0x450] sm:$0xff]
  %v1641 = vld [vmem:[#allocation2 + $0x458] sm:$0xff]
  %v1642 = vld [vmem:[#allocation2 + $0x460] sm:$0xff]
  %v1643 = vld [vmem:[#allocation2 + $0x468] sm:$0xff]
  %v1644 = vld [vmem:[#allocation2 + $0x470] sm:$0xff]
  %v1645 = vld [vmem:[#allocation2 + $0x478] sm:$0xff]
  %v1646 = vld [vmem:[%s3] sm:$0xf]
  %v1647 = vld [vmem:[%s3 + $0x4] sm:$0xf]
  %v1648 = vld [vmem:[%s3 + $0x8] sm:$0xf]
  %v1649 = vld [vmem:[%s3 + $0xc] sm:$0xf]
  %v1650 = vld [vmem:[%s3 + $0x10] sm:$0xf]
  %v1651 = vld [vmem:[%s3 + $0x14] sm:$0xf]
  %v1652 = vld [vmem:[%s3 + $0x18] sm:$0xf]
  %v1653 = vld [vmem:[%s3 + $0x1c] sm:$0xf]
  %v1654 = vld [vmem:[%s3 + $0x20] sm:$0xf]
  %v1655 = vld [vmem:[%s3 + $0x24] sm:$0xf]
  %v1656 = vld [vmem:[%s3 + $0x28] sm:$0xf]
  %v1657 = vld [vmem:[%s3 + $0x2c] sm:$0xf]
  %v1658 = vld [vmem:[%s3 + $0x30] sm:$0xf]
  %v1659 = vld [vmem:[%s3 + $0x34] sm:$0xf]
  %v1660 = vld [vmem:[%s3 + $0x38] sm:$0xf]
  %v1661 = vld [vmem:[%s3 + $0x3c] sm:$0xf]
  %v1662 = vld [vmem:[%s3 + $0x40] sm:$0xf]
  %v1663 = vld [vmem:[%s3 + $0x44] sm:$0xf]
  %v1664 = vld [vmem:[%s3 + $0x48] sm:$0xf]
  %v1665 = vld [vmem:[%s3 + $0x4c] sm:$0xf]
  %v1666 = vld [vmem:[%s3 + $0x50] sm:$0xf]
  %v1667 = vld [vmem:[%s3 + $0x54] sm:$0xf]
  %v1668 = vld [vmem:[%s3 + $0x58] sm:$0xf]
  %v1669 = vld [vmem:[%s3 + $0x5c] sm:$0xf]
  %v1670 = vld [vmem:[%s3 + $0x60] sm:$0xf]
  %v1671 = vld [vmem:[%s3 + $0x64] sm:$0xf]
  %v1672 = vld [vmem:[%s3 + $0x68] sm:$0xf]
  %v1673 = vld [vmem:[%s3 + $0x6c] sm:$0xf]
  %v1674 = vld [vmem:[%s3 + $0x70] sm:$0xf]
  %v1675 = vld [vmem:[%s3 + $0x74] sm:$0xf]
  %v1676 = vld [vmem:[%s3 + $0x78] sm:$0xf]
  %v1677 = vld [vmem:[%s3 + $0x7c] sm:$0xf]
  %v1678 = vld [vmem:[%s3 + $0x80] sm:$0xf]
  %v1679 = vld [vmem:[%s3 + $0x84] sm:$0xf]
  %v1680 = vld [vmem:[%s3 + $0x88] sm:$0xf]
  %v1681 = vld [vmem:[%s3 + $0x8c] sm:$0xf]
  %v1682 = vld [vmem:[%s3 + $0x90] sm:$0xf]
  %v1683 = vld [vmem:[%s3 + $0x94] sm:$0xf]
  %v1684 = vld [vmem:[%s3 + $0x98] sm:$0xf]
  %v1685 = vld [vmem:[%s3 + $0x9c] sm:$0xf]
  %v1686 = vld [vmem:[%s3 + $0xa0] sm:$0xf]
  %v1687 = vld [vmem:[%s3 + $0xa4] sm:$0xf]
  %v1688 = vld [vmem:[%s3 + $0xa8] sm:$0xf]
  %v1689 = vld [vmem:[%s3 + $0xac] sm:$0xf]
  %v1690 = vld [vmem:[%s3 + $0xb0] sm:$0xf]
  %v1691 = vld [vmem:[%s3 + $0xb4] sm:$0xf]
  %v1692 = vld [vmem:[%s3 + $0xb8] sm:$0xf]
  %v1693 = vld [vmem:[%s3 + $0xbc] sm:$0xf]
  %v1694 = vld [vmem:[%s3 + $0xc0] sm:$0xf]
  %v1695 = vld [vmem:[%s3 + $0xc4] sm:$0xf]
  %v1696 = vld [vmem:[%s3 + $0xc8] sm:$0xf]
  %v1697 = vld [vmem:[%s3 + $0xcc] sm:$0xf]
  %v1698 = vld [vmem:[%s3 + $0xd0] sm:$0xf]
  %v1699 = vld [vmem:[%s3 + $0xd4] sm:$0xf]
  %v1700 = vld [vmem:[%s3 + $0xd8] sm:$0xf]
  %v1701 = vld [vmem:[%s3 + $0xdc] sm:$0xf]
  %v1702 = vld [vmem:[%s3 + $0xe0] sm:$0xf]
  %v1703 = vld [vmem:[%s3 + $0xe4] sm:$0xf]
  %v1704 = vld [vmem:[%s3 + $0xe8] sm:$0xf]
  %v1705 = vld [vmem:[%s3 + $0xec] sm:$0xf]
  %v1706 = vld [vmem:[%s3 + $0xf0] sm:$0xf]
  %v1707 = vld [vmem:[%s3 + $0xf4] sm:$0xf]
  %v1708 = vld [vmem:[%s3 + $0xf8] sm:$0xf]
  %v1709 = vld [vmem:[%s3 + $0xfc] sm:$0xf]
  %v1710 = vld [vmem:[%s3 + $0x100] sm:$0xf]
  %v1711 = vld [vmem:[%s3 + $0x104] sm:$0xf]
  %v1712 = vld [vmem:[%s3 + $0x108] sm:$0xf]
  %v1713 = vld [vmem:[%s3 + $0x10c] sm:$0xf]
  %v1714 = vld [vmem:[%s3 + $0x110] sm:$0xf]
  %v1715 = vld [vmem:[%s3 + $0x114] sm:$0xf]
  %v1716 = vld [vmem:[%s3 + $0x118] sm:$0xf]
  %v1717 = vld [vmem:[%s3 + $0x11c] sm:$0xf]
  %v1718 = vld [vmem:[%s3 + $0x120] sm:$0xf]
  %v1719 = vld [vmem:[%s3 + $0x124] sm:$0xf]
  %v1720 = vld [vmem:[%s3 + $0x128] sm:$0xf]
  %v1721 = vld [vmem:[%s3 + $0x12c] sm:$0xf]
  %v1722 = vld [vmem:[%s3 + $0x130] sm:$0xf]
  %v1723 = vld [vmem:[%s3 + $0x134] sm:$0xf]
  %v1724 = vld [vmem:[%s3 + $0x138] sm:$0xf]
  %v1725 = vld [vmem:[%s3 + $0x13c] sm:$0xf]
  %v1726 = vld [vmem:[%s3 + $0x140] sm:$0xf]
  %v1727 = vld [vmem:[%s3 + $0x144] sm:$0xf]
  %v1728 = vld [vmem:[%s3 + $0x148] sm:$0xf]
  %v1729 = vld [vmem:[%s3 + $0x14c] sm:$0xf]
  %v1730 = vld [vmem:[%s3 + $0x150] sm:$0xf]
  %v1731 = vld [vmem:[%s3 + $0x154] sm:$0xf]
  %v1732 = vld [vmem:[%s3 + $0x158] sm:$0xf]
  %v1733 = vld [vmem:[%s3 + $0x15c] sm:$0xf]
  %v1734 = vld [vmem:[%s3 + $0x160] sm:$0xf]
  %v1735 = vld [vmem:[%s3 + $0x164] sm:$0xf]
  %v1736 = vld [vmem:[%s3 + $0x168] sm:$0xf]
  %v1737 = vld [vmem:[%s3 + $0x16c] sm:$0xf]
  %v1738 = vld [vmem:[%s3 + $0x170] sm:$0xf]
  %v1739 = vld [vmem:[%s3 + $0x174] sm:$0xf]
  %v1740 = vld [vmem:[%s3 + $0x178] sm:$0xf]
  %v1741 = vld [vmem:[%s3 + $0x17c] sm:$0xf]
  %v1742 = vld [vmem:[%s3 + $0x180] sm:$0xf]
  %v1743 = vld [vmem:[%s3 + $0x184] sm:$0xf]
  %v1744 = vld [vmem:[%s3 + $0x188] sm:$0xf]
  %v1745 = vld [vmem:[%s3 + $0x18c] sm:$0xf]
  %v1746 = vld [vmem:[%s3 + $0x190] sm:$0xf]
  %v1747 = vld [vmem:[%s3 + $0x194] sm:$0xf]
  %v1748 = vld [vmem:[%s3 + $0x198] sm:$0xf]
  %v1749 = vld [vmem:[%s3 + $0x19c] sm:$0xf]
  %v1750 = vld [vmem:[%s3 + $0x1a0] sm:$0xf]
  %v1751 = vld [vmem:[%s3 + $0x1a4] sm:$0xf]
  %v1752 = vld [vmem:[%s3 + $0x1a8] sm:$0xf]
  %v1753 = vld [vmem:[%s3 + $0x1ac] sm:$0xf]
  %v1754 = vld [vmem:[%s3 + $0x1b0] sm:$0xf]
  %v1755 = vld [vmem:[%s3 + $0x1b4] sm:$0xf]
  %v1756 = vld [vmem:[%s3 + $0x1b8] sm:$0xf]
  %v1757 = vld [vmem:[%s3 + $0x1bc] sm:$0xf]
  %v1758 = vld [vmem:[%s3 + $0x1c0] sm:$0xf]
  %v1759 = vld [vmem:[%s3 + $0x1c4] sm:$0xf]
  %v1760 = vld [vmem:[%s3 + $0x1c8] sm:$0xf]
  %v1761 = vld [vmem:[%s3 + $0x1cc] sm:$0xf]
  %v1762 = vld [vmem:[%s3 + $0x1d0] sm:$0xf]
  %v1763 = vld [vmem:[%s3 + $0x1d4] sm:$0xf]
  %v1764 = vld [vmem:[%s3 + $0x1d8] sm:$0xf]
  %v1765 = vld [vmem:[%s3 + $0x1dc] sm:$0xf]
  %v1766 = vld [vmem:[%s3 + $0x1e0] sm:$0xf]
  %v1767 = vld [vmem:[%s3 + $0x1e4] sm:$0xf]
  %v1768 = vld [vmem:[%s3 + $0x1e8] sm:$0xf]
  %v1769 = vld [vmem:[%s3 + $0x1ec] sm:$0xf]
  %v1770 = vld [vmem:[%s3 + $0x1f0] sm:$0xf]
  %v1771 = vld [vmem:[%s3 + $0x1f4] sm:$0xf]
  %v1772 = vld [vmem:[%s3 + $0x1f8] sm:$0xf]
  %v1773 = vld [vmem:[%s3 + $0x1fc] sm:$0xf]
  %v1774 = vld [vmem:[%s3 + $0x200] sm:$0xf]
  %v1775 = vld [vmem:[%s3 + $0x204] sm:$0xf]
  %v1776 = vld [vmem:[%s3 + $0x208] sm:$0xf]
  %v1777 = vld [vmem:[%s3 + $0x20c] sm:$0xf]
  %v1778 = vld [vmem:[%s3 + $0x210] sm:$0xf]
  %v1779 = vld [vmem:[%s3 + $0x214] sm:$0xf]
  %v1780 = vld [vmem:[%s3 + $0x218] sm:$0xf]
  %v1781 = vld [vmem:[%s3 + $0x21c] sm:$0xf]
  %v1782 = vld [vmem:[%s3 + $0x220] sm:$0xf]
  %v1783 = vld [vmem:[%s3 + $0x224] sm:$0xf]
  %v1784 = vld [vmem:[%s3 + $0x228] sm:$0xf]
  %v1785 = vld [vmem:[%s3 + $0x22c] sm:$0xf]
  %v1786 = vld [vmem:[%s3 + $0x230] sm:$0xf]
  %v1787 = vld [vmem:[%s3 + $0x234] sm:$0xf]
  %v1788 = vld [vmem:[%s3 + $0x238] sm:$0xf]
  %v1789 = vld [vmem:[%s3 + $0x23c] sm:$0xf]
  %v1790 = vld [vmem:[%s4] sm:$0x1]
  %v1792 = vlaneseq
  %v1793 = vshrl.u32 %v1792, 7
  %v1794 = vsub.s32 0, %v1793
  %v1795 = vrot.slane %v1790, %v1794
  %v1941 = vunpack.c.l.b16 %v1646
  %v1942 = vunpack.c.l.b16 %v1647
  %v1943 = vunpack.c.l.b16 %v1648
  %v1944 = vunpack.c.l.b16 %v1649
  %v1945 = vunpack.c.l.b16 %v1650
  %v1946 = vunpack.c.l.b16 %v1651
  %v1947 = vunpack.c.l.b16 %v1652
  %v1948 = vunpack.c.l.b16 %v1653
  %v1949 = vunpack.c.l.b16 %v1654
  %v1950 = vunpack.c.l.b16 %v1655
  %v1951 = vunpack.c.l.b16 %v1656
  %v1952 = vunpack.c.l.b16 %v1657
  %v1953 = vunpack.c.l.b16 %v1658
  %v1954 = vunpack.c.l.b16 %v1659
  %v1955 = vunpack.c.l.b16 %v1660
  %v1956 = vunpack.c.l.b16 %v1661
  %v1957 = vunpack.c.l.b16 %v1662
  %v1958 = vunpack.c.l.b16 %v1663
  %v1959 = vunpack.c.l.b16 %v1664
  %v1960 = vunpack.c.l.b16 %v1665
  %v1961 = vunpack.c.l.b16 %v1666
  %v1962 = vunpack.c.l.b16 %v1667
  %v1963 = vunpack.c.l.b16 %v1668
  %v1964 = vunpack.c.l.b16 %v1669
  %v1965 = vunpack.c.l.b16 %v1670
  %v1966 = vunpack.c.l.b16 %v1671
  %v1967 = vunpack.c.l.b16 %v1672
  %v1968 = vunpack.c.l.b16 %v1673
  %v1969 = vunpack.c.l.b16 %v1674
  %v1970 = vunpack.c.l.b16 %v1675
  %v1971 = vunpack.c.l.b16 %v1676
  %v1972 = vunpack.c.l.b16 %v1677
  %v1973 = vunpack.c.l.b16 %v1678
  %v1974 = vunpack.c.l.b16 %v1679
  %v1975 = vunpack.c.l.b16 %v1680
  %v1976 = vunpack.c.l.b16 %v1681
  %v1977 = vunpack.c.l.b16 %v1682
  %v1978 = vunpack.c.l.b16 %v1683
  %v1979 = vunpack.c.l.b16 %v1684
  %v1980 = vunpack.c.l.b16 %v1685
  %v1981 = vunpack.c.l.b16 %v1686
  %v1982 = vunpack.c.l.b16 %v1687
  %v1983 = vunpack.c.l.b16 %v1688
  %v1984 = vunpack.c.l.b16 %v1689
  %v1985 = vunpack.c.l.b16 %v1690
  %v1986 = vunpack.c.l.b16 %v1691
  %v1987 = vunpack.c.l.b16 %v1692
  %v1988 = vunpack.c.l.b16 %v1693
  %v1989 = vunpack.c.l.b16 %v1694
  %v1990 = vunpack.c.l.b16 %v1695
  %v1991 = vunpack.c.l.b16 %v1696
  %v1992 = vunpack.c.l.b16 %v1697
  %v1993 = vunpack.c.l.b16 %v1698
  %v1994 = vunpack.c.l.b16 %v1699
  %v1995 = vunpack.c.l.b16 %v1700
  %v1996 = vunpack.c.l.b16 %v1701
  %v1997 = vunpack.c.l.b16 %v1702
  %v1998 = vunpack.c.l.b16 %v1703
  %v1999 = vunpack.c.l.b16 %v1704
  %v2000 = vunpack.c.l.b16 %v1705
  %v2001 = vunpack.c.l.b16 %v1706
  %v2002 = vunpack.c.l.b16 %v1707
  %v2003 = vunpack.c.l.b16 %v1708
  %v2004 = vunpack.c.l.b16 %v1709
  %v2005 = vunpack.c.l.b16 %v1710
  %v2006 = vunpack.c.l.b16 %v1711
  %v2007 = vunpack.c.l.b16 %v1712
  %v2008 = vunpack.c.l.b16 %v1713
  %v2009 = vunpack.c.l.b16 %v1714
  %v2010 = vunpack.c.l.b16 %v1715
  %v2011 = vunpack.c.l.b16 %v1716
  %v2012 = vunpack.c.l.b16 %v1717
  %v2013 = vunpack.c.l.b16 %v1718
  %v2014 = vunpack.c.l.b16 %v1719
  %v2015 = vunpack.c.l.b16 %v1720
  %v2016 = vunpack.c.l.b16 %v1721
  %v2017 = vunpack.c.l.b16 %v1722
  %v2018 = vunpack.c.l.b16 %v1723
  %v2019 = vunpack.c.l.b16 %v1724
  %v2020 = vunpack.c.l.b16 %v1725
  %v2021 = vunpack.c.l.b16 %v1726
  %v2022 = vunpack.c.l.b16 %v1727
  %v2023 = vunpack.c.l.b16 %v1728
  %v2024 = vunpack.c.l.b16 %v1729
  %v2025 = vunpack.c.l.b16 %v1730
  %v2026 = vunpack.c.l.b16 %v1731
  %v2027 = vunpack.c.l.b16 %v1732
  %v2028 = vunpack.c.l.b16 %v1733
  %v2029 = vunpack.c.l.b16 %v1734
  %v2030 = vunpack.c.l.b16 %v1735
  %v2031 = vunpack.c.l.b16 %v1736
  %v2032 = vunpack.c.l.b16 %v1737
  %v2033 = vunpack.c.l.b16 %v1738
  %v2034 = vunpack.c.l.b16 %v1739
  %v2035 = vunpack.c.l.b16 %v1740
  %v2036 = vunpack.c.l.b16 %v1741
  %v2037 = vunpack.c.l.b16 %v1742
  %v2038 = vunpack.c.l.b16 %v1743
  %v2039 = vunpack.c.l.b16 %v1744
  %v2040 = vunpack.c.l.b16 %v1745
  %v2041 = vunpack.c.l.b16 %v1746
  %v2042 = vunpack.c.l.b16 %v1747
  %v2043 = vunpack.c.l.b16 %v1748
  %v2044 = vunpack.c.l.b16 %v1749
  %v2045 = vunpack.c.l.b16 %v1750
  %v2046 = vunpack.c.l.b16 %v1751
  %v2047 = vunpack.c.l.b16 %v1752
  %v2048 = vunpack.c.l.b16 %v1753
  %v2049 = vunpack.c.l.b16 %v1754
  %v2050 = vunpack.c.l.b16 %v1755
  %v2051 = vunpack.c.l.b16 %v1756
  %v2052 = vunpack.c.l.b16 %v1757
  %v2053 = vunpack.c.l.b16 %v1758
  %v2054 = vunpack.c.l.b16 %v1759
  %v2055 = vunpack.c.l.b16 %v1760
  %v2056 = vunpack.c.l.b16 %v1761
  %v2057 = vunpack.c.l.b16 %v1762
  %v2058 = vunpack.c.l.b16 %v1763
  %v2059 = vunpack.c.l.b16 %v1764
  %v2060 = vunpack.c.l.b16 %v1765
  %v2061 = vunpack.c.l.b16 %v1766
  %v2062 = vunpack.c.l.b16 %v1767
  %v2063 = vunpack.c.l.b16 %v1768
  %v2064 = vunpack.c.l.b16 %v1769
  %v2065 = vunpack.c.l.b16 %v1770
  %v2066 = vunpack.c.l.b16 %v1771
  %v2067 = vunpack.c.l.b16 %v1772
  %v2068 = vunpack.c.l.b16 %v1773
  %v2069 = vunpack.c.l.b16 %v1774
  %v2070 = vunpack.c.l.b16 %v1775
  %v2071 = vunpack.c.l.b16 %v1776
  %v2072 = vunpack.c.l.b16 %v1777
  %v2073 = vunpack.c.l.b16 %v1778
  %v2074 = vunpack.c.l.b16 %v1779
  %v2075 = vunpack.c.l.b16 %v1780
  %v2076 = vunpack.c.l.b16 %v1781
  %v2077 = vunpack.c.l.b16 %v1782
  %v2078 = vunpack.c.l.b16 %v1783
  %v2079 = vunpack.c.l.b16 %v1784
  %v2080 = vunpack.c.l.b16 %v1785
  %v2081 = vunpack.c.l.b16 %v1786
  %v2082 = vunpack.c.l.b16 %v1787
  %v2083 = vunpack.c.l.b16 %v1788
  %v2084 = vunpack.c.l.b16 %v1789
  %v2085 = vpack.c.b16 %v1942, %v1941
  %v2086 = vpack.c.b16 %v1944, %v1943
  %v2087 = vpack.c.b16 %v1946, %v1945
  %v2088 = vpack.c.b16 %v1948, %v1947
  %v2089 = vpack.c.b16 %v1950, %v1949
  %v2090 = vpack.c.b16 %v1952, %v1951
  %v2091 = vpack.c.b16 %v1954, %v1953
  %v2092 = vpack.c.b16 %v1956, %v1955
  %v2093 = vpack.c.b16 %v1958, %v1957
  %v2094 = vpack.c.b16 %v1960, %v1959
  %v2095 = vpack.c.b16 %v1962, %v1961
  %v2096 = vpack.c.b16 %v1964, %v1963
  %v2097 = vpack.c.b16 %v1966, %v1965
  %v2098 = vpack.c.b16 %v1968, %v1967
  %v2099 = vpack.c.b16 %v1970, %v1969
  %v2100 = vpack.c.b16 %v1972, %v1971
  %v2101 = vpack.c.b16 %v1974, %v1973
  %v2102 = vpack.c.b16 %v1976, %v1975
  %v2103 = vpack.c.b16 %v1978, %v1977
  %v2104 = vpack.c.b16 %v1980, %v1979
  %v2105 = vpack.c.b16 %v1982, %v1981
  %v2106 = vpack.c.b16 %v1984, %v1983
  %v2107 = vpack.c.b16 %v1986, %v1985
  %v2108 = vpack.c.b16 %v1988, %v1987
  %v2109 = vpack.c.b16 %v1990, %v1989
  %v2110 = vpack.c.b16 %v1992, %v1991
  %v2111 = vpack.c.b16 %v1994, %v1993
  %v2112 = vpack.c.b16 %v1996, %v1995
  %v2113 = vpack.c.b16 %v1998, %v1997
  %v2114 = vpack.c.b16 %v2000, %v1999
  %v2115 = vpack.c.b16 %v2002, %v2001
  %v2116 = vpack.c.b16 %v2004, %v2003
  %v2117 = vpack.c.b16 %v2006, %v2005
  %v2118 = vpack.c.b16 %v2008, %v2007
  %v2119 = vpack.c.b16 %v2010, %v2009
  %v2120 = vpack.c.b16 %v2012, %v2011
  %v2121 = vpack.c.b16 %v2014, %v2013
  %v2122 = vpack.c.b16 %v2016, %v2015
  %v2123 = vpack.c.b16 %v2018, %v2017
  %v2124 = vpack.c.b16 %v2020, %v2019
  %v2125 = vpack.c.b16 %v2022, %v2021
  %v2126 = vpack.c.b16 %v2024, %v2023
  %v2127 = vpack.c.b16 %v2026, %v2025
  %v2128 = vpack.c.b16 %v2028, %v2027
  %v2129 = vpack.c.b16 %v2030, %v2029
  %v2130 = vpack.c.b16 %v2032, %v2031
  %v2131 = vpack.c.b16 %v2034, %v2033
  %v2132 = vpack.c.b16 %v2036, %v2035
  %v2133 = vpack.c.b16 %v2038, %v2037
  %v2134 = vpack.c.b16 %v2040, %v2039
  %v2135 = vpack.c.b16 %v2042, %v2041
  %v2136 = vpack.c.b16 %v2044, %v2043
  %v2137 = vpack.c.b16 %v2046, %v2045
  %v2138 = vpack.c.b16 %v2048, %v2047
  %v2139 = vpack.c.b16 %v2050, %v2049
  %v2140 = vpack.c.b16 %v2052, %v2051
  %v2141 = vpack.c.b16 %v2054, %v2053
  %v2142 = vpack.c.b16 %v2056, %v2055
  %v2143 = vpack.c.b16 %v2058, %v2057
  %v2144 = vpack.c.b16 %v2060, %v2059
  %v2145 = vpack.c.b16 %v2062, %v2061
  %v2146 = vpack.c.b16 %v2064, %v2063
  %v2147 = vpack.c.b16 %v2066, %v2065
  %v2148 = vpack.c.b16 %v2068, %v2067
  %v2149 = vpack.c.b16 %v2070, %v2069
  %v2150 = vpack.c.b16 %v2072, %v2071
  %v2151 = vpack.c.b16 %v2074, %v2073
  %v2152 = vpack.c.b16 %v2076, %v2075
  %v2153 = vpack.c.b16 %v2078, %v2077
  %v2154 = vpack.c.b16 %v2080, %v2079
  %v2155 = vpack.c.b16 %v2082, %v2081
  %v2156 = vpack.c.b16 %v2084, %v2083
  %2229 = vmatprep.subr.bf16.mxu0 0
  %2230 = vmatpush1.bf16.msra.mxu0 %v2085
  %2231 = vmatprep.subr.bf16.mxu0 0
  %2232 = vmatpush1.bf16.msra.mxu0 %v2086
  %2233 = vmatprep.subr.bf16.mxu0 0
  %2234 = vmatpush1.bf16.msra.mxu0 %v2087
  %2235 = vmatprep.subr.bf16.mxu0 0
  %2236 = vmatpush1.bf16.msra.mxu0 %v2088
  %2237 = vmatprep.subr.bf16.mxu0 0
  %2238 = vmatpush1.bf16.msra.mxu0 %v2089
  %2239 = vmatprep.subr.bf16.mxu0 0
  %2240 = vmatpush1.bf16.msra.mxu0 %v2090
  %2241 = vmatprep.subr.bf16.mxu0 0
  %2242 = vmatpush1.bf16.msra.mxu0 %v2091
  %2243 = vmatprep.subr.bf16.mxu0 0
  %2244 = vmatpush1.bf16.msra.mxu0 %v2092
  %2245 = vmatprep.subr.bf16.mxu0 0
  %2246 = vmatpush1.bf16.msra.mxu0 %v2093
  %2247 = vmatprep.subr.bf16.mxu0 0
  %2248 = vmatpush1.bf16.msra.mxu0 %v2094
  %2249 = vmatprep.subr.bf16.mxu0 0
  %2250 = vmatpush1.bf16.msra.mxu0 %v2095
  %2251 = vmatprep.subr.bf16.mxu0 0
  %2252 = vmatpush1.bf16.msra.mxu0 %v2096
  %2253 = vmatprep.subr.bf16.mxu0 0
  %2254 = vmatpush1.bf16.msra.mxu0 %v2097
  %2255 = vmatprep.subr.bf16.mxu0 0
  %2256 = vmatpush1.bf16.msra.mxu0 %v2098
  %2257 = vmatprep.subr.bf16.mxu0 0
  %2258 = vmatpush1.bf16.msra.mxu0 %v2099
  %2259 = vmatprep.subr.bf16.mxu0 0
  %2260 = vmatpush1.bf16.msra.mxu0 %v2100
  %2261 = vmatprep.mubr.bf16.mxu0 %v1503
  %2262 = vmatmul.mubr.bf16.gmra.mrb[0].mxu0 %v1502
  %v2263 = vpop.f32.mrb[0].mxu0
  %v2264 = vadd.f32 %v1795, %v2263
  %v2265 = vpop.f32.mrb[0].mxu0
  %v2266 = vpop.f32.mrb[0].mxu0
  %v2267 = vadd.f32 %v1795, %v2266
  %v2268 = vpop.f32.mrb[0].mxu0
  %2269 = vmatprep.mubr.bf16.mxu0 %v1512
  %2270 = vmatmul.mubr.bf16.gmra.mrb[0].mxu0 %v1511
  %v2271 = vpop.f32.mrb[0].mxu0
  %v2272 = vadd.f32 %v1795, %v2271
  %v2273 = vpop.f32.mrb[0].mxu0
  %v2274 = vpop.f32.mrb[0].mxu0
  %v2275 = vadd.f32 %v1795, %v2274
  %v2276 = vpop.f32.mrb[0].mxu0
  %2277 = vmatprep.mubr.bf16.mxu0 %v1521
  %2278 = vmatmul.mubr.bf16.gmra.mrb[0].mxu0 %v1520
  %v2279 = vpop.f32.mrb[0].mxu0
  %v2280 = vadd.f32 %v1795, %v2279
  %v2281 = vpop.f32.mrb[0].mxu0
  %v2282 = vpop.f32.mrb[0].mxu0
  %v2283 = vadd.f32 %v1795, %v2282
  %v2284 = vpop.f32.mrb[0].mxu0
  %2285 = vmatprep.mubr.bf16.mxu0 %v1530
  %2286 = vmatmul.mubr.bf16.gmra.mrb[0].mxu0 %v1529
  %v2287 = vpop.f32.mrb[0].mxu0
  %v2288 = vadd.f32 %v1795, %v2287
  %v2289 = vpop.f32.mrb[0].mxu0
  %v2290 = vpop.f32.mrb[0].mxu0
  %v2291 = vadd.f32 %v1795, %v2290
  %v2292 = vpop.f32.mrb[0].mxu0
  %2293 = vmatprep.mubr.bf16.mxu0 %v1539
  %2294 = vmatmul.mubr.bf16.gmra.mrb[0].mxu0 %v1538
  %v2295 = vpop.f32.mrb[0].mxu0
  %v2296 = vadd.f32 %v1795, %v2295
  %v2297 = vpop.f32.mrb[0].mxu0
  %v2298 = vpop.f32.mrb[0].mxu0
  %v2299 = vadd.f32 %v1795, %v2298
  %v2300 = vpop.f32.mrb[0].mxu0
  %2301 = vmatprep.mubr.bf16.mxu0 %v1548
  %2302 = vmatmul.mubr.bf16.gmra.mrb[0].mxu0 %v1547
  %v2303 = vpop.f32.mrb[0].mxu0
  %v2304 = vadd.f32 %v1795, %v2303
  %v2305 = vpop.f32.mrb[0].mxu0
  %v2306 = vpop.f32.mrb[0].mxu0
  %v2307 = vadd.f32 %v1795, %v2306
  %v2308 = vpop.f32.mrb[0].mxu0
  %2309 = vmatprep.mubr.bf16.mxu0 %v1557
  %2310 = vmatmul.mubr.bf16.gmra.mrb[0].mxu0 %v1556
  %v2311 = vpop.f32.mrb[0].mxu0
  %v2312 = vadd.f32 %v1795, %v2311
  %v2313 = vpop.f32.mrb[0].mxu0
  %v2314 = vpop.f32.mrb[0].mxu0
  %v2315 = vadd.f32 %v1795, %v2314
  %v2316 = vpop.f32.mrb[0].mxu0
  %2317 = vmatprep.mubr.bf16.mxu0 %v1566
  %2318 = vmatmul.mubr.bf16.gmra.mrb[0].mxu0 %v1565
  %v2319 = vpop.f32.mrb[0].mxu0
  %v2320 = vadd.f32 %v1795, %v2319
  %v2321 = vpop.f32.mrb[0].mxu0
  %v2322 = vpop.f32.mrb[0].mxu0
  %v2323 = vadd.f32 %v1795, %v2322
  %v2324 = vpop.f32.mrb[0].mxu0
  %2325 = vmatprep.mubr.bf16.mxu0 %v1575
  %2326 = vmatmul.mubr.bf16.gmra.mrb[0].mxu0 %v1574
  %v2327 = vpop.f32.mrb[0].mxu0
  %v2328 = vadd.f32 %v1795, %v2327
  %v2329 = vpop.f32.mrb[0].mxu0
  %v2330 = vpop.f32.mrb[0].mxu0
  %v2331 = vadd.f32 %v1795, %v2330
  %v2332 = vpop.f32.mrb[0].mxu0
  %2333 = vmatprep.mubr.bf16.mxu0 %v1584
  %2334 = vmatmul.mubr.bf16.gmra.mrb[0].mxu0 %v1583
  %v2335 = vpop.f32.mrb[0].mxu0
  %v2336 = vadd.f32 %v1795, %v2335
  %v2337 = vpop.f32.mrb[0].mxu0
  %v2338 = vpop.f32.mrb[0].mxu0
  %v2339 = vadd.f32 %v1795, %v2338
  %v2340 = vpop.f32.mrb[0].mxu0
  %2341 = vmatprep.mubr.bf16.mxu0 %v1593
  %2342 = vmatmul.mubr.bf16.gmra.mrb[0].mxu0 %v1592
  %v2343 = vpop.f32.mrb[0].mxu0
  %v2344 = vadd.f32 %v1795, %v2343
  %v2345 = vpop.f32.mrb[0].mxu0
  %v2346 = vpop.f32.mrb[0].mxu0
  %v2347 = vadd.f32 %v1795, %v2346
  %v2348 = vpop.f32.mrb[0].mxu0
  %2349 = vmatprep.mubr.bf16.mxu0 %v1602
  %2350 = vmatmul.mubr.bf16.gmra.mrb[0].mxu0 %v1601
  %v2351 = vpop.f32.mrb[0].mxu0
  %v2352 = vadd.f32 %v1795, %v2351
  %v2353 = vpop.f32.mrb[0].mxu0
  %v2354 = vpop.f32.mrb[0].mxu0
  %v2355 = vadd.f32 %v1795, %v2354
  %v2356 = vpop.f32.mrb[0].mxu0
  %2357 = vmatprep.mubr.bf16.mxu0 %v1611
  %2358 = vmatmul.mubr.bf16.gmra.mrb[0].mxu0 %v1610
  %v2359 = vpop.f32.mrb[0].mxu0
  %v2360 = vadd.f32 %v1795, %v2359
  %v2361 = vpop.f32.mrb[0].mxu0
  %v2362 = vpop.f32.mrb[0].mxu0
  %v2363 = vadd.f32 %v1795, %v2362
  %v2364 = vpop.f32.mrb[0].mxu0
  %2365 = vmatprep.mubr.bf16.mxu0 %v1620
  %2366 = vmatmul.mubr.bf16.gmra.mrb[0].mxu0 %v1619
  %v2367 = vpop.f32.mrb[0].mxu0
  %v2368 = vadd.f32 %v1795, %v2367
  %v2369 = vpop.f32.mrb[0].mxu0
  %v2370 = vpop.f32.mrb[0].mxu0
  %v2371 = vadd.f32 %v1795, %v2370
  %v2372 = vpop.f32.mrb[0].mxu0
  %2373 = vmatprep.mubr.bf16.mxu0 %v1629
  %2374 = vmatmul.mubr.bf16.gmra.mrb[0].mxu0 %v1628
  %v2375 = vpop.f32.mrb[0].mxu0
  %v2376 = vadd.f32 %v1795, %v2375
  %v2377 = vpop.f32.mrb[0].mxu0
  %v2378 = vpop.f32.mrb[0].mxu0
  %v2379 = vadd.f32 %v1795, %v2378
  %v2380 = vpop.f32.mrb[0].mxu0
  %2381 = vmatprep.mubr.bf16.mxu0 %v1638
  %2382 = vmatmul.mubr.bf16.gmra.mrb[0].mxu0 %v1637
  %v2383 = vpop.f32.mrb[0].mxu0
  %v2384 = vadd.f32 %v1795, %v2383
  %v2385 = vpop.f32.mrb[0].mxu0
  %v2386 = vpop.f32.mrb[0].mxu0
  %v2387 = vadd.f32 %v1795, %v2386
  %v2388 = vpop.f32.mrb[0].mxu0
  %2389 = vdwg.mxu0
  %2390 = vmatprep.subr.bf16.mxu0 0
  %2391 = vmatpush1.bf16.msra.mxu0 %v2101
  %2392 = vmatprep.subr.bf16.mxu0 0
  %2393 = vmatpush1.bf16.msra.mxu0 %v2102
  %2394 = vmatprep.subr.bf16.mxu0 0
  %2395 = vmatpush1.bf16.msra.mxu0 %v2103
  %2396 = vmatprep.subr.bf16.mxu0 0
  %2397 = vmatpush1.bf16.msra.mxu0 %v2104
  %2398 = vmatprep.subr.bf16.mxu0 0
  %2399 = vmatpush1.bf16.msra.mxu0 %v2105
  %2400 = vmatprep.subr.bf16.mxu0 0
  %2401 = vmatpush1.bf16.msra.mxu0 %v2106
  %2402 = vmatprep.subr.bf16.mxu0 0
  %2403 = vmatpush1.bf16.msra.mxu0 %v2107
  %2404 = vmatprep.subr.bf16.mxu0 0
  %2405 = vmatpush1.bf16.msra.mxu0 %v2108
  %2406 = vmatprep.subr.bf16.mxu0 0
  %2407 = vmatpush1.bf16.msra.mxu0 %v2109
  %2408 = vmatprep.subr.bf16.mxu0 0
  %2409 = vmatpush1.bf16.msra.mxu0 %v2110
  %2410 = vmatprep.subr.bf16.mxu0 0
  %2411 = vmatpush1.bf16.msra.mxu0 %v2111
  %2412 = vmatprep.subr.bf16.mxu0 0
  %2413 = vmatpush1.bf16.msra.mxu0 %v2112
  %2414 = vmatprep.subr.bf16.mxu0 0
  %2415 = vmatpush1.bf16.msra.mxu0 %v2113
  %2416 = vmatprep.subr.bf16.mxu0 0
  %2417 = vmatpush1.bf16.msra.mxu0 %v2114
  %2418 = vmatprep.subr.bf16.mxu0 0
  %2419 = vmatpush1.bf16.msra.mxu0 %v2115
  %2420 = vmatprep.subr.bf16.mxu0 0
  %2421 = vmatpush1.bf16.msra.mxu0 %v2116
  %2422 = vmatprep.mubr.bf16.mxu0 %v1505
  %2423 = vmatmul.mubr.bf16.gmra.mrb[0].mxu0 %v1504
  %v2424 = vpop.f32.mrb[0].mxu0
  %v2425 = vadd.f32 %v2264, %v2424
  %v2426 = vpop.f32.mrb[0].mxu0
  %v2427 = vpop.f32.mrb[0].mxu0
  %v2428 = vadd.f32 %v2267, %v2427
  %v2429 = vpop.f32.mrb[0].mxu0
  %2430 = vmatprep.mubr.bf16.mxu0 %v1514
  %2431 = vmatmul.mubr.bf16.gmra.mrb[0].mxu0 %v1513
  %v2432 = vpop.f32.mrb[0].mxu0
  %v2433 = vadd.f32 %v2272, %v2432
  %v2434 = vpop.f32.mrb[0].mxu0
  %v2435 = vpop.f32.mrb[0].mxu0
  %v2436 = vadd.f32 %v2275, %v2435
  %v2437 = vpop.f32.mrb[0].mxu0
  %2438 = vmatprep.mubr.bf16.mxu0 %v1523
  %2439 = vmatmul.mubr.bf16.gmra.mrb[0].mxu0 %v1522
  %v2440 = vpop.f32.mrb[0].mxu0
  %v2441 = vadd.f32 %v2280, %v2440
  %v2442 = vpop.f32.mrb[0].mxu0
  %v2443 = vpop.f32.mrb[0].mxu0
  %v2444 = vadd.f32 %v2283, %v2443
  %v2445 = vpop.f32.mrb[0].mxu0
  %2446 = vmatprep.mubr.bf16.mxu0 %v1532
  %2447 = vmatmul.mubr.bf16.gmra.mrb[0].mxu0 %v1531
  %v2448 = vpop.f32.mrb[0].mxu0
  %v2449 = vadd.f32 %v2288, %v2448
  %v2450 = vpop.f32.mrb[0].mxu0
  %v2451 = vpop.f32.mrb[0].mxu0
  %v2452 = vadd.f32 %v2291, %v2451
  %v2453 = vpop.f32.mrb[0].mxu0
  %2454 = vmatprep.mubr.bf16.mxu0 %v1541
  %2455 = vmatmul.mubr.bf16.gmra.mrb[0].mxu0 %v1540
  %v2456 = vpop.f32.mrb[0].mxu0
  %v2457 = vadd.f32 %v2296, %v2456
  %v2458 = vpop.f32.mrb[0].mxu0
  %v2459 = vpop.f32.mrb[0].mxu0
  %v2460 = vadd.f32 %v2299, %v2459
  %v2461 = vpop.f32.mrb[0].mxu0
  %2462 = vmatprep.mubr.bf16.mxu0 %v1550
  %2463 = vmatmul.mubr.bf16.gmra.mrb[0].mxu0 %v1549
  %v2464 = vpop.f32.mrb[0].mxu0
  %v2465 = vadd.f32 %v2304, %v2464
  %v2466 = vpop.f32.mrb[0].mxu0
  %v2467 = vpop.f32.mrb[0].mxu0
  %v2468 = vadd.f32 %v2307, %v2467
  %v2469 = vpop.f32.mrb[0].mxu0
  %2470 = vmatprep.mubr.bf16.mxu0 %v1559
  %2471 = vmatmul.mubr.bf16.gmra.mrb[0].mxu0 %v1558
  %v2472 = vpop.f32.mrb[0].mxu0
  %v2473 = vadd.f32 %v2312, %v2472
  %v2474 = vpop.f32.mrb[0].mxu0
  %v2475 = vpop.f32.mrb[0].mxu0
  %v2476 = vadd.f32 %v2315, %v2475
  %v2477 = vpop.f32.mrb[0].mxu0
  %2478 = vmatprep.mubr.bf16.mxu0 %v1568
  %2479 = vmatmul.mubr.bf16.gmra.mrb[0].mxu0 %v1567
  %v2480 = vpop.f32.mrb[0].mxu0
  %v2481 = vadd.f32 %v2320, %v2480
  %v2482 = vpop.f32.mrb[0].mxu0
  %v2483 = vpop.f32.mrb[0].mxu0
  %v2484 = vadd.f32 %v2323, %v2483
  %v2485 = vpop.f32.mrb[0].mxu0
  %2486 = vmatprep.mubr.bf16.mxu0 %v1577
  %2487 = vmatmul.mubr.bf16.gmra.mrb[0].mxu0 %v1576
  %v2488 = vpop.f32.mrb[0].mxu0
  %v2489 = vadd.f32 %v2328, %v2488
  %v2490 = vpop.f32.mrb[0].mxu0
  %v2491 = vpop.f32.mrb[0].mxu0
  %v2492 = vadd.f32 %v2331, %v2491
  %v2493 = vpop.f32.mrb[0].mxu0
  %2494 = vmatprep.mubr.bf16.mxu0 %v1586
  %2495 = vmatmul.mubr.bf16.gmra.mrb[0].mxu0 %v1585
  %v2496 = vpop.f32.mrb[0].mxu0
  %v2497 = vadd.f32 %v2336, %v2496
  %v2498 = vpop.f32.mrb[0].mxu0
  %v2499 = vpop.f32.mrb[0].mxu0
  %v2500 = vadd.f32 %v2339, %v2499
  %v2501 = vpop.f32.mrb[0].mxu0
  %2502 = vmatprep.mubr.bf16.mxu0 %v1595
  %2503 = vmatmul.mubr.bf16.gmra.mrb[0].mxu0 %v1594
  %v2504 = vpop.f32.mrb[0].mxu0
  %v2505 = vadd.f32 %v2344, %v2504
  %v2506 = vpop.f32.mrb[0].mxu0
  %v2507 = vpop.f32.mrb[0].mxu0
  %v2508 = vadd.f32 %v2347, %v2507
  %v2509 = vpop.f32.mrb[0].mxu0
  %2510 = vmatprep.mubr.bf16.mxu0 %v1604
  %2511 = vmatmul.mubr.bf16.gmra.mrb[0].mxu0 %v1603
  %v2512 = vpop.f32.mrb[0].mxu0
  %v2513 = vadd.f32 %v2352, %v2512
  %v2514 = vpop.f32.mrb[0].mxu0
  %v2515 = vpop.f32.mrb[0].mxu0
  %v2516 = vadd.f32 %v2355, %v2515
  %v2517 = vpop.f32.mrb[0].mxu0
  %2518 = vmatprep.mubr.bf16.mxu0 %v1613
  %2519 = vmatmul.mubr.bf16.gmra.mrb[0].mxu0 %v1612
  %v2520 = vpop.f32.mrb[0].mxu0
  %v2521 = vadd.f32 %v2360, %v2520
  %v2522 = vpop.f32.mrb[0].mxu0
  %v2523 = vpop.f32.mrb[0].mxu0
  %v2524 = vadd.f32 %v2363, %v2523
  %v2525 = vpop.f32.mrb[0].mxu0
  %2526 = vmatprep.mubr.bf16.mxu0 %v1622
  %2527 = vmatmul.mubr.bf16.gmra.mrb[0].mxu0 %v1621
  %v2528 = vpop.f32.mrb[0].mxu0
  %v2529 = vadd.f32 %v2368, %v2528
  %v2530 = vpop.f32.mrb[0].mxu0
  %v2531 = vpop.f32.mrb[0].mxu0
  %v2532 = vadd.f32 %v2371, %v2531
  %v2533 = vpop.f32.mrb[0].mxu0
  %2534 = vmatprep.mubr.bf16.mxu0 %v1631
  %2535 = vmatmul.mubr.bf16.gmra.mrb[0].mxu0 %v1630
  %v2536 = vpop.f32.mrb[0].mxu0
  %v2537 = vadd.f32 %v2376, %v2536
  %v2538 = vpop.f32.mrb[0].mxu0
  %v2539 = vpop.f32.mrb[0].mxu0
  %v2540 = vadd.f32 %v2379, %v2539
  %v2541 = vpop.f32.mrb[0].mxu0
  %2542 = vmatprep.mubr.bf16.mxu0 %v1640
  %2543 = vmatmul.mubr.bf16.gmra.mrb[0].mxu0 %v1639
  %v2544 = vpop.f32.mrb[0].mxu0
  %v2545 = vadd.f32 %v2384, %v2544
  %v2546 = vpop.f32.mrb[0].mxu0
  %v2547 = vpop.f32.mrb[0].mxu0
  %v2548 = vadd.f32 %v2387, %v2547
  %v2549 = vpop.f32.mrb[0].mxu0
  %2550 = vdwg.mxu0
  %2551 = vmatprep.subr.bf16.mxu0 0
  %2552 = vmatpush1.bf16.msra.mxu0 %v2117
  %2553 = vmatprep.subr.bf16.mxu0 0
  %2554 = vmatpush1.bf16.msra.mxu0 %v2118
  %2555 = vmatprep.subr.bf16.mxu0 0
  %2556 = vmatpush1.bf16.msra.mxu0 %v2119
  %2557 = vmatprep.subr.bf16.mxu0 0
  %2558 = vmatpush1.bf16.msra.mxu0 %v2120
  %2559 = vmatprep.subr.bf16.mxu0 0
  %2560 = vmatpush1.bf16.msra.mxu0 %v2121
  %2561 = vmatprep.subr.bf16.mxu0 0
  %2562 = vmatpush1.bf16.msra.mxu0 %v2122
  %2563 = vmatprep.subr.bf16.mxu0 0
  %2564 = vmatpush1.bf16.msra.mxu0 %v2123
  %2565 = vmatprep.subr.bf16.mxu0 0
  %2566 = vmatpush1.bf16.msra.mxu0 %v2124
  %2567 = vmatprep.subr.bf16.mxu0 0
  %2568 = vmatpush1.bf16.msra.mxu0 %v2125
  %2569 = vmatprep.subr.bf16.mxu0 0
  %2570 = vmatpush1.bf16.msra.mxu0 %v2126
  %2571 = vmatprep.subr.bf16.mxu0 0
  %2572 = vmatpush1.bf16.msra.mxu0 %v2127
  %2573 = vmatprep.subr.bf16.mxu0 0
  %2574 = vmatpush1.bf16.msra.mxu0 %v2128
  %2575 = vmatprep.subr.bf16.mxu0 0
  %2576 = vmatpush1.bf16.msra.mxu0 %v2129
  %2577 = vmatprep.subr.bf16.mxu0 0
  %2578 = vmatpush1.bf16.msra.mxu0 %v2130
  %2579 = vmatprep.subr.bf16.mxu0 0
  %2580 = vmatpush1.bf16.msra.mxu0 %v2131
  %2581 = vmatprep.subr.bf16.mxu0 0
  %2582 = vmatpush1.bf16.msra.mxu0 %v2132
  %2583 = vmatprep.mubr.bf16.mxu0 %v1507
  %2584 = vmatmul.mubr.bf16.gmra.mrb[0].mxu0 %v1506
  %v2585 = vpop.f32.mrb[0].mxu0
  %v2586 = vadd.f32 %v2425, %v2585
  %v2587 = vpop.f32.mrb[0].mxu0
  %v2588 = vpop.f32.mrb[0].mxu0
  %v2589 = vadd.f32 %v2428, %v2588
  %v2590 = vpop.f32.mrb[0].mxu0
  %2591 = vmatprep.mubr.bf16.mxu0 %v1516
  %2592 = vmatmul.mubr.bf16.gmra.mrb[0].mxu0 %v1515
  %v2593 = vpop.f32.mrb[0].mxu0
  %v2594 = vadd.f32 %v2433, %v2593
  %v2595 = vpop.f32.mrb[0].mxu0
  %v2596 = vpop.f32.mrb[0].mxu0
  %v2597 = vadd.f32 %v2436, %v2596
  %v2598 = vpop.f32.mrb[0].mxu0
  %2599 = vmatprep.mubr.bf16.mxu0 %v1525
  %2600 = vmatmul.mubr.bf16.gmra.mrb[0].mxu0 %v1524
  %v2601 = vpop.f32.mrb[0].mxu0
  %v2602 = vadd.f32 %v2441, %v2601
  %v2603 = vpop.f32.mrb[0].mxu0
  %v2604 = vpop.f32.mrb[0].mxu0
  %v2605 = vadd.f32 %v2444, %v2604
  %v2606 = vpop.f32.mrb[0].mxu0
  %2607 = vmatprep.mubr.bf16.mxu0 %v1534
  %2608 = vmatmul.mubr.bf16.gmra.mrb[0].mxu0 %v1533
  %v2609 = vpop.f32.mrb[0].mxu0
  %v2610 = vadd.f32 %v2449, %v2609
  %v2611 = vpop.f32.mrb[0].mxu0
  %v2612 = vpop.f32.mrb[0].mxu0
  %v2613 = vadd.f32 %v2452, %v2612
  %v2614 = vpop.f32.mrb[0].mxu0
  %2615 = vmatprep.mubr.bf16.mxu0 %v1543
  %2616 = vmatmul.mubr.bf16.gmra.mrb[0].mxu0 %v1542
  %v2617 = vpop.f32.mrb[0].mxu0
  %v2618 = vadd.f32 %v2457, %v2617
  %v2619 = vpop.f32.mrb[0].mxu0
  %v2620 = vpop.f32.mrb[0].mxu0
  %v2621 = vadd.f32 %v2460, %v2620
  %v2622 = vpop.f32.mrb[0].mxu0
  %2623 = vmatprep.mubr.bf16.mxu0 %v1552
  %2624 = vmatmul.mubr.bf16.gmra.mrb[0].mxu0 %v1551
  %v2625 = vpop.f32.mrb[0].mxu0
  %v2626 = vadd.f32 %v2465, %v2625
  %v2627 = vpop.f32.mrb[0].mxu0
  %v2628 = vpop.f32.mrb[0].mxu0
  %v2629 = vadd.f32 %v2468, %v2628
  %v2630 = vpop.f32.mrb[0].mxu0
  %2631 = vmatprep.mubr.bf16.mxu0 %v1561
  %2632 = vmatmul.mubr.bf16.gmra.mrb[0].mxu0 %v1560
  %v2633 = vpop.f32.mrb[0].mxu0
  %v2634 = vadd.f32 %v2473, %v2633
  %v2635 = vpop.f32.mrb[0].mxu0
  %v2636 = vpop.f32.mrb[0].mxu0
  %v2637 = vadd.f32 %v2476, %v2636
  %v2638 = vpop.f32.mrb[0].mxu0
  %2639 = vmatprep.mubr.bf16.mxu0 %v1570
  %2640 = vmatmul.mubr.bf16.gmra.mrb[0].mxu0 %v1569
  %v2641 = vpop.f32.mrb[0].mxu0
  %v2642 = vadd.f32 %v2481, %v2641
  %v2643 = vpop.f32.mrb[0].mxu0
  %v2644 = vpop.f32.mrb[0].mxu0
  %v2645 = vadd.f32 %v2484, %v2644
  %v2646 = vpop.f32.mrb[0].mxu0
  %2647 = vmatprep.mubr.bf16.mxu0 %v1579
  %2648 = vmatmul.mubr.bf16.gmra.mrb[0].mxu0 %v1578
  %v2649 = vpop.f32.mrb[0].mxu0
  %v2650 = vadd.f32 %v2489, %v2649
  %v2651 = vpop.f32.mrb[0].mxu0
  %v2652 = vpop.f32.mrb[0].mxu0
  %v2653 = vadd.f32 %v2492, %v2652
  %v2654 = vpop.f32.mrb[0].mxu0
  %2655 = vmatprep.mubr.bf16.mxu0 %v1588
  %2656 = vmatmul.mubr.bf16.gmra.mrb[0].mxu0 %v1587
  %v2657 = vpop.f32.mrb[0].mxu0
  %v2658 = vadd.f32 %v2497, %v2657
  %v2659 = vpop.f32.mrb[0].mxu0
  %v2660 = vpop.f32.mrb[0].mxu0
  %v2661 = vadd.f32 %v2500, %v2660
  %v2662 = vpop.f32.mrb[0].mxu0
  %2663 = vmatprep.mubr.bf16.mxu0 %v1597
  %2664 = vmatmul.mubr.bf16.gmra.mrb[0].mxu0 %v1596
  %v2665 = vpop.f32.mrb[0].mxu0
  %v2666 = vadd.f32 %v2505, %v2665
  %v2667 = vpop.f32.mrb[0].mxu0
  %v2668 = vpop.f32.mrb[0].mxu0
  %v2669 = vadd.f32 %v2508, %v2668
  %v2670 = vpop.f32.mrb[0].mxu0
  %2671 = vmatprep.mubr.bf16.mxu0 %v1606
  %2672 = vmatmul.mubr.bf16.gmra.mrb[0].mxu0 %v1605
  %v2673 = vpop.f32.mrb[0].mxu0
  %v2674 = vadd.f32 %v2513, %v2673
  %v2675 = vpop.f32.mrb[0].mxu0
  %v2676 = vpop.f32.mrb[0].mxu0
  %v2677 = vadd.f32 %v2516, %v2676
  %v2678 = vpop.f32.mrb[0].mxu0
  %2679 = vmatprep.mubr.bf16.mxu0 %v1615
  %2680 = vmatmul.mubr.bf16.gmra.mrb[0].mxu0 %v1614
  %v2681 = vpop.f32.mrb[0].mxu0
  %v2682 = vadd.f32 %v2521, %v2681
  %v2683 = vpop.f32.mrb[0].mxu0
  %v2684 = vpop.f32.mrb[0].mxu0
  %v2685 = vadd.f32 %v2524, %v2684
  %v2686 = vpop.f32.mrb[0].mxu0
  %2687 = vmatprep.mubr.bf16.mxu0 %v1624
  %2688 = vmatmul.mubr.bf16.gmra.mrb[0].mxu0 %v1623
  %v2689 = vpop.f32.mrb[0].mxu0
  %v2690 = vadd.f32 %v2529, %v2689
  %v2691 = vpop.f32.mrb[0].mxu0
  %v2692 = vpop.f32.mrb[0].mxu0
  %v2693 = vadd.f32 %v2532, %v2692
  %v2694 = vpop.f32.mrb[0].mxu0
  %2695 = vmatprep.mubr.bf16.mxu0 %v1633
  %2696 = vmatmul.mubr.bf16.gmra.mrb[0].mxu0 %v1632
  %v2697 = vpop.f32.mrb[0].mxu0
  %v2698 = vadd.f32 %v2537, %v2697
  %v2699 = vpop.f32.mrb[0].mxu0
  %v2700 = vpop.f32.mrb[0].mxu0
  %v2701 = vadd.f32 %v2540, %v2700
  %v2702 = vpop.f32.mrb[0].mxu0
  %2703 = vmatprep.mubr.bf16.mxu0 %v1642
  %2704 = vmatmul.mubr.bf16.gmra.mrb[0].mxu0 %v1641
  %v2705 = vpop.f32.mrb[0].mxu0
  %v2706 = vadd.f32 %v2545, %v2705
  %v2707 = vpop.f32.mrb[0].mxu0
  %v2708 = vpop.f32.mrb[0].mxu0
  %v2709 = vadd.f32 %v2548, %v2708
  %v2710 = vpop.f32.mrb[0].mxu0
  %2711 = vdwg.mxu0
  %2712 = vmatprep.subr.bf16.mxu0 0
  %2713 = vmatpush1.bf16.msra.mxu0 %v2133
  %2714 = vmatprep.subr.bf16.mxu0 0
  %2715 = vmatpush1.bf16.msra.mxu0 %v2134
  %2716 = vmatprep.subr.bf16.mxu0 0
  %2717 = vmatpush1.bf16.msra.mxu0 %v2135
  %2718 = vmatprep.subr.bf16.mxu0 0
  %2719 = vmatpush1.bf16.msra.mxu0 %v2136
  %2720 = vmatprep.subr.bf16.mxu0 0
  %2721 = vmatpush1.bf16.msra.mxu0 %v2137
  %2722 = vmatprep.subr.bf16.mxu0 0
  %2723 = vmatpush1.bf16.msra.mxu0 %v2138
  %2724 = vmatprep.subr.bf16.mxu0 0
  %2725 = vmatpush1.bf16.msra.mxu0 %v2139
  %2726 = vmatprep.subr.bf16.mxu0 0
  %2727 = vmatpush1.bf16.msra.mxu0 %v2140
  %2728 = vmatprep.subr.bf16.mxu0 0
  %2729 = vmatpush1.bf16.msra.mxu0 %v2141
  %2730 = vmatprep.subr.bf16.mxu0 0
  %2731 = vmatpush1.bf16.msra.mxu0 %v2142
  %2732 = vmatprep.subr.bf16.mxu0 0
  %2733 = vmatpush1.bf16.msra.mxu0 %v2143
  %2734 = vmatprep.subr.bf16.mxu0 0
  %2735 = vmatpush1.bf16.msra.mxu0 %v2144
  %2736 = vmatprep.subr.bf16.mxu0 0
  %2737 = vmatpush1.bf16.msra.mxu0 %v2145
  %2738 = vmatprep.subr.bf16.mxu0 0
  %2739 = vmatpush1.bf16.msra.mxu0 %v2146
  %2740 = vmatprep.subr.bf16.mxu0 0
  %2741 = vmatpush1.bf16.msra.mxu0 %v2147
  %2742 = vmatprep.subr.bf16.mxu0 0
  %2743 = vmatpush1.bf16.msra.mxu0 %v2148
  %2744 = vmatprep.mubr.bf16.mxu0 %v1509
  %2745 = vmatmul.mubr.bf16.gmra.mrb[0].mxu0 %v1508
  %v2746 = vpop.f32.mrb[0].mxu0
  %v2747 = vadd.f32 %v2586, %v2746
  %v2748 = vpop.f32.mrb[0].mxu0
  %v2749 = vpop.f32.mrb[0].mxu0
  %v2750 = vadd.f32 %v2589, %v2749
  %v2751 = vpop.f32.mrb[0].mxu0
  %2752 = vmatprep.mubr.bf16.mxu0 %v1518
  %2753 = vmatmul.mubr.bf16.gmra.mrb[0].mxu0 %v1517
  %v2754 = vpop.f32.mrb[0].mxu0
  %v2755 = vadd.f32 %v2594, %v2754
  %v2756 = vpop.f32.mrb[0].mxu0
  %v2757 = vpop.f32.mrb[0].mxu0
  %v2758 = vadd.f32 %v2597, %v2757
  %v2759 = vpop.f32.mrb[0].mxu0
  %2760 = vmatprep.mubr.bf16.mxu0 %v1527
  %2761 = vmatmul.mubr.bf16.gmra.mrb[0].mxu0 %v1526
  %v2762 = vpop.f32.mrb[0].mxu0
  %v2763 = vadd.f32 %v2602, %v2762
  %v2764 = vpop.f32.mrb[0].mxu0
  %v2765 = vpop.f32.mrb[0].mxu0
  %v2766 = vadd.f32 %v2605, %v2765
  %v2767 = vpop.f32.mrb[0].mxu0
  %2768 = vmatprep.mubr.bf16.mxu0 %v1536
  %2769 = vmatmul.mubr.bf16.gmra.mrb[0].mxu0 %v1535
  %v2770 = vpop.f32.mrb[0].mxu0
  %v2771 = vadd.f32 %v2610, %v2770
  %v2772 = vpop.f32.mrb[0].mxu0
  %v2773 = vpop.f32.mrb[0].mxu0
  %v2774 = vadd.f32 %v2613, %v2773
  %v2775 = vpop.f32.mrb[0].mxu0
  %2776 = vmatprep.mubr.bf16.mxu0 %v1545
  %2777 = vmatmul.mubr.bf16.gmra.mrb[0].mxu0 %v1544
  %v2778 = vpop.f32.mrb[0].mxu0
  %v2779 = vadd.f32 %v2618, %v2778
  %v2780 = vpop.f32.mrb[0].mxu0
  %v2781 = vpop.f32.mrb[0].mxu0
  %v2782 = vadd.f32 %v2621, %v2781
  %v2783 = vpop.f32.mrb[0].mxu0
  %2784 = vmatprep.mubr.bf16.mxu0 %v1554
  %2785 = vmatmul.mubr.bf16.gmra.mrb[0].mxu0 %v1553
  %v2786 = vpop.f32.mrb[0].mxu0
  %v2787 = vadd.f32 %v2626, %v2786
  %v2788 = vpop.f32.mrb[0].mxu0
  %v2789 = vpop.f32.mrb[0].mxu0
  %v2790 = vadd.f32 %v2629, %v2789
  %v2791 = vpop.f32.mrb[0].mxu0
  %2792 = vmatprep.mubr.bf16.mxu0 %v1563
  %2793 = vmatmul.mubr.bf16.gmra.mrb[0].mxu0 %v1562
  %v2794 = vpop.f32.mrb[0].mxu0
  %v2795 = vadd.f32 %v2634, %v2794
  %v2796 = vpop.f32.mrb[0].mxu0
  %v2797 = vpop.f32.mrb[0].mxu0
  %v2798 = vadd.f32 %v2637, %v2797
  %v2799 = vpop.f32.mrb[0].mxu0
  %2800 = vmatprep.mubr.bf16.mxu0 %v1572
  %2801 = vmatmul.mubr.bf16.gmra.mrb[0].mxu0 %v1571
  %v2802 = vpop.f32.mrb[0].mxu0
  %v2803 = vadd.f32 %v2642, %v2802
  %v2804 = vpop.f32.mrb[0].mxu0
  %v2805 = vpop.f32.mrb[0].mxu0
  %v2806 = vadd.f32 %v2645, %v2805
  %v2807 = vpop.f32.mrb[0].mxu0
  %2808 = vmatprep.mubr.bf16.mxu0 %v1581
  %2809 = vmatmul.mubr.bf16.gmra.mrb[0].mxu0 %v1580
  %v2810 = vpop.f32.mrb[0].mxu0
  %v2811 = vadd.f32 %v2650, %v2810
  %v2812 = vpop.f32.mrb[0].mxu0
  %v2813 = vpop.f32.mrb[0].mxu0
  %v2814 = vadd.f32 %v2653, %v2813
  %v2815 = vpop.f32.mrb[0].mxu0
  %2816 = vmatprep.mubr.bf16.mxu0 %v1590
  %2817 = vmatmul.mubr.bf16.gmra.mrb[0].mxu0 %v1589
  %v2818 = vpop.f32.mrb[0].mxu0
  %v2819 = vadd.f32 %v2658, %v2818
  %v2820 = vpop.f32.mrb[0].mxu0
  %v2821 = vpop.f32.mrb[0].mxu0
  %v2822 = vadd.f32 %v2661, %v2821
  %v2823 = vpop.f32.mrb[0].mxu0
  %2824 = vmatprep.mubr.bf16.mxu0 %v1599
  %2825 = vmatmul.mubr.bf16.gmra.mrb[0].mxu0 %v1598
  %v2826 = vpop.f32.mrb[0].mxu0
  %v2827 = vadd.f32 %v2666, %v2826
  %v2828 = vpop.f32.mrb[0].mxu0
  %v2829 = vpop.f32.mrb[0].mxu0
  %v2830 = vadd.f32 %v2669, %v2829
  %v2831 = vpop.f32.mrb[0].mxu0
  %2832 = vmatprep.mubr.bf16.mxu0 %v1608
  %2833 = vmatmul.mubr.bf16.gmra.mrb[0].mxu0 %v1607
  %v2834 = vpop.f32.mrb[0].mxu0
  %v2835 = vadd.f32 %v2674, %v2834
  %v2836 = vpop.f32.mrb[0].mxu0
  %v2837 = vpop.f32.mrb[0].mxu0
  %v2838 = vadd.f32 %v2677, %v2837
  %v2839 = vpop.f32.mrb[0].mxu0
  %2840 = vmatprep.mubr.bf16.mxu0 %v1617
  %2841 = vmatmul.mubr.bf16.gmra.mrb[0].mxu0 %v1616
  %v2842 = vpop.f32.mrb[0].mxu0
  %v2843 = vadd.f32 %v2682, %v2842
  %v2844 = vpop.f32.mrb[0].mxu0
  %v2845 = vpop.f32.mrb[0].mxu0
  %v2846 = vadd.f32 %v2685, %v2845
  %v2847 = vpop.f32.mrb[0].mxu0
  %2848 = vmatprep.mubr.bf16.mxu0 %v1626
  %2849 = vmatmul.mubr.bf16.gmra.mrb[0].mxu0 %v1625
  %v2850 = vpop.f32.mrb[0].mxu0
  %v2851 = vadd.f32 %v2690, %v2850
  %v2852 = vpop.f32.mrb[0].mxu0
  %v2853 = vpop.f32.mrb[0].mxu0
  %v2854 = vadd.f32 %v2693, %v2853
  %v2855 = vpop.f32.mrb[0].mxu0
  %2856 = vmatprep.mubr.bf16.mxu0 %v1635
  %2857 = vmatmul.mubr.bf16.gmra.mrb[0].mxu0 %v1634
  %v2858 = vpop.f32.mrb[0].mxu0
  %v2859 = vadd.f32 %v2698, %v2858
  %v2860 = vpop.f32.mrb[0].mxu0
  %v2861 = vpop.f32.mrb[0].mxu0
  %v2862 = vadd.f32 %v2701, %v2861
  %v2863 = vpop.f32.mrb[0].mxu0
  %2864 = vmatprep.mubr.bf16.mxu0 %v1644
  %2865 = vmatmul.mubr.bf16.gmra.mrb[0].mxu0 %v1643
  %v2866 = vpop.f32.mrb[0].mxu0
  %v2867 = vadd.f32 %v2706, %v2866
  %v2868 = vpop.f32.mrb[0].mxu0
  %v2869 = vpop.f32.mrb[0].mxu0
  %v2870 = vadd.f32 %v2709, %v2869
  %v2871 = vpop.f32.mrb[0].mxu0
  %2872 = vdwg.mxu0
  %2873 = vmatprep.subr.bf16.mxu0 0
  %2874 = vmatpush1.bf16.msra.mxu0 %v2149
  %2875 = vmatprep.subr.bf16.mxu0 0
  %2876 = vmatpush1.bf16.msra.mxu0 %v2150
  %2877 = vmatprep.subr.bf16.mxu0 0
  %2878 = vmatpush1.bf16.msra.mxu0 %v2151
  %2879 = vmatprep.subr.bf16.mxu0 0
  %2880 = vmatpush1.bf16.msra.mxu0 %v2152
  %2881 = vmatprep.subr.bf16.mxu0 0
  %2882 = vmatpush1.bf16.msra.mxu0 %v2153
  %2883 = vmatprep.subr.bf16.mxu0 0
  %2884 = vmatpush1.bf16.msra.mxu0 %v2154
  %2885 = vmatprep.subr.bf16.mxu0 0
  %2886 = vmatpush1.bf16.msra.mxu0 %v2155
  %2887 = vmatprep.subr.bf16.mxu0 0
  %2888 = vmatpush1.bf16.msra.mxu0 %v2156
  %2889 = vmatprep.subr.bf16.mxu0 0
  %2890 = vmatpush1.bf16.msra.mxu0 0
  %2891 = vmatprep.subr.bf16.mxu0 0
  %2892 = vmatpush1.bf16.msra.mxu0 0
  %2893 = vmatprep.subr.bf16.mxu0 0
  %2894 = vmatpush1.bf16.msra.mxu0 0
  %2895 = vmatprep.subr.bf16.mxu0 0
  %2896 = vmatpush1.bf16.msra.mxu0 0
  %2897 = vmatprep.subr.bf16.mxu0 0
  %2898 = vmatpush1.bf16.msra.mxu0 0
  %2899 = vmatprep.subr.bf16.mxu0 0
  %2900 = vmatpush1.bf16.msra.mxu0 0
  %2901 = vmatprep.subr.bf16.mxu0 0
  %2902 = vmatpush1.bf16.msra.mxu0 0
  %2903 = vmatprep.subr.bf16.mxu0 0
  %2904 = vmatpush1.bf16.msra.mxu0 0
  %2905 = vmatprep.mubr.bf16.mxu0 0
  %2906 = vmatmul.mubr.bf16.gmra.mrb[0].mxu0 %v1510
  %v2907 = vpop.f32.mrb[0].mxu0
  %v2908 = vadd.f32 %v2747, %v2907
  %v2909 = vpop.f32.mrb[0].mxu0
  %v2910 = vpop.f32.mrb[0].mxu0
  %v2911 = vadd.f32 %v2750, %v2910
  %v2912 = vpop.f32.mrb[0].mxu0
  %2913 = vmatprep.mubr.bf16.mxu0 0
  %2914 = vmatmul.mubr.bf16.gmra.mrb[0].mxu0 %v1519
  %v2915 = vpop.f32.mrb[0].mxu0
  %v2916 = vadd.f32 %v2755, %v2915
  %v2917 = vpop.f32.mrb[0].mxu0
  %v2918 = vpop.f32.mrb[0].mxu0
  %v2919 = vadd.f32 %v2758, %v2918
  %v2920 = vpop.f32.mrb[0].mxu0
  %2921 = vmatprep.mubr.bf16.mxu0 0
  %2922 = vmatmul.mubr.bf16.gmra.mrb[0].mxu0 %v1528
  %v2923 = vpop.f32.mrb[0].mxu0
  %v2924 = vadd.f32 %v2763, %v2923
  %v2925 = vpop.f32.mrb[0].mxu0
  %v2926 = vpop.f32.mrb[0].mxu0
  %v2927 = vadd.f32 %v2766, %v2926
  %v2928 = vpop.f32.mrb[0].mxu0
  %2929 = vmatprep.mubr.bf16.mxu0 0
  %2930 = vmatmul.mubr.bf16.gmra.mrb[0].mxu0 %v1537
  %v2931 = vpop.f32.mrb[0].mxu0
  %v2932 = vadd.f32 %v2771, %v2931
  %v2933 = vpop.f32.mrb[0].mxu0
  %v2934 = vpop.f32.mrb[0].mxu0
  %v2935 = vadd.f32 %v2774, %v2934
  %v2936 = vpop.f32.mrb[0].mxu0
  %2937 = vmatprep.mubr.bf16.mxu0 0
  %2938 = vmatmul.mubr.bf16.gmra.mrb[0].mxu0 %v1546
  %v2939 = vpop.f32.mrb[0].mxu0
  %v2940 = vadd.f32 %v2779, %v2939
  %v2941 = vpop.f32.mrb[0].mxu0
  %v2942 = vpop.f32.mrb[0].mxu0
  %v2943 = vadd.f32 %v2782, %v2942
  %v2944 = vpop.f32.mrb[0].mxu0
  %2945 = vmatprep.mubr.bf16.mxu0 0
  %2946 = vmatmul.mubr.bf16.gmra.mrb[0].mxu0 %v1555
  %v2947 = vpop.f32.mrb[0].mxu0
  %v2948 = vadd.f32 %v2787, %v2947
  %v2949 = vpop.f32.mrb[0].mxu0
  %v2950 = vpop.f32.mrb[0].mxu0
  %v2951 = vadd.f32 %v2790, %v2950
  %v2952 = vpop.f32.mrb[0].mxu0
  %2953 = vmatprep.mubr.bf16.mxu0 0
  %2954 = vmatmul.mubr.bf16.gmra.mrb[0].mxu0 %v1564
  %v2955 = vpop.f32.mrb[0].mxu0
  %v2956 = vadd.f32 %v2795, %v2955
  %v2957 = vpop.f32.mrb[0].mxu0
  %v2958 = vpop.f32.mrb[0].mxu0
  %v2959 = vadd.f32 %v2798, %v2958
  %v2960 = vpop.f32.mrb[0].mxu0
  %2961 = vmatprep.mubr.bf16.mxu0 0
  %2962 = vmatmul.mubr.bf16.gmra.mrb[0].mxu0 %v1573
  %v2963 = vpop.f32.mrb[0].mxu0
  %v2964 = vadd.f32 %v2803, %v2963
  %v2965 = vpop.f32.mrb[0].mxu0
  %v2966 = vpop.f32.mrb[0].mxu0
  %v2967 = vadd.f32 %v2806, %v2966
  %v2968 = vpop.f32.mrb[0].mxu0
  %2969 = vmatprep.mubr.bf16.mxu0 0
  %2970 = vmatmul.mubr.bf16.gmra.mrb[0].mxu0 %v1582
  %v2971 = vpop.f32.mrb[0].mxu0
  %v2972 = vadd.f32 %v2811, %v2971
  %v2973 = vpop.f32.mrb[0].mxu0
  %v2974 = vpop.f32.mrb[0].mxu0
  %v2975 = vadd.f32 %v2814, %v2974
  %v2976 = vpop.f32.mrb[0].mxu0
  %2977 = vmatprep.mubr.bf16.mxu0 0
  %2978 = vmatmul.mubr.bf16.gmra.mrb[0].mxu0 %v1591
  %v2979 = vpop.f32.mrb[0].mxu0
  %v2980 = vadd.f32 %v2819, %v2979
  %v2981 = vpop.f32.mrb[0].mxu0
  %v2982 = vpop.f32.mrb[0].mxu0
  %v2983 = vadd.f32 %v2822, %v2982
  %v2984 = vpop.f32.mrb[0].mxu0
  %2985 = vmatprep.mubr.bf16.mxu0 0
  %2986 = vmatmul.mubr.bf16.gmra.mrb[0].mxu0 %v1600
  %v2987 = vpop.f32.mrb[0].mxu0
  %v2988 = vadd.f32 %v2827, %v2987
  %v2989 = vpop.f32.mrb[0].mxu0
  %v2990 = vpop.f32.mrb[0].mxu0
  %v2991 = vadd.f32 %v2830, %v2990
  %v2992 = vpop.f32.mrb[0].mxu0
  %2993 = vmatprep.mubr.bf16.mxu0 0
  %2994 = vmatmul.mubr.bf16.gmra.mrb[0].mxu0 %v1609
  %v2995 = vpop.f32.mrb[0].mxu0
  %v2996 = vadd.f32 %v2835, %v2995
  %v2997 = vpop.f32.mrb[0].mxu0
  %v2998 = vpop.f32.mrb[0].mxu0
  %v2999 = vadd.f32 %v2838, %v2998
  %v3000 = vpop.f32.mrb[0].mxu0
  %3001 = vmatprep.mubr.bf16.mxu0 0
  %3002 = vmatmul.mubr.bf16.gmra.mrb[0].mxu0 %v1618
  %v3003 = vpop.f32.mrb[0].mxu0
  %v3004 = vadd.f32 %v2843, %v3003
  %v3005 = vpop.f32.mrb[0].mxu0
  %v3006 = vpop.f32.mrb[0].mxu0
  %v3007 = vadd.f32 %v2846, %v3006
  %v3008 = vpop.f32.mrb[0].mxu0
  %3009 = vmatprep.mubr.bf16.mxu0 0
  %3010 = vmatmul.mubr.bf16.gmra.mrb[0].mxu0 %v1627
  %v3011 = vpop.f32.mrb[0].mxu0
  %v3012 = vadd.f32 %v2851, %v3011
  %v3013 = vpop.f32.mrb[0].mxu0
  %v3014 = vpop.f32.mrb[0].mxu0
  %v3015 = vadd.f32 %v2854, %v3014
  %v3016 = vpop.f32.mrb[0].mxu0
  %3017 = vmatprep.mubr.bf16.mxu0 0
  %3018 = vmatmul.mubr.bf16.gmra.mrb[0].mxu0 %v1636
  %v3019 = vpop.f32.mrb[0].mxu0
  %v3020 = vadd.f32 %v2859, %v3019
  %v3021 = vpop.f32.mrb[0].mxu0
  %v3022 = vpop.f32.mrb[0].mxu0
  %v3023 = vadd.f32 %v2862, %v3022
  %v3024 = vpop.f32.mrb[0].mxu0
  %3025 = vmatprep.mubr.bf16.mxu0 0
  %3026 = vmatmul.mubr.bf16.gmra.mrb[0].mxu0 %v1645
  %v3027 = vpop.f32.mrb[0].mxu0
  %v3028 = vadd.f32 %v2867, %v3027
  %v3029 = vpop.f32.mrb[0].mxu0
  %v3030 = vpop.f32.mrb[0].mxu0
  %v3031 = vadd.f32 %v2870, %v3030
  %v3032 = vpop.f32.mrb[0].mxu0
  %3033 = vdwg.mxu0
  %v3034 = vmax.f32 %v2908, 0.0
  %v3035 = vmax.f32 %v2911, 0.0
  %v3036 = vmax.f32 %v2916, 0.0
  %v3037 = vmax.f32 %v2919, 0.0
  %v3038 = vmax.f32 %v2924, 0.0
  %v3039 = vmax.f32 %v2927, 0.0
  %v3040 = vmax.f32 %v2932, 0.0
  %v3041 = vmax.f32 %v2935, 0.0
  %v3042 = vmax.f32 %v2940, 0.0
  %v3043 = vmax.f32 %v2943, 0.0
  %v3044 = vmax.f32 %v2948, 0.0
  %v3045 = vmax.f32 %v2951, 0.0
  %v3046 = vmax.f32 %v2956, 0.0
  %v3047 = vmax.f32 %v2959, 0.0
  %v3048 = vmax.f32 %v2964, 0.0
  %v3049 = vmax.f32 %v2967, 0.0
  %v3050 = vmax.f32 %v2972, 0.0
  %v3051 = vmax.f32 %v2975, 0.0
  %v3052 = vmax.f32 %v2980, 0.0
  %v3053 = vmax.f32 %v2983, 0.0
  %v3054 = vmax.f32 %v2988, 0.0
  %v3055 = vmax.f32 %v2991, 0.0
  %v3056 = vmax.f32 %v2996, 0.0
  %v3057 = vmax.f32 %v2999, 0.0
  %v3058 = vmax.f32 %v3004, 0.0
  %v3059 = vmax.f32 %v3007, 0.0
  %v3060 = vmax.f32 %v3012, 0.0
  %v3061 = vmax.f32 %v3015, 0.0
  %v3062 = vmax.f32 %v3020, 0.0
  %v3063 = vmax.f32 %v3023, 0.0
  %v3064 = vmax.f32 %v3028, 0.0
  %v3065 = vmax.f32 %v3031, 0.0
  %v3066 = vpack.c.bf16 %v3035, %v3034
  %v3067 = vpack.c.bf16 %v3037, %v3036
  %v3068 = vpack.c.bf16 %v3039, %v3038
  %v3069 = vpack.c.bf16 %v3041, %v3040
  %v3070 = vpack.c.bf16 %v3043, %v3042
  %v3071 = vpack.c.bf16 %v3045, %v3044
  %v3072 = vpack.c.bf16 %v3047, %v3046
  %v3073 = vpack.c.bf16 %v3049, %v3048
  %v3074 = vpack.c.bf16 %v3051, %v3050
  %v3075 = vpack.c.bf16 %v3053, %v3052
  %v3076 = vpack.c.bf16 %v3055, %v3054
  %v3077 = vpack.c.bf16 %v3057, %v3056
  %v3078 = vpack.c.bf16 %v3059, %v3058
  %v3079 = vpack.c.bf16 %v3061, %v3060
  %v3080 = vpack.c.bf16 %v3063, %v3062
  %v3081 = vpack.c.bf16 %v3065, %v3064
  %v3082 = vld [vmem:[%s5] sm:$0xff]
  %v3083 = vld [vmem:[%s5 + $0x8] sm:$0xff]
  %v3084 = vld [vmem:[%s5 + $0x10] sm:$0xff]
  %v3085 = vld [vmem:[%s5 + $0x18] sm:$0xff]
  %v3086 = vld [vmem:[%s5 + $0x20] sm:$0xff]
  %v3087 = vld [vmem:[%s5 + $0x28] sm:$0xff]
  %v3088 = vld [vmem:[%s5 + $0x30] sm:$0xff]
  %v3089 = vld [vmem:[%s5 + $0x38] sm:$0xff]
  %v3090 = vld [vmem:[%s5 + $0x40] sm:$0xff]
  %v3091 = vld [vmem:[%s5 + $0x48] sm:$0xff]
  %v3092 = vld [vmem:[%s5 + $0x50] sm:$0xff]
  %v3093 = vld [vmem:[%s5 + $0x58] sm:$0xff]
  %v3094 = vld [vmem:[%s5 + $0x60] sm:$0xff]
  %v3095 = vld [vmem:[%s5 + $0x68] sm:$0xff]
  %v3096 = vld [vmem:[%s5 + $0x70] sm:$0xff]
  %v3097 = vld [vmem:[%s5 + $0x78] sm:$0xff]
  %v3098 = vld [vmem:[%s5 + $0x80] sm:$0xff]
  %v3099 = vld [vmem:[%s5 + $0x88] sm:$0xff]
  %v3100 = vld [vmem:[%s5 + $0x90] sm:$0xff]
  %v3101 = vld [vmem:[%s5 + $0x98] sm:$0xff]
  %v3102 = vld [vmem:[%s5 + $0xa0] sm:$0xff]
  %v3103 = vld [vmem:[%s5 + $0xa8] sm:$0xff]
  %v3104 = vld [vmem:[%s5 + $0xb0] sm:$0xff]
  %v3105 = vld [vmem:[%s5 + $0xb8] sm:$0xff]
  %v3106 = vld [vmem:[%s5 + $0xc0] sm:$0xff]
  %v3107 = vld [vmem:[%s5 + $0xc8] sm:$0xff]
  %v3108 = vld [vmem:[%s5 + $0xd0] sm:$0xff]
  %v3109 = vld [vmem:[%s5 + $0xd8] sm:$0xff]
  %v3110 = vld [vmem:[%s5 + $0xe0] sm:$0xff]
  %v3111 = vld [vmem:[%s5 + $0xe8] sm:$0xff]
  %v3112 = vld [vmem:[%s5 + $0xf0] sm:$0xff]
  %v3113 = vld [vmem:[%s5 + $0xf8] sm:$0xff]
  %v3114 = vld [vmem:[%s6] sm:$0xf]
  %v3116 = vlaneseq
  %v3117 = vshrl.u32 %v3116, 7
  %v3118 = vsub.s32 0, %v3117
  %v3119 = vrot.slane %v3114, %v3118
  %v3120 = vlaneseq
  %v3121 = vshrl.u32 %v3120, 7
  %v3122 = vsub.s32 1, %v3121
  %v3123 = vrot.slane %v3114, %v3122
  %v3124 = vlaneseq
  %v3125 = vshrl.u32 %v3124, 7
  %v3126 = vsub.s32 2, %v3125
  %v3127 = vrot.slane %v3114, %v3126
  %v3128 = vlaneseq
  %v3129 = vshrl.u32 %v3128, 7
  %v3130 = vsub.s32 3, %v3129
  %v3131 = vrot.slane %v3114, %v3130
  %v3168 = vunpack.c.l.b16 %v3082
  %v3169 = vunpack.c.h.b16 %v3082
  %v3170 = vunpack.c.l.b16 %v3083
  %v3171 = vunpack.c.h.b16 %v3083
  %v3172 = vunpack.c.l.b16 %v3084
  %v3173 = vunpack.c.h.b16 %v3084
  %v3174 = vunpack.c.l.b16 %v3085
  %v3175 = vunpack.c.h.b16 %v3085
  %v3176 = vunpack.c.l.b16 %v3086
  %v3177 = vunpack.c.h.b16 %v3086
  %v3178 = vunpack.c.l.b16 %v3087
  %v3179 = vunpack.c.h.b16 %v3087
  %v3180 = vunpack.c.l.b16 %v3088
  %v3181 = vunpack.c.h.b16 %v3088
  %v3182 = vunpack.c.l.b16 %v3089
  %v3183 = vunpack.c.h.b16 %v3089
  %v3184 = vunpack.c.l.b16 %v3090
  %v3185 = vunpack.c.h.b16 %v3090
  %v3186 = vunpack.c.l.b16 %v3091
  %v3187 = vunpack.c.h.b16 %v3091
  %v3188 = vunpack.c.l.b16 %v3092
  %v3189 = vunpack.c.h.b16 %v3092
  %v3190 = vunpack.c.l.b16 %v3093
  %v3191 = vunpack.c.h.b16 %v3093
  %v3192 = vunpack.c.l.b16 %v3094
  %v3193 = vunpack.c.h.b16 %v3094
  %v3194 = vunpack.c.l.b16 %v3095
  %v3195 = vunpack.c.h.b16 %v3095
  %v3196 = vunpack.c.l.b16 %v3096
  %v3197 = vunpack.c.h.b16 %v3096
  %v3198 = vunpack.c.l.b16 %v3097
  %v3199 = vunpack.c.h.b16 %v3097
  %v3200 = vunpack.c.l.b16 %v3098
  %v3201 = vunpack.c.h.b16 %v3098
  %v3202 = vunpack.c.l.b16 %v3099
  %v3203 = vunpack.c.h.b16 %v3099
  %v3204 = vunpack.c.l.b16 %v3100
  %v3205 = vunpack.c.h.b16 %v3100
  %v3206 = vunpack.c.l.b16 %v3101
  %v3207 = vunpack.c.h.b16 %v3101
  %v3208 = vunpack.c.l.b16 %v3102
  %v3209 = vunpack.c.h.b16 %v3102
  %v3210 = vunpack.c.l.b16 %v3103
  %v3211 = vunpack.c.h.b16 %v3103
  %v3212 = vunpack.c.l.b16 %v3104
  %v3213 = vunpack.c.h.b16 %v3104
  %v3214 = vunpack.c.l.b16 %v3105
  %v3215 = vunpack.c.h.b16 %v3105
  %v3216 = vunpack.c.l.b16 %v3106
  %v3217 = vunpack.c.h.b16 %v3106
  %v3218 = vunpack.c.l.b16 %v3107
  %v3219 = vunpack.c.h.b16 %v3107
  %v3220 = vunpack.c.l.b16 %v3108
  %v3221 = vunpack.c.h.b16 %v3108
  %v3222 = vunpack.c.l.b16 %v3109
  %v3223 = vunpack.c.h.b16 %v3109
  %v3224 = vunpack.c.l.b16 %v3110
  %v3225 = vunpack.c.h.b16 %v3110
  %v3226 = vunpack.c.l.b16 %v3111
  %v3227 = vunpack.c.h.b16 %v3111
  %v3228 = vunpack.c.l.b16 %v3112
  %v3229 = vunpack.c.h.b16 %v3112
  %v3230 = vunpack.c.l.b16 %v3113
  %v3231 = vunpack.c.h.b16 %v3113
  %v3232 = vpack.c.b16 %v3172, %v3168
  %v3233 = vpack.c.b16 %v3173, %v3169
  %v3234 = vpack.c.b16 %v3174, %v3170
  %v3235 = vpack.c.b16 %v3175, %v3171
  %v3236 = vpack.c.b16 %v3180, %v3176
  %v3237 = vpack.c.b16 %v3181, %v3177
  %v3238 = vpack.c.b16 %v3182, %v3178
  %v3239 = vpack.c.b16 %v3183, %v3179
  %v3240 = vpack.c.b16 %v3188, %v3184
  %v3241 = vpack.c.b16 %v3189, %v3185
  %v3242 = vpack.c.b16 %v3190, %v3186
  %v3243 = vpack.c.b16 %v3191, %v3187
  %v3244 = vpack.c.b16 %v3196, %v3192
  %v3245 = vpack.c.b16 %v3197, %v3193
  %v3246 = vpack.c.b16 %v3198, %v3194
  %v3247 = vpack.c.b16 %v3199, %v3195
  %v3248 = vpack.c.b16 %v3204, %v3200
  %v3249 = vpack.c.b16 %v3205, %v3201
  %v3250 = vpack.c.b16 %v3206, %v3202
  %v3251 = vpack.c.b16 %v3207, %v3203
  %v3252 = vpack.c.b16 %v3212, %v3208
  %v3253 = vpack.c.b16 %v3213, %v3209
  %v3254 = vpack.c.b16 %v3214, %v3210
  %v3255 = vpack.c.b16 %v3215, %v3211
  %v3256 = vpack.c.b16 %v3220, %v3216
  %v3257 = vpack.c.b16 %v3221, %v3217
  %v3258 = vpack.c.b16 %v3222, %v3218
  %v3259 = vpack.c.b16 %v3223, %v3219
  %v3260 = vpack.c.b16 %v3228, %v3224
  %v3261 = vpack.c.b16 %v3229, %v3225
  %v3262 = vpack.c.b16 %v3230, %v3226
  %v3263 = vpack.c.b16 %v3231, %v3227
  %3296 = vmatprep.subr.bf16.mxu0 %v3233
  %3297 = vmatpush1.bf16.msra.mxu0 %v3232
  %3298 = vmatprep.subr.bf16.mxu0 %v3237
  %3299 = vmatpush1.bf16.msra.mxu0 %v3236
  %3300 = vmatprep.subr.bf16.mxu0 %v3241
  %3301 = vmatpush1.bf16.msra.mxu0 %v3240
  %3302 = vmatprep.subr.bf16.mxu0 %v3245
  %3303 = vmatpush1.bf16.msra.mxu0 %v3244
  %3304 = vmatprep.subr.bf16.mxu0 %v3249
  %3305 = vmatpush1.bf16.msra.mxu0 %v3248
  %3306 = vmatprep.subr.bf16.mxu0 %v3253
  %3307 = vmatpush1.bf16.msra.mxu0 %v3252
  %3308 = vmatprep.subr.bf16.mxu0 %v3257
  %3309 = vmatpush1.bf16.msra.mxu0 %v3256
  %3310 = vmatprep.subr.bf16.mxu0 %v3261
  %3311 = vmatpush1.bf16.msra.mxu0 %v3260
  %3312 = vmatprep.subr.bf16.mxu0 0
  %3313 = vmatpush1.bf16.msra.mxu0 0
  %3314 = vmatprep.subr.bf16.mxu0 0
  %3315 = vmatpush1.bf16.msra.mxu0 0
  %3316 = vmatprep.subr.bf16.mxu0 0
  %3317 = vmatpush1.bf16.msra.mxu0 0
  %3318 = vmatprep.subr.bf16.mxu0 0
  %3319 = vmatpush1.bf16.msra.mxu0 0
  %3320 = vmatprep.subr.bf16.mxu0 0
  %3321 = vmatpush1.bf16.msra.mxu0 0
  %3322 = vmatprep.subr.bf16.mxu0 0
  %3323 = vmatpush1.bf16.msra.mxu0 0
  %3324 = vmatprep.subr.bf16.mxu0 0
  %3325 = vmatpush1.bf16.msra.mxu0 0
  %3326 = vmatprep.subr.bf16.mxu0 0
  %3327 = vmatpush1.bf16.msra.mxu0 0
  %3328 = vmatprep.mubr.bf16.mxu0 0
  %3329 = vmatmul.mubr.bf16.gmra.mrb[0].mxu0 %v3066
  %v3330 = vpop.f32.mrb[0].mxu0
  %v3331 = vadd.f32 %v3119, %v3330
  %v3332 = vpop.f32.mrb[0].mxu0
  %v3333 = vadd.f32 %v3123, %v3332
  %v3334 = vpop.f32.mrb[0].mxu0
  %v3335 = vadd.f32 %v3119, %v3334
  %v3336 = vpop.f32.mrb[0].mxu0
  %v3337 = vadd.f32 %v3123, %v3336
  %3338 = vmatprep.mubr.bf16.mxu0 0
  %3339 = vmatmul.mubr.bf16.gmra.mrb[0].mxu0 %v3067
  %v3340 = vpop.f32.mrb[0].mxu0
  %v3341 = vadd.f32 %v3119, %v3340
  %v3342 = vpop.f32.mrb[0].mxu0
  %v3343 = vadd.f32 %v3123, %v3342
  %v3344 = vpop.f32.mrb[0].mxu0
  %v3345 = vadd.f32 %v3119, %v3344
  %v3346 = vpop.f32.mrb[0].mxu0
  %v3347 = vadd.f32 %v3123, %v3346
  %3348 = vmatprep.mubr.bf16.mxu0 0
  %3349 = vmatmul.mubr.bf16.gmra.mrb[0].mxu0 %v3068
  %v3350 = vpop.f32.mrb[0].mxu0
  %v3351 = vadd.f32 %v3119, %v3350
  %v3352 = vpop.f32.mrb[0].mxu0
  %v3353 = vadd.f32 %v3123, %v3352
  %v3354 = vpop.f32.mrb[0].mxu0
  %v3355 = vadd.f32 %v3119, %v3354
  %v3356 = vpop.f32.mrb[0].mxu0
  %v3357 = vadd.f32 %v3123, %v3356
  %3358 = vmatprep.mubr.bf16.mxu0 0
  %3359 = vmatmul.mubr.bf16.gmra.mrb[0].mxu0 %v3069
  %v3360 = vpop.f32.mrb[0].mxu0
  %v3361 = vadd.f32 %v3119, %v3360
  %v3362 = vpop.f32.mrb[0].mxu0
  %v3363 = vadd.f32 %v3123, %v3362
  %v3364 = vpop.f32.mrb[0].mxu0
  %v3365 = vadd.f32 %v3119, %v3364
  %v3366 = vpop.f32.mrb[0].mxu0
  %v3367 = vadd.f32 %v3123, %v3366
  %3368 = vmatprep.mubr.bf16.mxu0 0
  %3369 = vmatmul.mubr.bf16.gmra.mrb[0].mxu0 %v3070
  %v3370 = vpop.f32.mrb[0].mxu0
  %v3371 = vadd.f32 %v3119, %v3370
  %v3372 = vpop.f32.mrb[0].mxu0
  %v3373 = vadd.f32 %v3123, %v3372
  %v3374 = vpop.f32.mrb[0].mxu0
  %v3375 = vadd.f32 %v3119, %v3374
  %v3376 = vpop.f32.mrb[0].mxu0
  %v3377 = vadd.f32 %v3123, %v3376
  %3378 = vmatprep.mubr.bf16.mxu0 0
  %3379 = vmatmul.mubr.bf16.gmra.mrb[0].mxu0 %v3071
  %v3380 = vpop.f32.mrb[0].mxu0
  %v3381 = vadd.f32 %v3119, %v3380
  %v3382 = vpop.f32.mrb[0].mxu0
  %v3383 = vadd.f32 %v3123, %v3382
  %v3384 = vpop.f32.mrb[0].mxu0
  %v3385 = vadd.f32 %v3119, %v3384
  %v3386 = vpop.f32.mrb[0].mxu0
  %v3387 = vadd.f32 %v3123, %v3386
  %3388 = vmatprep.mubr.bf16.mxu0 0
  %3389 = vmatmul.mubr.bf16.gmra.mrb[0].mxu0 %v3072
  %v3390 = vpop.f32.mrb[0].mxu0
  %v3391 = vadd.f32 %v3119, %v3390
  %v3392 = vpop.f32.mrb[0].mxu0
  %v3393 = vadd.f32 %v3123, %v3392
  %v3394 = vpop.f32.mrb[0].mxu0
  %v3395 = vadd.f32 %v3119, %v3394
  %v3396 = vpop.f32.mrb[0].mxu0
  %v3397 = vadd.f32 %v3123, %v3396
  %3398 = vmatprep.mubr.bf16.mxu0 0
  %3399 = vmatmul.mubr.bf16.gmra.mrb[0].mxu0 %v3073
  %v3400 = vpop.f32.mrb[0].mxu0
  %v3401 = vadd.f32 %v3119, %v3400
  %v3402 = vpop.f32.mrb[0].mxu0
  %v3403 = vadd.f32 %v3123, %v3402
  %v3404 = vpop.f32.mrb[0].mxu0
  %v3405 = vadd.f32 %v3119, %v3404
  %v3406 = vpop.f32.mrb[0].mxu0
  %v3407 = vadd.f32 %v3123, %v3406
  %3408 = vmatprep.mubr.bf16.mxu0 0
  %3409 = vmatmul.mubr.bf16.gmra.mrb[0].mxu0 %v3074
  %v3410 = vpop.f32.mrb[0].mxu0
  %v3411 = vadd.f32 %v3119, %v3410
  %v3412 = vpop.f32.mrb[0].mxu0
  %v3413 = vadd.f32 %v3123, %v3412
  %v3414 = vpop.f32.mrb[0].mxu0
  %v3415 = vadd.f32 %v3119, %v3414
  %v3416 = vpop.f32.mrb[0].mxu0
  %v3417 = vadd.f32 %v3123, %v3416
  %3418 = vmatprep.mubr.bf16.mxu0 0
  %3419 = vmatmul.mubr.bf16.gmra.mrb[0].mxu0 %v3075
  %v3420 = vpop.f32.mrb[0].mxu0
  %v3421 = vadd.f32 %v3119, %v3420
  %v3422 = vpop.f32.mrb[0].mxu0
  %v3423 = vadd.f32 %v3123, %v3422
  %v3424 = vpop.f32.mrb[0].mxu0
  %v3425 = vadd.f32 %v3119, %v3424
  %v3426 = vpop.f32.mrb[0].mxu0
  %v3427 = vadd.f32 %v3123, %v3426
  %3428 = vmatprep.mubr.bf16.mxu0 0
  %3429 = vmatmul.mubr.bf16.gmra.mrb[0].mxu0 %v3076
  %v3430 = vpop.f32.mrb[0].mxu0
  %v3431 = vadd.f32 %v3119, %v3430
  %v3432 = vpop.f32.mrb[0].mxu0
  %v3433 = vadd.f32 %v3123, %v3432
  %v3434 = vpop.f32.mrb[0].mxu0
  %v3435 = vadd.f32 %v3119, %v3434
  %v3436 = vpop.f32.mrb[0].mxu0
  %v3437 = vadd.f32 %v3123, %v3436
  %3438 = vmatprep.mubr.bf16.mxu0 0
  %3439 = vmatmul.mubr.bf16.gmra.mrb[0].mxu0 %v3077
  %v3440 = vpop.f32.mrb[0].mxu0
  %v3441 = vadd.f32 %v3119, %v3440
  %v3442 = vpop.f32.mrb[0].mxu0
  %v3443 = vadd.f32 %v3123, %v3442
  %v3444 = vpop.f32.mrb[0].mxu0
  %v3445 = vadd.f32 %v3119, %v3444
  %v3446 = vpop.f32.mrb[0].mxu0
  %v3447 = vadd.f32 %v3123, %v3446
  %3448 = vmatprep.mubr.bf16.mxu0 0
  %3449 = vmatmul.mubr.bf16.gmra.mrb[0].mxu0 %v3078
  %v3450 = vpop.f32.mrb[0].mxu0
  %v3451 = vadd.f32 %v3119, %v3450
  %v3452 = vpop.f32.mrb[0].mxu0
  %v3453 = vadd.f32 %v3123, %v3452
  %v3454 = vpop.f32.mrb[0].mxu0
  %v3455 = vadd.f32 %v3119, %v3454
  %v3456 = vpop.f32.mrb[0].mxu0
  %v3457 = vadd.f32 %v3123, %v3456
  %3458 = vmatprep.mubr.bf16.mxu0 0
  %3459 = vmatmul.mubr.bf16.gmra.mrb[0].mxu0 %v3079
  %v3460 = vpop.f32.mrb[0].mxu0
  %v3461 = vadd.f32 %v3119, %v3460
  %v3462 = vpop.f32.mrb[0].mxu0
  %v3463 = vadd.f32 %v3123, %v3462
  %v3464 = vpop.f32.mrb[0].mxu0
  %v3465 = vadd.f32 %v3119, %v3464
  %v3466 = vpop.f32.mrb[0].mxu0
  %v3467 = vadd.f32 %v3123, %v3466
  %3468 = vmatprep.mubr.bf16.mxu0 0
  %3469 = vmatmul.mubr.bf16.gmra.mrb[0].mxu0 %v3080
  %v3470 = vpop.f32.mrb[0].mxu0
  %v3471 = vadd.f32 %v3119, %v3470
  %v3472 = vpop.f32.mrb[0].mxu0
  %v3473 = vadd.f32 %v3123, %v3472
  %v3474 = vpop.f32.mrb[0].mxu0
  %v3475 = vadd.f32 %v3119, %v3474
  %v3476 = vpop.f32.mrb[0].mxu0
  %v3477 = vadd.f32 %v3123, %v3476
  %3478 = vmatprep.mubr.bf16.mxu0 0
  %3479 = vmatmul.mubr.bf16.gmra.mrb[0].mxu0 %v3081
  %v3480 = vpop.f32.mrb[0].mxu0
  %v3481 = vadd.f32 %v3119, %v3480
  %v3482 = vpop.f32.mrb[0].mxu0
  %v3483 = vadd.f32 %v3123, %v3482
  %v3484 = vpop.f32.mrb[0].mxu0
  %v3485 = vadd.f32 %v3119, %v3484
  %v3486 = vpop.f32.mrb[0].mxu0
  %v3487 = vadd.f32 %v3123, %v3486
  %3488 = vdwg.mxu0
  %3489 = vmatprep.subr.bf16.mxu0 %v3235
  %3490 = vmatpush1.bf16.msra.mxu0 %v3234
  %3491 = vmatprep.subr.bf16.mxu0 %v3239
  %3492 = vmatpush1.bf16.msra.mxu0 %v3238
  %3493 = vmatprep.subr.bf16.mxu0 %v3243
  %3494 = vmatpush1.bf16.msra.mxu0 %v3242
  %3495 = vmatprep.subr.bf16.mxu0 %v3247
  %3496 = vmatpush1.bf16.msra.mxu0 %v3246
  %3497 = vmatprep.subr.bf16.mxu0 %v3251
  %3498 = vmatpush1.bf16.msra.mxu0 %v3250
  %3499 = vmatprep.subr.bf16.mxu0 %v3255
  %3500 = vmatpush1.bf16.msra.mxu0 %v3254
  %3501 = vmatprep.subr.bf16.mxu0 %v3259
  %3502 = vmatpush1.bf16.msra.mxu0 %v3258
  %3503 = vmatprep.subr.bf16.mxu0 %v3263
  %3504 = vmatpush1.bf16.msra.mxu0 %v3262
  %3505 = vmatprep.subr.bf16.mxu0 0
  %3506 = vmatpush1.bf16.msra.mxu0 0
  %3507 = vmatprep.subr.bf16.mxu0 0
  %3508 = vmatpush1.bf16.msra.mxu0 0
  %3509 = vmatprep.subr.bf16.mxu0 0
  %3510 = vmatpush1.bf16.msra.mxu0 0
  %3511 = vmatprep.subr.bf16.mxu0 0
  %3512 = vmatpush1.bf16.msra.mxu0 0
  %3513 = vmatprep.subr.bf16.mxu0 0
  %3514 = vmatpush1.bf16.msra.mxu0 0
  %3515 = vmatprep.subr.bf16.mxu0 0
  %3516 = vmatpush1.bf16.msra.mxu0 0
  %3517 = vmatprep.subr.bf16.mxu0 0
  %3518 = vmatpush1.bf16.msra.mxu0 0
  %3519 = vmatprep.subr.bf16.mxu0 0
  %3520 = vmatpush1.bf16.msra.mxu0 0
  %3521 = vmatprep.mubr.bf16.mxu0 0
  %3522 = vmatmul.mubr.bf16.gmra.mrb[0].mxu0 %v3066
  %v3523 = vpop.f32.mrb[0].mxu0
  %v3524 = vadd.f32 %v3127, %v3523
  %v3525 = vpop.f32.mrb[0].mxu0
  %v3526 = vadd.f32 %v3131, %v3525
  %v3527 = vpop.f32.mrb[0].mxu0
  %v3528 = vadd.f32 %v3127, %v3527
  %v3529 = vpop.f32.mrb[0].mxu0
  %v3530 = vadd.f32 %v3131, %v3529
  %3531 = vmatprep.mubr.bf16.mxu0 0
  %3532 = vmatmul.mubr.bf16.gmra.mrb[0].mxu0 %v3067
  %v3533 = vpop.f32.mrb[0].mxu0
  %v3534 = vadd.f32 %v3127, %v3533
  %v3535 = vpop.f32.mrb[0].mxu0
  %v3536 = vadd.f32 %v3131, %v3535
  %v3537 = vpop.f32.mrb[0].mxu0
  %v3538 = vadd.f32 %v3127, %v3537
  %v3539 = vpop.f32.mrb[0].mxu0
  %v3540 = vadd.f32 %v3131, %v3539
  %3541 = vmatprep.mubr.bf16.mxu0 0
  %3542 = vmatmul.mubr.bf16.gmra.mrb[0].mxu0 %v3068
  %v3543 = vpop.f32.mrb[0].mxu0
  %v3544 = vadd.f32 %v3127, %v3543
  %v3545 = vpop.f32.mrb[0].mxu0
  %v3546 = vadd.f32 %v3131, %v3545
  %v3547 = vpop.f32.mrb[0].mxu0
  %v3548 = vadd.f32 %v3127, %v3547
  %v3549 = vpop.f32.mrb[0].mxu0
  %v3550 = vadd.f32 %v3131, %v3549
  %3551 = vmatprep.mubr.bf16.mxu0 0
  %3552 = vmatmul.mubr.bf16.gmra.mrb[0].mxu0 %v3069
  %v3553 = vpop.f32.mrb[0].mxu0
  %v3554 = vadd.f32 %v3127, %v3553
  %v3555 = vpop.f32.mrb[0].mxu0
  %v3556 = vadd.f32 %v3131, %v3555
  %v3557 = vpop.f32.mrb[0].mxu0
  %v3558 = vadd.f32 %v3127, %v3557
  %v3559 = vpop.f32.mrb[0].mxu0
  %v3560 = vadd.f32 %v3131, %v3559
  %3561 = vmatprep.mubr.bf16.mxu0 0
  %3562 = vmatmul.mubr.bf16.gmra.mrb[0].mxu0 %v3070
  %v3563 = vpop.f32.mrb[0].mxu0
  %v3564 = vadd.f32 %v3127, %v3563
  %v3565 = vpop.f32.mrb[0].mxu0
  %v3566 = vadd.f32 %v3131, %v3565
  %v3567 = vpop.f32.mrb[0].mxu0
  %v3568 = vadd.f32 %v3127, %v3567
  %v3569 = vpop.f32.mrb[0].mxu0
  %v3570 = vadd.f32 %v3131, %v3569
  %3571 = vmatprep.mubr.bf16.mxu0 0
  %3572 = vmatmul.mubr.bf16.gmra.mrb[0].mxu0 %v3071
  %v3573 = vpop.f32.mrb[0].mxu0
  %v3574 = vadd.f32 %v3127, %v3573
  %v3575 = vpop.f32.mrb[0].mxu0
  %v3576 = vadd.f32 %v3131, %v3575
  %v3577 = vpop.f32.mrb[0].mxu0
  %v3578 = vadd.f32 %v3127, %v3577
  %v3579 = vpop.f32.mrb[0].mxu0
  %v3580 = vadd.f32 %v3131, %v3579
  %3581 = vmatprep.mubr.bf16.mxu0 0
  %3582 = vmatmul.mubr.bf16.gmra.mrb[0].mxu0 %v3072
  %v3583 = vpop.f32.mrb[0].mxu0
  %v3584 = vadd.f32 %v3127, %v3583
  %v3585 = vpop.f32.mrb[0].mxu0
  %v3586 = vadd.f32 %v3131, %v3585
  %v3587 = vpop.f32.mrb[0].mxu0
  %v3588 = vadd.f32 %v3127, %v3587
  %v3589 = vpop.f32.mrb[0].mxu0
  %v3590 = vadd.f32 %v3131, %v3589
  %3591 = vmatprep.mubr.bf16.mxu0 0
  %3592 = vmatmul.mubr.bf16.gmra.mrb[0].mxu0 %v3073
  %v3593 = vpop.f32.mrb[0].mxu0
  %v3594 = vadd.f32 %v3127, %v3593
  %v3595 = vpop.f32.mrb[0].mxu0
  %v3596 = vadd.f32 %v3131, %v3595
  %v3597 = vpop.f32.mrb[0].mxu0
  %v3598 = vadd.f32 %v3127, %v3597
  %v3599 = vpop.f32.mrb[0].mxu0
  %v3600 = vadd.f32 %v3131, %v3599
  %3601 = vmatprep.mubr.bf16.mxu0 0
  %3602 = vmatmul.mubr.bf16.gmra.mrb[0].mxu0 %v3074
  %v3603 = vpop.f32.mrb[0].mxu0
  %v3604 = vadd.f32 %v3127, %v3603
  %v3605 = vpop.f32.mrb[0].mxu0
  %v3606 = vadd.f32 %v3131, %v3605
  %v3607 = vpop.f32.mrb[0].mxu0
  %v3608 = vadd.f32 %v3127, %v3607
  %v3609 = vpop.f32.mrb[0].mxu0
  %v3610 = vadd.f32 %v3131, %v3609
  %3611 = vmatprep.mubr.bf16.mxu0 0
  %3612 = vmatmul.mubr.bf16.gmra.mrb[0].mxu0 %v3075
  %v3613 = vpop.f32.mrb[0].mxu0
  %v3614 = vadd.f32 %v3127, %v3613
  %v3615 = vpop.f32.mrb[0].mxu0
  %v3616 = vadd.f32 %v3131, %v3615
  %v3617 = vpop.f32.mrb[0].mxu0
  %v3618 = vadd.f32 %v3127, %v3617
  %v3619 = vpop.f32.mrb[0].mxu0
  %v3620 = vadd.f32 %v3131, %v3619
  %3621 = vmatprep.mubr.bf16.mxu0 0
  %3622 = vmatmul.mubr.bf16.gmra.mrb[0].mxu0 %v3076
  %v3623 = vpop.f32.mrb[0].mxu0
  %v3624 = vadd.f32 %v3127, %v3623
  %v3625 = vpop.f32.mrb[0].mxu0
  %v3626 = vadd.f32 %v3131, %v3625
  %v3627 = vpop.f32.mrb[0].mxu0
  %v3628 = vadd.f32 %v3127, %v3627
  %v3629 = vpop.f32.mrb[0].mxu0
  %v3630 = vadd.f32 %v3131, %v3629
  %3631 = vmatprep.mubr.bf16.mxu0 0
  %3632 = vmatmul.mubr.bf16.gmra.mrb[0].mxu0 %v3077
  %v3633 = vpop.f32.mrb[0].mxu0
  %v3634 = vadd.f32 %v3127, %v3633
  %v3635 = vpop.f32.mrb[0].mxu0
  %v3636 = vadd.f32 %v3131, %v3635
  %v3637 = vpop.f32.mrb[0].mxu0
  %v3638 = vadd.f32 %v3127, %v3637
  %v3639 = vpop.f32.mrb[0].mxu0
  %v3640 = vadd.f32 %v3131, %v3639
  %3641 = vmatprep.mubr.bf16.mxu0 0
  %3642 = vmatmul.mubr.bf16.gmra.mrb[0].mxu0 %v3078
  %v3643 = vpop.f32.mrb[0].mxu0
  %v3644 = vadd.f32 %v3127, %v3643
  %v3645 = vpop.f32.mrb[0].mxu0
  %v3646 = vadd.f32 %v3131, %v3645
  %v3647 = vpop.f32.mrb[0].mxu0
  %v3648 = vadd.f32 %v3127, %v3647
  %v3649 = vpop.f32.mrb[0].mxu0
  %v3650 = vadd.f32 %v3131, %v3649
  %3651 = vmatprep.mubr.bf16.mxu0 0
  %3652 = vmatmul.mubr.bf16.gmra.mrb[0].mxu0 %v3079
  %v3653 = vpop.f32.mrb[0].mxu0
  %v3654 = vadd.f32 %v3127, %v3653
  %v3655 = vpop.f32.mrb[0].mxu0
  %v3656 = vadd.f32 %v3131, %v3655
  %v3657 = vpop.f32.mrb[0].mxu0
  %v3658 = vadd.f32 %v3127, %v3657
  %v3659 = vpop.f32.mrb[0].mxu0
  %v3660 = vadd.f32 %v3131, %v3659
  %3661 = vmatprep.mubr.bf16.mxu0 0
  %3662 = vmatmul.mubr.bf16.gmra.mrb[0].mxu0 %v3080
  %v3663 = vpop.f32.mrb[0].mxu0
  %v3664 = vadd.f32 %v3127, %v3663
  %v3665 = vpop.f32.mrb[0].mxu0
  %v3666 = vadd.f32 %v3131, %v3665
  %v3667 = vpop.f32.mrb[0].mxu0
  %v3668 = vadd.f32 %v3127, %v3667
  %v3669 = vpop.f32.mrb[0].mxu0
  %v3670 = vadd.f32 %v3131, %v3669
  %3671 = vmatprep.mubr.bf16.mxu0 0
  %3672 = vmatmul.mubr.bf16.gmra.mrb[0].mxu0 %v3081
  %v3673 = vpop.f32.mrb[0].mxu0
  %v3674 = vadd.f32 %v3127, %v3673
  %v3675 = vpop.f32.mrb[0].mxu0
  %v3676 = vadd.f32 %v3131, %v3675
  %v3677 = vpop.f32.mrb[0].mxu0
  %v3678 = vadd.f32 %v3127, %v3677
  %v3679 = vpop.f32.mrb[0].mxu0
  %v3680 = vadd.f32 %v3131, %v3679
  %3681 = vdwg.mxu0
  %v3682 = vmax.f32 %v3331, 0.0
  %v3683 = vmax.f32 %v3333, 0.0
  %v3684 = vmax.f32 %v3524, 0.0
  %v3685 = vmax.f32 %v3526, 0.0
  %v3686 = vmax.f32 %v3335, 0.0
  %v3687 = vmax.f32 %v3337, 0.0
  %v3688 = vmax.f32 %v3528, 0.0
  %v3689 = vmax.f32 %v3530, 0.0
  %v3690 = vmax.f32 %v3341, 0.0
  %v3691 = vmax.f32 %v3343, 0.0
  %v3692 = vmax.f32 %v3534, 0.0
  %v3693 = vmax.f32 %v3536, 0.0
  %v3694 = vmax.f32 %v3345, 0.0
  %v3695 = vmax.f32 %v3347, 0.0
  %v3696 = vmax.f32 %v3538, 0.0
  %v3697 = vmax.f32 %v3540, 0.0
  %v3698 = vmax.f32 %v3351, 0.0
  %v3699 = vmax.f32 %v3353, 0.0
  %v3700 = vmax.f32 %v3544, 0.0
  %v3701 = vmax.f32 %v3546, 0.0
  %v3702 = vmax.f32 %v3355, 0.0
  %v3703 = vmax.f32 %v3357, 0.0
  %v3704 = vmax.f32 %v3548, 0.0
  %v3705 = vmax.f32 %v3550, 0.0
  %v3706 = vmax.f32 %v3361, 0.0
  %v3707 = vmax.f32 %v3363, 0.0
  %v3708 = vmax.f32 %v3554, 0.0
  %v3709 = vmax.f32 %v3556, 0.0
  %v3710 = vmax.f32 %v3365, 0.0
  %v3711 = vmax.f32 %v3367, 0.0
  %v3712 = vmax.f32 %v3558, 0.0
  %v3713 = vmax.f32 %v3560, 0.0
  %v3714 = vmax.f32 %v3371, 0.0
  %v3715 = vmax.f32 %v3373, 0.0
  %v3716 = vmax.f32 %v3564, 0.0
  %v3717 = vmax.f32 %v3566, 0.0
  %v3718 = vmax.f32 %v3375, 0.0
  %v3719 = vmax.f32 %v3377, 0.0
  %v3720 = vmax.f32 %v3568, 0.0
  %v3721 = vmax.f32 %v3570, 0.0
  %v3722 = vmax.f32 %v3381, 0.0
  %v3723 = vmax.f32 %v3383, 0.0
  %v3724 = vmax.f32 %v3574, 0.0
  %v3725 = vmax.f32 %v3576, 0.0
  %v3726 = vmax.f32 %v3385, 0.0
  %v3727 = vmax.f32 %v3387, 0.0
  %v3728 = vmax.f32 %v3578, 0.0
  %v3729 = vmax.f32 %v3580, 0.0
  %v3730 = vmax.f32 %v3391, 0.0
  %v3731 = vmax.f32 %v3393, 0.0
  %v3732 = vmax.f32 %v3584, 0.0
  %v3733 = vmax.f32 %v3586, 0.0
  %v3734 = vmax.f32 %v3395, 0.0
  %v3735 = vmax.f32 %v3397, 0.0
  %v3736 = vmax.f32 %v3588, 0.0
  %v3737 = vmax.f32 %v3590, 0.0
  %v3738 = vmax.f32 %v3401, 0.0
  %v3739 = vmax.f32 %v3403, 0.0
  %v3740 = vmax.f32 %v3594, 0.0
  %v3741 = vmax.f32 %v3596, 0.0
  %v3742 = vmax.f32 %v3405, 0.0
  %v3743 = vmax.f32 %v3407, 0.0
  %v3744 = vmax.f32 %v3598, 0.0
  %v3745 = vmax.f32 %v3600, 0.0
  %v3746 = vmax.f32 %v3411, 0.0
  %v3747 = vmax.f32 %v3413, 0.0
  %v3748 = vmax.f32 %v3604, 0.0
  %v3749 = vmax.f32 %v3606, 0.0
  %v3750 = vmax.f32 %v3415, 0.0
  %v3751 = vmax.f32 %v3417, 0.0
  %v3752 = vmax.f32 %v3608, 0.0
  %v3753 = vmax.f32 %v3610, 0.0
  %v3754 = vmax.f32 %v3421, 0.0
  %v3755 = vmax.f32 %v3423, 0.0
  %v3756 = vmax.f32 %v3614, 0.0
  %v3757 = vmax.f32 %v3616, 0.0
  %v3758 = vmax.f32 %v3425, 0.0
  %v3759 = vmax.f32 %v3427, 0.0
  %v3760 = vmax.f32 %v3618, 0.0
  %v3761 = vmax.f32 %v3620, 0.0
  %v3762 = vmax.f32 %v3431, 0.0
  %v3763 = vmax.f32 %v3433, 0.0
  %v3764 = vmax.f32 %v3624, 0.0
  %v3765 = vmax.f32 %v3626, 0.0
  %v3766 = vmax.f32 %v3435, 0.0
  %v3767 = vmax.f32 %v3437, 0.0
  %v3768 = vmax.f32 %v3628, 0.0
  %v3769 = vmax.f32 %v3630, 0.0
  %v3770 = vmax.f32 %v3441, 0.0
  %v3771 = vmax.f32 %v3443, 0.0
  %v3772 = vmax.f32 %v3634, 0.0
  %v3773 = vmax.f32 %v3636, 0.0
  %v3774 = vmax.f32 %v3445, 0.0
  %v3775 = vmax.f32 %v3447, 0.0
  %v3776 = vmax.f32 %v3638, 0.0
  %v3777 = vmax.f32 %v3640, 0.0
  %v3778 = vmax.f32 %v3451, 0.0
  %v3779 = vmax.f32 %v3453, 0.0
  %v3780 = vmax.f32 %v3644, 0.0
  %v3781 = vmax.f32 %v3646, 0.0
  %v3782 = vmax.f32 %v3455, 0.0
  %v3783 = vmax.f32 %v3457, 0.0
  %v3784 = vmax.f32 %v3648, 0.0
  %v3785 = vmax.f32 %v3650, 0.0
  %v3786 = vmax.f32 %v3461, 0.0
  %v3787 = vmax.f32 %v3463, 0.0
  %v3788 = vmax.f32 %v3654, 0.0
  %v3789 = vmax.f32 %v3656, 0.0
  %v3790 = vmax.f32 %v3465, 0.0
  %v3791 = vmax.f32 %v3467, 0.0
  %v3792 = vmax.f32 %v3658, 0.0
  %v3793 = vmax.f32 %v3660, 0.0
  %v3794 = vmax.f32 %v3471, 0.0
  %v3795 = vmax.f32 %v3473, 0.0
  %v3796 = vmax.f32 %v3664, 0.0
  %v3797 = vmax.f32 %v3666, 0.0
  %v3798 = vmax.f32 %v3475, 0.0
  %v3799 = vmax.f32 %v3477, 0.0
  %v3800 = vmax.f32 %v3668, 0.0
  %v3801 = vmax.f32 %v3670, 0.0
  %v3802 = vmax.f32 %v3481, 0.0
  %v3803 = vmax.f32 %v3483, 0.0
  %v3804 = vmax.f32 %v3674, 0.0
  %v3805 = vmax.f32 %v3676, 0.0
  %v3806 = vmax.f32 %v3485, 0.0
  %v3807 = vmax.f32 %v3487, 0.0
  %v3808 = vmax.f32 %v3678, 0.0
  %v3809 = vmax.f32 %v3680, 0.0
  %v3810 = vadd.f32 %v3682, %v3690
  %v3811 = vadd.f32 %v3810, %v3698
  %v3812 = vadd.f32 %v3811, %v3706
  %v3813 = vadd.f32 %v3812, %v3714
  %v3814 = vadd.f32 %v3813, %v3722
  %v3815 = vadd.f32 %v3814, %v3730
  %v3816 = vadd.f32 %v3815, %v3738
  %v3817 = vadd.f32 %v3816, %v3746
  %v3818 = vadd.f32 %v3817, %v3754
  %v3819 = vadd.f32 %v3818, %v3762
  %v3820 = vadd.f32 %v3819, %v3770
  %v3821 = vadd.f32 %v3820, %v3778
  %v3822 = vadd.f32 %v3821, %v3786
  %v3823 = vadd.f32 %v3822, %v3794
  %v3824 = vadd.f32 %v3823, %v3802
  %v3825 = vadd.f32 %v3683, %v3691
  %v3826 = vadd.f32 %v3825, %v3699
  %v3827 = vadd.f32 %v3826, %v3707
  %v3828 = vadd.f32 %v3827, %v3715
  %v3829 = vadd.f32 %v3828, %v3723
  %v3830 = vadd.f32 %v3829, %v3731
  %v3831 = vadd.f32 %v3830, %v3739
  %v3832 = vadd.f32 %v3831, %v3747
  %v3833 = vadd.f32 %v3832, %v3755
  %v3834 = vadd.f32 %v3833, %v3763
  %v3835 = vadd.f32 %v3834, %v3771
  %v3836 = vadd.f32 %v3835, %v3779
  %v3837 = vadd.f32 %v3836, %v3787
  %v3838 = vadd.f32 %v3837, %v3795
  %v3839 = vadd.f32 %v3838, %v3803
  %v3840 = vadd.f32 %v3684, %v3692
  %v3841 = vadd.f32 %v3840, %v3700
  %v3842 = vadd.f32 %v3841, %v3708
  %v3843 = vadd.f32 %v3842, %v3716
  %v3844 = vadd.f32 %v3843, %v3724
  %v3845 = vadd.f32 %v3844, %v3732
  %v3846 = vadd.f32 %v3845, %v3740
  %v3847 = vadd.f32 %v3846, %v3748
  %v3848 = vadd.f32 %v3847, %v3756
  %v3849 = vadd.f32 %v3848, %v3764
  %v3850 = vadd.f32 %v3849, %v3772
  %v3851 = vadd.f32 %v3850, %v3780
  %v3852 = vadd.f32 %v3851, %v3788
  %v3853 = vadd.f32 %v3852, %v3796
  %v3854 = vadd.f32 %v3853, %v3804
  %v3855 = vadd.f32 %v3685, %v3693
  %v3856 = vadd.f32 %v3855, %v3701
  %v3857 = vadd.f32 %v3856, %v3709
  %v3858 = vadd.f32 %v3857, %v3717
  %v3859 = vadd.f32 %v3858, %v3725
  %v3860 = vadd.f32 %v3859, %v3733
  %v3861 = vadd.f32 %v3860, %v3741
  %v3862 = vadd.f32 %v3861, %v3749
  %v3863 = vadd.f32 %v3862, %v3757
  %v3864 = vadd.f32 %v3863, %v3765
  %v3865 = vadd.f32 %v3864, %v3773
  %v3866 = vadd.f32 %v3865, %v3781
  %v3867 = vadd.f32 %v3866, %v3789
  %v3868 = vadd.f32 %v3867, %v3797
  %v3869 = vadd.f32 %v3868, %v3805
  %v3870 = vadd.f32 %v3686, %v3694
  %v3871 = vadd.f32 %v3870, %v3702
  %v3872 = vadd.f32 %v3871, %v3710
  %v3873 = vadd.f32 %v3872, %v3718
  %v3874 = vadd.f32 %v3873, %v3726
  %v3875 = vadd.f32 %v3874, %v3734
  %v3876 = vadd.f32 %v3875, %v3742
  %v3877 = vadd.f32 %v3876, %v3750
  %v3878 = vadd.f32 %v3877, %v3758
  %v3879 = vadd.f32 %v3878, %v3766
  %v3880 = vadd.f32 %v3879, %v3774
  %v3881 = vadd.f32 %v3880, %v3782
  %v3882 = vadd.f32 %v3881, %v3790
  %v3883 = vadd.f32 %v3882, %v3798
  %v3884 = vadd.f32 %v3883, %v3806
  %v3885 = vadd.f32 %v3687, %v3695
  %v3886 = vadd.f32 %v3885, %v3703
  %v3887 = vadd.f32 %v3886, %v3711
  %v3888 = vadd.f32 %v3887, %v3719
  %v3889 = vadd.f32 %v3888, %v3727
  %v3890 = vadd.f32 %v3889, %v3735
  %v3891 = vadd.f32 %v3890, %v3743
  %v3892 = vadd.f32 %v3891, %v3751
  %v3893 = vadd.f32 %v3892, %v3759
  %v3894 = vadd.f32 %v3893, %v3767
  %v3895 = vadd.f32 %v3894, %v3775
  %v3896 = vadd.f32 %v3895, %v3783
  %v3897 = vadd.f32 %v3896, %v3791
  %v3898 = vadd.f32 %v3897, %v3799
  %v3899 = vadd.f32 %v3898, %v3807
  %v3900 = vadd.f32 %v3688, %v3696
  %v3901 = vadd.f32 %v3900, %v3704
  %v3902 = vadd.f32 %v3901, %v3712
  %v3903 = vadd.f32 %v3902, %v3720
  %v3904 = vadd.f32 %v3903, %v3728
  %v3905 = vadd.f32 %v3904, %v3736
  %v3906 = vadd.f32 %v3905, %v3744
  %v3907 = vadd.f32 %v3906, %v3752
  %v3908 = vadd.f32 %v3907, %v3760
  %v3909 = vadd.f32 %v3908, %v3768
  %v3910 = vadd.f32 %v3909, %v3776
  %v3911 = vadd.f32 %v3910, %v3784
  %v3912 = vadd.f32 %v3911, %v3792
  %v3913 = vadd.f32 %v3912, %v3800
  %v3914 = vadd.f32 %v3913, %v3808
  %v3915 = vadd.f32 %v3689, %v3697
  %v3916 = vadd.f32 %v3915, %v3705
  %v3917 = vadd.f32 %v3916, %v3713
  %v3918 = vadd.f32 %v3917, %v3721
  %v3919 = vadd.f32 %v3918, %v3729
  %v3920 = vadd.f32 %v3919, %v3737
  %v3921 = vadd.f32 %v3920, %v3745
  %v3922 = vadd.f32 %v3921, %v3753
  %v3923 = vadd.f32 %v3922, %v3761
  %v3924 = vadd.f32 %v3923, %v3769
  %v3925 = vadd.f32 %v3924, %v3777
  %v3926 = vadd.f32 %v3925, %v3785
  %v3927 = vadd.f32 %v3926, %v3793
  %v3928 = vadd.f32 %v3927, %v3801
  %v3929 = vadd.f32 %v3928, %v3809
  %v3930 = vrcp.pop 16.0
  %v3931 = vmul.f32 %v3824, %v3930
  %v3932 = vmul.f32 %v3839, %v3930
  %v3933 = vmul.f32 %v3854, %v3930
  %v3934 = vmul.f32 %v3869, %v3930
  %v3935 = vmul.f32 %v3884, %v3930
  %v3936 = vmul.f32 %v3899, %v3930
  %v3937 = vmul.f32 %v3914, %v3930
  %v3938 = vmul.f32 %v3929, %v3930
  %3939 = vst [vmem:[%s10] sm:$0xff] %v3931
  %3940 = vst [vmem:[%s10 + $0x8] sm:$0xff] %v3932
  %3941 = vst [vmem:[%s10 + $0x10] sm:$0xff] %v3933
  %3942 = vst [vmem:[%s10 + $0x18] sm:$0xff] %v3934
  %3943 = vst [vmem:[%s10 + $0x20] sm:$0xff] %v3935
  %3944 = vst [vmem:[%s10 + $0x28] sm:$0xff] %v3936
  %3945 = vst [vmem:[%s10 + $0x30] sm:$0xff] %v3937
  %3946 = vst [vmem:[%s10 + $0x38] sm:$0xff] %v3938
  %v3947 = vpack.c.bf16 %v3935, %v3931
  %v3948 = vpack.c.bf16 %v3936, %v3932
  %v3949 = vpack.c.bf16 %v3937, %v3933
  %v3950 = vpack.c.bf16 %v3938, %v3934
  %v3951 = vld [vmem:[%s7] sm:$0xf]
  %v3952 = vld [vmem:[%s7 + $0x4] sm:$0xf]
  %v3953 = vld [vmem:[%s7 + $0x8] sm:$0xf]
  %v3954 = vld [vmem:[%s7 + $0xc] sm:$0xf]
  %v3955 = vld [vmem:[%s7 + $0x10] sm:$0xf]
  %v3956 = vld [vmem:[%s7 + $0x14] sm:$0xf]
  %v3957 = vld [vmem:[%s7 + $0x18] sm:$0xf]
  %v3958 = vld [vmem:[%s7 + $0x1c] sm:$0xf]
  %v3959 = vld [vmem:[%s7 + $0x20] sm:$0xf]
  %v3960 = vld [vmem:[%s7 + $0x24] sm:$0xf]
  %v3961 = vld [vmem:[%s7 + $0x28] sm:$0xf]
  %v3962 = vld [vmem:[%s7 + $0x2c] sm:$0xf]
  %v3963 = vld [vmem:[%s7 + $0x30] sm:$0xf]
  %v3964 = vld [vmem:[%s7 + $0x34] sm:$0xf]
  %v3965 = vld [vmem:[%s7 + $0x38] sm:$0xf]
  %v3966 = vld [vmem:[%s7 + $0x3c] sm:$0xf]
  %v3967 = vld [vmem:[%s7 + $0x40] sm:$0xf]
  %v3968 = vld [vmem:[%s7 + $0x44] sm:$0xf]
  %v3969 = vld [vmem:[%s7 + $0x48] sm:$0xf]
  %v3970 = vld [vmem:[%s7 + $0x4c] sm:$0xf]
  %v3971 = vld [vmem:[%s7 + $0x50] sm:$0xf]
  %v3972 = vld [vmem:[%s7 + $0x54] sm:$0xf]
  %v3973 = vld [vmem:[%s7 + $0x58] sm:$0xf]
  %v3974 = vld [vmem:[%s7 + $0x5c] sm:$0xf]
  %v3975 = vld [vmem:[%s7 + $0x60] sm:$0xf]
  %v3976 = vld [vmem:[%s7 + $0x64] sm:$0xf]
  %v3977 = vld [vmem:[%s7 + $0x68] sm:$0xf]
  %v3978 = vld [vmem:[%s7 + $0x6c] sm:$0xf]
  %v3979 = vld [vmem:[%s7 + $0x70] sm:$0xf]
  %v3980 = vld [vmem:[%s7 + $0x74] sm:$0xf]
  %v3981 = vld [vmem:[%s7 + $0x78] sm:$0xf]
  %v3982 = vld [vmem:[%s7 + $0x7c] sm:$0xf]
  %v3983 = vld [vmem:[%s7 + $0x80] sm:$0xf]
  %v3984 = vld [vmem:[%s7 + $0x84] sm:$0xf]
  %v3985 = vld [vmem:[%s7 + $0x88] sm:$0xf]
  %v3986 = vld [vmem:[%s7 + $0x8c] sm:$0xf]
  %v3987 = vld [vmem:[%s7 + $0x90] sm:$0xf]
  %v3988 = vld [vmem:[%s7 + $0x94] sm:$0xf]
  %v3989 = vld [vmem:[%s7 + $0x98] sm:$0xf]
  %v3990 = vld [vmem:[%s7 + $0x9c] sm:$0xf]
  %v3991 = vld [vmem:[%s7 + $0xa0] sm:$0xf]
  %v3992 = vld [vmem:[%s7 + $0xa4] sm:$0xf]
  %v3993 = vld [vmem:[%s7 + $0xa8] sm:$0xf]
  %v3994 = vld [vmem:[%s7 + $0xac] sm:$0xf]
  %v3995 = vld [vmem:[%s7 + $0xb0] sm:$0xf]
  %v3996 = vld [vmem:[%s7 + $0xb4] sm:$0xf]
  %v3997 = vld [vmem:[%s7 + $0xb8] sm:$0xf]
  %v3998 = vld [vmem:[%s7 + $0xbc] sm:$0xf]
  %v3999 = vld [vmem:[%s7 + $0xc0] sm:$0xf]
  %v4000 = vld [vmem:[%s7 + $0xc4] sm:$0xf]
  %v4001 = vld [vmem:[%s7 + $0xc8] sm:$0xf]
  %v4002 = vld [vmem:[%s7 + $0xcc] sm:$0xf]
  %v4003 = vld [vmem:[%s7 + $0xd0] sm:$0xf]
  %v4004 = vld [vmem:[%s7 + $0xd4] sm:$0xf]
  %v4005 = vld [vmem:[%s7 + $0xd8] sm:$0xf]
  %v4006 = vld [vmem:[%s7 + $0xdc] sm:$0xf]
  %v4007 = vld [vmem:[%s7 + $0xe0] sm:$0xf]
  %v4008 = vld [vmem:[%s7 + $0xe4] sm:$0xf]
  %v4009 = vld [vmem:[%s7 + $0xe8] sm:$0xf]
  %v4010 = vld [vmem:[%s7 + $0xec] sm:$0xf]
  %v4011 = vld [vmem:[%s7 + $0xf0] sm:$0xf]
  %v4012 = vld [vmem:[%s7 + $0xf4] sm:$0xf]
  %v4013 = vld [vmem:[%s7 + $0xf8] sm:$0xf]
  %v4014 = vld [vmem:[%s7 + $0xfc] sm:$0xf]
  %v4015 = vld [vmem:[%s8] sm:$0x1]
  %v4017 = vlaneseq
  %v4018 = vshrl.u32 %v4017, 7
  %v4019 = vsub.s32 0, %v4018
  %v4020 = vrot.slane %v4015, %v4019
  %v4086 = vunpack.c.l.b16 %v3951
  %v4087 = vunpack.c.l.b16 %v3952
  %v4088 = vunpack.c.l.b16 %v3953
  %v4089 = vunpack.c.l.b16 %v3954
  %v4090 = vunpack.c.l.b16 %v3955
  %v4091 = vunpack.c.l.b16 %v3956
  %v4092 = vunpack.c.l.b16 %v3957
  %v4093 = vunpack.c.l.b16 %v3958
  %v4094 = vunpack.c.l.b16 %v3959
  %v4095 = vunpack.c.l.b16 %v3960
  %v4096 = vunpack.c.l.b16 %v3961
  %v4097 = vunpack.c.l.b16 %v3962
  %v4098 = vunpack.c.l.b16 %v3963
  %v4099 = vunpack.c.l.b16 %v3964
  %v4100 = vunpack.c.l.b16 %v3965
  %v4101 = vunpack.c.l.b16 %v3966
  %v4102 = vunpack.c.l.b16 %v3967
  %v4103 = vunpack.c.l.b16 %v3968
  %v4104 = vunpack.c.l.b16 %v3969
  %v4105 = vunpack.c.l.b16 %v3970
  %v4106 = vunpack.c.l.b16 %v3971
  %v4107 = vunpack.c.l.b16 %v3972
  %v4108 = vunpack.c.l.b16 %v3973
  %v4109 = vunpack.c.l.b16 %v3974
  %v4110 = vunpack.c.l.b16 %v3975
  %v4111 = vunpack.c.l.b16 %v3976
  %v4112 = vunpack.c.l.b16 %v3977
  %v4113 = vunpack.c.l.b16 %v3978
  %v4114 = vunpack.c.l.b16 %v3979
  %v4115 = vunpack.c.l.b16 %v3980
  %v4116 = vunpack.c.l.b16 %v3981
  %v4117 = vunpack.c.l.b16 %v3982
  %v4118 = vunpack.c.l.b16 %v3983
  %v4119 = vunpack.c.l.b16 %v3984
  %v4120 = vunpack.c.l.b16 %v3985
  %v4121 = vunpack.c.l.b16 %v3986
  %v4122 = vunpack.c.l.b16 %v3987
  %v4123 = vunpack.c.l.b16 %v3988
  %v4124 = vunpack.c.l.b16 %v3989
  %v4125 = vunpack.c.l.b16 %v3990
  %v4126 = vunpack.c.l.b16 %v3991
  %v4127 = vunpack.c.l.b16 %v3992
  %v4128 = vunpack.c.l.b16 %v3993
  %v4129 = vunpack.c.l.b16 %v3994
  %v4130 = vunpack.c.l.b16 %v3995
  %v4131 = vunpack.c.l.b16 %v3996
  %v4132 = vunpack.c.l.b16 %v3997
  %v4133 = vunpack.c.l.b16 %v3998
  %v4134 = vunpack.c.l.b16 %v3999
  %v4135 = vunpack.c.l.b16 %v4000
  %v4136 = vunpack.c.l.b16 %v4001
  %v4137 = vunpack.c.l.b16 %v4002
  %v4138 = vunpack.c.l.b16 %v4003
  %v4139 = vunpack.c.l.b16 %v4004
  %v4140 = vunpack.c.l.b16 %v4005
  %v4141 = vunpack.c.l.b16 %v4006
  %v4142 = vunpack.c.l.b16 %v4007
  %v4143 = vunpack.c.l.b16 %v4008
  %v4144 = vunpack.c.l.b16 %v4009
  %v4145 = vunpack.c.l.b16 %v4010
  %v4146 = vunpack.c.l.b16 %v4011
  %v4147 = vunpack.c.l.b16 %v4012
  %v4148 = vunpack.c.l.b16 %v4013
  %v4149 = vunpack.c.l.b16 %v4014
  %v4150 = vpack.c.b16 %v4087, %v4086
  %v4151 = vpack.c.b16 %v4089, %v4088
  %v4152 = vpack.c.b16 %v4091, %v4090
  %v4153 = vpack.c.b16 %v4093, %v4092
  %v4154 = vpack.c.b16 %v4095, %v4094
  %v4155 = vpack.c.b16 %v4097, %v4096
  %v4156 = vpack.c.b16 %v4099, %v4098
  %v4157 = vpack.c.b16 %v4101, %v4100
  %v4158 = vpack.c.b16 %v4103, %v4102
  %v4159 = vpack.c.b16 %v4105, %v4104
  %v4160 = vpack.c.b16 %v4107, %v4106
  %v4161 = vpack.c.b16 %v4109, %v4108
  %v4162 = vpack.c.b16 %v4111, %v4110
  %v4163 = vpack.c.b16 %v4113, %v4112
  %v4164 = vpack.c.b16 %v4115, %v4114
  %v4165 = vpack.c.b16 %v4117, %v4116
  %v4166 = vpack.c.b16 %v4119, %v4118
  %v4167 = vpack.c.b16 %v4121, %v4120
  %v4168 = vpack.c.b16 %v4123, %v4122
  %v4169 = vpack.c.b16 %v4125, %v4124
  %v4170 = vpack.c.b16 %v4127, %v4126
  %v4171 = vpack.c.b16 %v4129, %v4128
  %v4172 = vpack.c.b16 %v4131, %v4130
  %v4173 = vpack.c.b16 %v4133, %v4132
  %v4174 = vpack.c.b16 %v4135, %v4134
  %v4175 = vpack.c.b16 %v4137, %v4136
  %v4176 = vpack.c.b16 %v4139, %v4138
  %v4177 = vpack.c.b16 %v4141, %v4140
  %v4178 = vpack.c.b16 %v4143, %v4142
  %v4179 = vpack.c.b16 %v4145, %v4144
  %v4180 = vpack.c.b16 %v4147, %v4146
  %v4181 = vpack.c.b16 %v4149, %v4148
  %4214 = vmatprep.subr.bf16.mxu0 0
  %4215 = vmatpush1.bf16.msra.mxu0 %v4150
  %4216 = vmatprep.subr.bf16.mxu0 0
  %4217 = vmatpush1.bf16.msra.mxu0 %v4151
  %4218 = vmatprep.subr.bf16.mxu0 0
  %4219 = vmatpush1.bf16.msra.mxu0 %v4152
  %4220 = vmatprep.subr.bf16.mxu0 0
  %4221 = vmatpush1.bf16.msra.mxu0 %v4153
  %4222 = vmatprep.subr.bf16.mxu0 0
  %4223 = vmatpush1.bf16.msra.mxu0 %v4154
  %4224 = vmatprep.subr.bf16.mxu0 0
  %4225 = vmatpush1.bf16.msra.mxu0 %v4155
  %4226 = vmatprep.subr.bf16.mxu0 0
  %4227 = vmatpush1.bf16.msra.mxu0 %v4156
  %4228 = vmatprep.subr.bf16.mxu0 0
  %4229 = vmatpush1.bf16.msra.mxu0 %v4157
  %4230 = vmatprep.subr.bf16.mxu0 0
  %4231 = vmatpush1.bf16.msra.mxu0 %v4158
  %4232 = vmatprep.subr.bf16.mxu0 0
  %4233 = vmatpush1.bf16.msra.mxu0 %v4159
  %4234 = vmatprep.subr.bf16.mxu0 0
  %4235 = vmatpush1.bf16.msra.mxu0 %v4160
  %4236 = vmatprep.subr.bf16.mxu0 0
  %4237 = vmatpush1.bf16.msra.mxu0 %v4161
  %4238 = vmatprep.subr.bf16.mxu0 0
  %4239 = vmatpush1.bf16.msra.mxu0 %v4162
  %4240 = vmatprep.subr.bf16.mxu0 0
  %4241 = vmatpush1.bf16.msra.mxu0 %v4163
  %4242 = vmatprep.subr.bf16.mxu0 0
  %4243 = vmatpush1.bf16.msra.mxu0 %v4164
  %4244 = vmatprep.subr.bf16.mxu0 0
  %4245 = vmatpush1.bf16.msra.mxu0 %v4165
  %4246 = vmatprep.mubr.bf16.mxu0 %v3948
  %4247 = vmatmul.mubr.bf16.gmra.mrb[0].mxu0 %v3947
  %v4248 = vpop.f32.mrb[0].mxu0
  %v4249 = vadd.f32 %v4020, %v4248
  %v4250 = vpop.f32.mrb[0].mxu0
  %v4251 = vpop.f32.mrb[0].mxu0
  %v4252 = vadd.f32 %v4020, %v4251
  %v4253 = vpop.f32.mrb[0].mxu0
  %4254 = vdwg.mxu0
  %4255 = vmatprep.subr.bf16.mxu0 0
  %4256 = vmatpush1.bf16.msra.mxu0 %v4166
  %4257 = vmatprep.subr.bf16.mxu0 0
  %4258 = vmatpush1.bf16.msra.mxu0 %v4167
  %4259 = vmatprep.subr.bf16.mxu0 0
  %4260 = vmatpush1.bf16.msra.mxu0 %v4168
  %4261 = vmatprep.subr.bf16.mxu0 0
  %4262 = vmatpush1.bf16.msra.mxu0 %v4169
  %4263 = vmatprep.subr.bf16.mxu0 0
  %4264 = vmatpush1.bf16.msra.mxu0 %v4170
  %4265 = vmatprep.subr.bf16.mxu0 0
  %4266 = vmatpush1.bf16.msra.mxu0 %v4171
  %4267 = vmatprep.subr.bf16.mxu0 0
  %4268 = vmatpush1.bf16.msra.mxu0 %v4172
  %4269 = vmatprep.subr.bf16.mxu0 0
  %4270 = vmatpush1.bf16.msra.mxu0 %v4173
  %4271 = vmatprep.subr.bf16.mxu0 0
  %4272 = vmatpush1.bf16.msra.mxu0 %v4174
  %4273 = vmatprep.subr.bf16.mxu0 0
  %4274 = vmatpush1.bf16.msra.mxu0 %v4175
  %4275 = vmatprep.subr.bf16.mxu0 0
  %4276 = vmatpush1.bf16.msra.mxu0 %v4176
  %4277 = vmatprep.subr.bf16.mxu0 0
  %4278 = vmatpush1.bf16.msra.mxu0 %v4177
  %4279 = vmatprep.subr.bf16.mxu0 0
  %4280 = vmatpush1.bf16.msra.mxu0 %v4178
  %4281 = vmatprep.subr.bf16.mxu0 0
  %4282 = vmatpush1.bf16.msra.mxu0 %v4179
  %4283 = vmatprep.subr.bf16.mxu0 0
  %4284 = vmatpush1.bf16.msra.mxu0 %v4180
  %4285 = vmatprep.subr.bf16.mxu0 0
  %4286 = vmatpush1.bf16.msra.mxu0 %v4181
  %4287 = vmatprep.mubr.bf16.mxu0 %v3950
  %4288 = vmatmul.mubr.bf16.gmra.mrb[0].mxu0 %v3949
  %v4289 = vpop.f32.mrb[0].mxu0
  %v4290 = vadd.f32 %v4249, %v4289
  %v4291 = vpop.f32.mrb[0].mxu0
  %v4292 = vpop.f32.mrb[0].mxu0
  %v4293 = vadd.f32 %v4252, %v4292
  %v4294 = vpop.f32.mrb[0].mxu0
  %4295 = vdwg.mxu0
  %4296 = vst [vmem:[%s9] sm:$0xff] %v4290
  %4297 = vst [vmem:[%s9 + $0x8] sm:$0xff] %v4293
  // Predicated region
  $region38: #{shallownet_forward.1} parent=0 // pred_check
    _
  $region39: #{shallownet_forward.1} parent=0 // pred_check_branch
    %4299 = sbr.rel (0) target = $region41
  $region40: #{shallownet_forward.1} parent=0 // pred_region
    _
  $region41: #{shallownet_forward.1} parent=0 // pred_fallthru
    _
  // Predicated region
  $region42: #{shallownet_forward.1} parent=0 // pred_check
    _
  $region43: #{shallownet_forward.1} parent=0 // pred_check_branch
    %4301 = sbr.rel (0) target = $region45
  $region44: #{shallownet_forward.1} parent=0 // pred_region
    _
  $region45: #{shallownet_forward.1} parent=0 // pred_fallthru
    _
  // Predicated region
  $region46: #{shallownet_forward.1} parent=0 // pred_check
    _
  $region47: #{shallownet_forward.1} parent=0 // pred_check_branch
    %4303 = sbr.rel (0) target = $region49
  $region48: #{shallownet_forward.1} parent=0 // pred_region
    _
  $region49: #{shallownet_forward.1} parent=0 // pred_fallthru
    _
  // Predicated region
  $region50: #{shallownet_forward.1} parent=0 // pred_check
    _
  $region51: #{shallownet_forward.1} parent=0 // pred_check_branch
    %4305 = sbr.rel (0) target = $region53
  $region52: #{shallownet_forward.1} parent=0 // pred_region
    _
  $region53: #{shallownet_forward.1} parent=0 // pred_fallthru
    _

</llo_original>
